<compile_context>
chip_gen: v7x
topology: tpu7x:2x2x1
jax: 0.10.0
libtpu: 0.0.40
codegen_flags: <defaults>
</compile_context>

<pallas_src>
import numpy as np
import jax
import jax.numpy as jnp
from jax.experimental import pallas as pl
from jax.experimental.pallas import tpu as pltpu  # noqa: F401  (TPU backend assumed)

_K = 3
_STRIDE = 2
_CHANNELS = ((3, 8), (8, 16), (16, 32), (32, 32), (32, 1))
_CI_EFF = (4, 8, 16, 32, 32)          # layer-1 Cin padded 3 -> 4 for 128-lane density
_PADS = (0, 1, 1, 1, 1)               # ZeroPad2d((1,1,1,1)) before convs 2..5 only


def _round_up(x, m):
    return ((x + m - 1) // m) * m


# ------------------------------ static geometry ------------------------------ #

def _layer_geometry(h, w):
    geo = []
    for (ci, co), ci_eff, p in zip(_CHANNELS, _CI_EFF, _PADS):
        hp, wp = h + 2 * p, w + 2 * p
        ho = (hp - _K) // _STRIDE + 1
        wo = (wp - _K) // _STRIDE + 1
        geo.append(dict(hin=h, win=w, ci=ci, ci_eff=ci_eff, co=co, pad=p, ho=ho, wo=wo))
        h, w = ho, wo
    return tuple(geo)


# ------------------------------- Pallas kernel -------------------------------- #

def _discriminant_kernel(x_ref, *refs):
    """Whole 5-layer discriminator on one merged-batch slab.

    Inputs (all whole-array VMEM refs, grid-less call):
      x_ref            : (B*H, W*Ci_eff)           bf16 activation slab
      refs[0:L]        : folded weights (3*lanes_in, out_lanes)  bf16
      refs[L:2L]       : row selectors  (3, B*ho, B*hin)         bf16 (block-diag / batch)
      refs[2L:3L]      : biases         (1, out_lanes)           f32
      refs[3L]         : output         (B*ho_last, wo_last*co_last) f32
    """
    nl = (len(refs) - 1) // 3
    n_refs = refs[:nl]
    s_refs = refs[nl:2 * nl]
    b_refs = refs[2 * nl:3 * nl]
    o_ref = refs[3 * nl]

    x = x_ref[...]                                            # bf16, lane-dense (M, lanes)
    for li in range(nl):
        # 3 precomputed 0/1 row-selector matmuls (exact copies of stride-2 rows,
        # folded ZeroPad2d rows select nothing -> zeros), then lane-concat the taps.
        taps = [
            jnp.dot(s_refs[li][kh], x, preferred_element_type=jnp.float32)
            .astype(jnp.bfloat16)
            for kh in range(_K)
        ]
        a = jnp.concatenate(taps, axis=-1)                    # (B*ho, 3*lanes_in), aligned
        # Single fused MXU matmul per layer: stride-2 column gather (incl. zero pad),
        # Cin->Cout contraction and the 3 kernel-row taps all in one K=384..768 matmul.
        y = jnp.dot(a, n_refs[li][...], preferred_element_type=jnp.float32)
        y = y + b_refs[li][...]
        if li < nl - 1:
            x = jnp.maximum(y, 0.0).astype(jnp.bfloat16)      # ReLU, bf16 for next layer
        else:
            o_ref[...] = 1.0 / (1.0 + jnp.exp(-y))            # Sigmoid, f32 output


# --------------------------- parameter preparation ---------------------------- #

def prepare_params(params, batch, h, w):
    """One-time host-side folding (outside the hot path):
      * per layer: a (3*lanes_in, out_lanes) bf16 matrix doing the stride-2 column
        gather (with ZeroPad2d folded in) + channel contraction for all 3 row taps;
      * per layer: block-diagonal-over-batch 0/1 row selectors (3, B*ho, B*hin), bf16;
      * per layer: lane-tiled f32 bias rows, zero-padded to the 128-aligned lane count.
    """
    geo = _layer_geometry(h, w)
    nl = len(geo)
    ns, sels, bs = [], [], []
    lanes_in = w * geo[0]["ci_eff"]          # lane count of the incoming activation slab

    for i, g in enumerate(geo):
        wgt, bias = params[f"ds{i + 1}"]                      # (Co, Ci, K, K), (Co,)
        ci, ci_eff, co = g["ci"], g["ci_eff"], g["co"]
        win, wo, p, hin, ho = g["win"], g["wo"], g["pad"], g["hin"], g["ho"]

        wt = jnp.transpose(wgt, (2, 3, 1, 0))                 # (kh, kw, ci, co)
        if ci_eff != ci:
            wt = jnp.pad(wt, ((0, 0), (0, 0), (0, ci_eff - ci), (0, 0)))

        w_in = np.arange(win)[:, None, None]
        kw = np.arange(_K)[None, :, None]
        w_out = np.arange(wo)[None, None, :]
        gather = (w_in == _STRIDE * w_out + kw - p).astype(np.float32)   # (win, K, wo)

        n = jnp.einsum("pkw,hkcd->hpcwd", jnp.asarray(gather), wt)       # (K,win,ci_eff,wo,co)
        n = n.reshape(_K, win * ci_eff, wo * co)

        # 128-lane alignment: pad per-tap K rows up to lanes_in and N cols up to a
        # multiple of 128 (final layer stays dense; it goes straight to the output).
        out_cols = wo * co if i == nl - 1 else _round_up(wo * co, 128)
        n = jnp.pad(n, ((0, 0), (0, lanes_in - win * ci_eff), (0, out_cols - wo * co)))
        ns.append(n.reshape(_K * lanes_in, out_cols).astype(jnp.bfloat16))

        bias_row = jnp.zeros((1, out_cols), jnp.float32)
        bias_row = bias_row.at[0, :wo * co].set(jnp.tile(bias, wo))
        bs.append(bias_row)

        # Block-diagonal (over batch) 0/1 row selectors, one per kernel-row tap.
        # Out-of-range rows (the folded ZeroPad2d) select nothing -> zero rows.
        sel = np.zeros((_K, batch * ho, batch * hin), np.float32)
        for kh in range(_K):
            for b in range(batch):
                for r in range(ho):
                    src = _STRIDE * r + kh - p
                    if 0 <= src < hin:
                        sel[kh, b * ho + r, b * hin + src] = 1.0
        sels.append(jnp.asarray(sel, dtype=jnp.bfloat16))     # 0/1 exact in bf16

        lanes_in = out_cols

    return tuple(ns), tuple(sels), tuple(bs)


def _conv_params(key, cout, cin, k):
    k1, k2 = jax.random.split(key)
    scale = 1.0 / (cin * k * k) ** 0.5
    wgt = jax.random.uniform(k1, (cout, cin, k, k), jnp.float32, -scale, scale)
    b = jax.random.uniform(k2, (cout,), jnp.float32, -scale, scale)
    return wgt, b


def init_params(key):
    ks = jax.random.split(key, len(_CHANNELS))
    return {f"ds{i + 1}": _conv_params(ks[i], co, ci, _K)
            for i, (ci, co) in enumerate(_CHANNELS)}


# ---------------------------------- forward ----------------------------------- #

@jax.jit
def discriminant_forward(prep, x_nchw):
    ns, sels, bs = prep
    batch, cin, h, w = x_nchw.shape
    geo = _layer_geometry(h, w)
    ci_eff0 = geo[0]["ci_eff"]
    gl = geo[-1]
    ho_f, wo_f, co_f = gl["ho"], gl["wo"], gl["co"]

    # NCHW -> merged-batch lane-dense slab (B*H, W*Ci_eff), Cin zero-padded 3 -> 4, bf16.
    x_nhwc = jnp.transpose(x_nchw, (0, 2, 3, 1))
    if ci_eff0 != cin:
        x_nhwc = jnp.pad(x_nhwc, ((0, 0), (0, 0), (0, 0), (0, ci_eff0 - cin)))
    x2d = x_nhwc.reshape(batch * h, w * ci_eff0).astype(jnp.bfloat16)

    # Grid-less single invocation: whole arrays are VMEM-resident for the whole kernel
    # (no grid => no double-buffering, weights live in VMEM exactly once).  Total VMEM
    # footprint at 64x64/batch-2 is ~1.6 MB, far under every chip's scoped limit.
    out = pl.pallas_call(
        _discriminant_kernel,
        out_shape=jax.ShapeDtypeStruct((batch * ho_f, wo_f * co_f), jnp.float32),
    )(x2d, *ns, *sels, *bs)

    # (B*Ho, Wo*Co) -> NCHW (B, Co, Ho, Wo)
    return jnp.transpose(out.reshape(batch, ho_f, wo_f, co_f), (0, 3, 1, 2))


# ------------------------------ pure-JAX reference ----------------------------- #

def reference_forward(params, x):
    def conv(t, wb, stride):
        wgt, b = wb
        y = jax.lax.conv_general_dilated(
            t, wgt, window_strides=(stride, stride), padding="VALID",
            dimension_numbers=("NCHW", "OIHW", "NCHW"))
        return y + b[None, :, None, None]

    def pad1(t):
        return jnp.pad(t, ((0, 0), (0, 0), (1, 1), (1, 1)))

    x = pad1(jax.nn.relu(conv(x, params["ds1"], _STRIDE)))
    x = pad1(jax.nn.relu(conv(x, params["ds2"], _STRIDE)))
    x = pad1(jax.nn.relu(conv(x, params["ds3"], _STRIDE)))
    x = pad1(jax.nn.relu(conv(x, params["ds4"], _STRIDE)))
    x = jax.nn.sigmoid(conv(x, params["ds5"], _STRIDE))
    return x


# ------------------------------------ main ------------------------------------ #

if __name__ == "__main__":
    key = jax.random.PRNGKey(0)
    pkey, xkey = jax.random.split(key)
    params = init_params(pkey)

    # 64x64 input: 64 -> 31 -> (pad 33) 16 -> (18) 8 -> (10) 4 -> (6) 2
    batch, height, width = 2, 64, 64
    x = jax.random.normal(xkey, (batch, 3, height, width), dtype=jnp.float32)

    prep = prepare_params(params, batch, height, width)   # one-time weight/selector folding
    y = jax.block_until_ready(discriminant_forward(prep, x))

    assert y.shape == (batch, 1, 2, 2), y.shape

    y_ref = jax.block_until_ready(reference_forward(params, x))
    max_err = float(jnp.max(jnp.abs(y - y_ref)))
    assert max_err < 5e-2, f"mismatch vs reference: max abs err {max_err}"

    print("KERNEL_OK")
</pallas_src>

<mosaic_0001>
module attributes {stable_mosaic.version = 11 : i64} {
  func.func @_discriminant_kernel(%arg0: memref<128x256xbf16, #tpu.memory_space<vmem>>, %arg1: memref<768x256xbf16, #tpu.memory_space<vmem>>, %arg2: memref<768x256xbf16, #tpu.memory_space<vmem>>, %arg3: memref<768x256xbf16, #tpu.memory_space<vmem>>, %arg4: memref<768x128xbf16, #tpu.memory_space<vmem>>, %arg5: memref<384x2xbf16, #tpu.memory_space<vmem>>, %arg6: memref<3x62x128xbf16, #tpu.memory_space<vmem>>, %arg7: memref<3x32x62xbf16, #tpu.memory_space<vmem>>, %arg8: memref<3x16x32xbf16, #tpu.memory_space<vmem>>, %arg9: memref<3x8x16xbf16, #tpu.memory_space<vmem>>, %arg10: memref<3x4x8xbf16, #tpu.memory_space<vmem>>, %arg11: memref<1x256xf32, #tpu.memory_space<vmem>>, %arg12: memref<1x256xf32, #tpu.memory_space<vmem>>, %arg13: memref<1x256xf32, #tpu.memory_space<vmem>>, %arg14: memref<1x128xf32, #tpu.memory_space<vmem>>, %arg15: memref<1x2xf32, #tpu.memory_space<vmem>>, %arg16: memref<4x2xf32, #tpu.memory_space<vmem>>) attributes {dimension_semantics = [], scalar_prefetch = 0 : i64, scratch_operands = 0 : i64, tpu.core_type = #tpu.core_type<tc>} {
    %c0 = arith.constant 0 : index
    %c0_0 = arith.constant 0 : index
    %0 = vector.load %arg0[%c0, %c0_0] : memref<128x256xbf16, #tpu.memory_space<vmem>>, vector<128x256xbf16>
    %c0_1 = arith.constant 0 : index
    %c0_2 = arith.constant 0 : index
    %c0_3 = arith.constant 0 : index
    %1 = vector.load %arg6[%c0_1, %c0_2, %c0_3] : memref<3x62x128xbf16, #tpu.memory_space<vmem>>, vector<1x62x128xbf16>
    %2 = vector.shape_cast %1 : vector<1x62x128xbf16> to vector<62x128xbf16>
    %cst = arith.constant dense<0.000000e+00> : vector<62x256xf32>
    %3 = tpu.matmul %2, %0, %cst {dimension_numbers = #tpu.dot_dimension_numbers<[1], [0], [0], [1], [0, 0, 1, 1], [], []>} : vector<62x128xbf16>, vector<128x256xbf16>, vector<62x256xf32> -> vector<62x256xf32>
    %4 = arith.truncf %3 : vector<62x256xf32> to vector<62x256xbf16>
    %c1 = arith.constant 1 : index
    %c0_4 = arith.constant 0 : index
    %c0_5 = arith.constant 0 : index
    %5 = vector.load %arg6[%c1, %c0_4, %c0_5] : memref<3x62x128xbf16, #tpu.memory_space<vmem>>, vector<1x62x128xbf16>
    %6 = vector.shape_cast %5 : vector<1x62x128xbf16> to vector<62x128xbf16>
    %cst_6 = arith.constant dense<0.000000e+00> : vector<62x256xf32>
    %7 = tpu.matmul %6, %0, %cst_6 {dimension_numbers = #tpu.dot_dimension_numbers<[1], [0], [0], [1], [0, 0, 1, 1], [], []>} : vector<62x128xbf16>, vector<128x256xbf16>, vector<62x256xf32> -> vector<62x256xf32>
    %8 = arith.truncf %7 : vector<62x256xf32> to vector<62x256xbf16>
    %c2 = arith.constant 2 : index
    %c0_7 = arith.constant 0 : index
    %c0_8 = arith.constant 0 : index
    %9 = vector.load %arg6[%c2, %c0_7, %c0_8] : memref<3x62x128xbf16, #tpu.memory_space<vmem>>, vector<1x62x128xbf16>
    %10 = vector.shape_cast %9 : vector<1x62x128xbf16> to vector<62x128xbf16>
    %cst_9 = arith.constant dense<0.000000e+00> : vector<62x256xf32>
    %11 = tpu.matmul %10, %0, %cst_9 {dimension_numbers = #tpu.dot_dimension_numbers<[1], [0], [0], [1], [0, 0, 1, 1], [], []>} : vector<62x128xbf16>, vector<128x256xbf16>, vector<62x256xf32> -> vector<62x256xf32>
    %12 = arith.truncf %11 : vector<62x256xf32> to vector<62x256xbf16>
    %13 = tpu.concatenate %4, %8, %12 in 1 : vector<62x256xbf16>, vector<62x256xbf16>, vector<62x256xbf16> -> vector<62x768xbf16>
    %c0_10 = arith.constant 0 : index
    %c0_11 = arith.constant 0 : index
    %14 = vector.load %arg1[%c0_10, %c0_11] : memref<768x256xbf16, #tpu.memory_space<vmem>>, vector<768x256xbf16>
    %cst_12 = arith.constant dense<0.000000e+00> : vector<62x256xf32>
    %15 = tpu.matmul %13, %14, %cst_12 {dimension_numbers = #tpu.dot_dimension_numbers<[1], [0], [0], [1], [0, 0, 1, 1], [], []>} : vector<62x768xbf16>, vector<768x256xbf16>, vector<62x256xf32> -> vector<62x256xf32>
    %c0_13 = arith.constant 0 : index
    %c0_14 = arith.constant 0 : index
    %16 = vector.load %arg11[%c0_13, %c0_14] : memref<1x256xf32, #tpu.memory_space<vmem>>, vector<1x256xf32>
    %17 = vector.broadcast %16 : vector<1x256xf32> to vector<62x256xf32>
    %18 = arith.addf %15, %17 : vector<62x256xf32>
    %cst_15 = arith.constant 0.000000e+00 : f32
    %19 = vector.broadcast %cst_15 : f32 to vector<62x256xf32>
    %20 = arith.maximumf %18, %19 : vector<62x256xf32>
    %21 = arith.truncf %20 : vector<62x256xf32> to vector<62x256xbf16>
    %c0_16 = arith.constant 0 : index
    %c0_17 = arith.constant 0 : index
    %c0_18 = arith.constant 0 : index
    %22 = vector.load %arg7[%c0_16, %c0_17, %c0_18] : memref<3x32x62xbf16, #tpu.memory_space<vmem>>, vector<1x32x62xbf16>
    %23 = vector.shape_cast %22 : vector<1x32x62xbf16> to vector<32x62xbf16>
    %cst_19 = arith.constant dense<0.000000e+00> : vector<32x256xf32>
    %24 = tpu.matmul %23, %21, %cst_19 {dimension_numbers = #tpu.dot_dimension_numbers<[1], [0], [0], [1], [0, 0, 1, 1], [], []>} : vector<32x62xbf16>, vector<62x256xbf16>, vector<32x256xf32> -> vector<32x256xf32>
    %25 = arith.truncf %24 : vector<32x256xf32> to vector<32x256xbf16>
    %c1_20 = arith.constant 1 : index
    %c0_21 = arith.constant 0 : index
    %c0_22 = arith.constant 0 : index
    %26 = vector.load %arg7[%c1_20, %c0_21, %c0_22] : memref<3x32x62xbf16, #tpu.memory_space<vmem>>, vector<1x32x62xbf16>
    %27 = vector.shape_cast %26 : vector<1x32x62xbf16> to vector<32x62xbf16>
    %cst_23 = arith.constant dense<0.000000e+00> : vector<32x256xf32>
    %28 = tpu.matmul %27, %21, %cst_23 {dimension_numbers = #tpu.dot_dimension_numbers<[1], [0], [0], [1], [0, 0, 1, 1], [], []>} : vector<32x62xbf16>, vector<62x256xbf16>, vector<32x256xf32> -> vector<32x256xf32>
    %29 = arith.truncf %28 : vector<32x256xf32> to vector<32x256xbf16>
    %c2_24 = arith.constant 2 : index
    %c0_25 = arith.constant 0 : index
    %c0_26 = arith.constant 0 : index
    %30 = vector.load %arg7[%c2_24, %c0_25, %c0_26] : memref<3x32x62xbf16, #tpu.memory_space<vmem>>, vector<1x32x62xbf16>
    %31 = vector.shape_cast %30 : vector<1x32x62xbf16> to vector<32x62xbf16>
    %cst_27 = arith.constant dense<0.000000e+00> : vector<32x256xf32>
    %32 = tpu.matmul %31, %21, %cst_27 {dimension_numbers = #tpu.dot_dimension_numbers<[1], [0], [0], [1], [0, 0, 1, 1], [], []>} : vector<32x62xbf16>, vector<62x256xbf16>, vector<32x256xf32> -> vector<32x256xf32>
    %33 = arith.truncf %32 : vector<32x256xf32> to vector<32x256xbf16>
    %34 = tpu.concatenate %25, %29, %33 in 1 : vector<32x256xbf16>, vector<32x256xbf16>, vector<32x256xbf16> -> vector<32x768xbf16>
    %c0_28 = arith.constant 0 : index
    %c0_29 = arith.constant 0 : index
    %35 = vector.load %arg2[%c0_28, %c0_29] : memref<768x256xbf16, #tpu.memory_space<vmem>>, vector<768x256xbf16>
    %cst_30 = arith.constant dense<0.000000e+00> : vector<32x256xf32>
    %36 = tpu.matmul %34, %35, %cst_30 {dimension_numbers = #tpu.dot_dimension_numbers<[1], [0], [0], [1], [0, 0, 1, 1], [], []>} : vector<32x768xbf16>, vector<768x256xbf16>, vector<32x256xf32> -> vector<32x256xf32>
    %c0_31 = arith.constant 0 : index
    %c0_32 = arith.constant 0 : index
    %37 = vector.load %arg12[%c0_31, %c0_32] : memref<1x256xf32, #tpu.memory_space<vmem>>, vector<1x256xf32>
    %38 = vector.broadcast %37 : vector<1x256xf32> to vector<32x256xf32>
    %39 = arith.addf %36, %38 : vector<32x256xf32>
    %cst_33 = arith.constant 0.000000e+00 : f32
    %40 = vector.broadcast %cst_33 : f32 to vector<32x256xf32>
    %41 = arith.maximumf %39, %40 : vector<32x256xf32>
    %42 = arith.truncf %41 : vector<32x256xf32> to vector<32x256xbf16>
    %c0_34 = arith.constant 0 : index
    %c0_35 = arith.constant 0 : index
    %c0_36 = arith.constant 0 : index
    %43 = vector.load %arg8[%c0_34, %c0_35, %c0_36] : memref<3x16x32xbf16, #tpu.memory_space<vmem>>, vector<1x16x32xbf16>
    %44 = vector.shape_cast %43 : vector<1x16x32xbf16> to vector<16x32xbf16>
    %cst_37 = arith.constant dense<0.000000e+00> : vector<16x256xf32>
    %45 = tpu.matmul %44, %42, %cst_37 {dimension_numbers = #tpu.dot_dimension_numbers<[1], [0], [0], [1], [0, 0, 1, 1], [], []>} : vector<16x32xbf16>, vector<32x256xbf16>, vector<16x256xf32> -> vector<16x256xf32>
    %46 = arith.truncf %45 : vector<16x256xf32> to vector<16x256xbf16>
    %c1_38 = arith.constant 1 : index
    %c0_39 = arith.constant 0 : index
    %c0_40 = arith.constant 0 : index
    %47 = vector.load %arg8[%c1_38, %c0_39, %c0_40] : memref<3x16x32xbf16, #tpu.memory_space<vmem>>, vector<1x16x32xbf16>
    %48 = vector.shape_cast %47 : vector<1x16x32xbf16> to vector<16x32xbf16>
    %cst_41 = arith.constant dense<0.000000e+00> : vector<16x256xf32>
    %49 = tpu.matmul %48, %42, %cst_41 {dimension_numbers = #tpu.dot_dimension_numbers<[1], [0], [0], [1], [0, 0, 1, 1], [], []>} : vector<16x32xbf16>, vector<32x256xbf16>, vector<16x256xf32> -> vector<16x256xf32>
    %50 = arith.truncf %49 : vector<16x256xf32> to vector<16x256xbf16>
    %c2_42 = arith.constant 2 : index
    %c0_43 = arith.constant 0 : index
    %c0_44 = arith.constant 0 : index
    %51 = vector.load %arg8[%c2_42, %c0_43, %c0_44] : memref<3x16x32xbf16, #tpu.memory_space<vmem>>, vector<1x16x32xbf16>
    %52 = vector.shape_cast %51 : vector<1x16x32xbf16> to vector<16x32xbf16>
    %cst_45 = arith.constant dense<0.000000e+00> : vector<16x256xf32>
    %53 = tpu.matmul %52, %42, %cst_45 {dimension_numbers = #tpu.dot_dimension_numbers<[1], [0], [0], [1], [0, 0, 1, 1], [], []>} : vector<16x32xbf16>, vector<32x256xbf16>, vector<16x256xf32> -> vector<16x256xf32>
    %54 = arith.truncf %53 : vector<16x256xf32> to vector<16x256xbf16>
    %55 = tpu.concatenate %46, %50, %54 in 1 : vector<16x256xbf16>, vector<16x256xbf16>, vector<16x256xbf16> -> vector<16x768xbf16>
    %c0_46 = arith.constant 0 : index
    %c0_47 = arith.constant 0 : index
    %56 = vector.load %arg3[%c0_46, %c0_47] : memref<768x256xbf16, #tpu.memory_space<vmem>>, vector<768x256xbf16>
    %cst_48 = arith.constant dense<0.000000e+00> : vector<16x256xf32>
    %57 = tpu.matmul %55, %56, %cst_48 {dimension_numbers = #tpu.dot_dimension_numbers<[1], [0], [0], [1], [0, 0, 1, 1], [], []>} : vector<16x768xbf16>, vector<768x256xbf16>, vector<16x256xf32> -> vector<16x256xf32>
    %c0_49 = arith.constant 0 : index
    %c0_50 = arith.constant 0 : index
    %58 = vector.load %arg13[%c0_49, %c0_50] : memref<1x256xf32, #tpu.memory_space<vmem>>, vector<1x256xf32>
    %59 = vector.broadcast %58 : vector<1x256xf32> to vector<16x256xf32>
    %60 = arith.addf %57, %59 : vector<16x256xf32>
    %cst_51 = arith.constant 0.000000e+00 : f32
    %61 = vector.broadcast %cst_51 : f32 to vector<16x256xf32>
    %62 = arith.maximumf %60, %61 : vector<16x256xf32>
    %63 = arith.truncf %62 : vector<16x256xf32> to vector<16x256xbf16>
    %c0_52 = arith.constant 0 : index
    %c0_53 = arith.constant 0 : index
    %c0_54 = arith.constant 0 : index
    %64 = vector.load %arg9[%c0_52, %c0_53, %c0_54] : memref<3x8x16xbf16, #tpu.memory_space<vmem>>, vector<1x8x16xbf16>
    %65 = vector.shape_cast %64 : vector<1x8x16xbf16> to vector<8x16xbf16>
    %cst_55 = arith.constant dense<0.000000e+00> : vector<8x256xf32>
    %66 = tpu.matmul %65, %63, %cst_55 {dimension_numbers = #tpu.dot_dimension_numbers<[1], [0], [0], [1], [0, 0, 1, 1], [], []>} : vector<8x16xbf16>, vector<16x256xbf16>, vector<8x256xf32> -> vector<8x256xf32>
    %67 = arith.truncf %66 : vector<8x256xf32> to vector<8x256xbf16>
    %c1_56 = arith.constant 1 : index
    %c0_57 = arith.constant 0 : index
    %c0_58 = arith.constant 0 : index
    %68 = vector.load %arg9[%c1_56, %c0_57, %c0_58] : memref<3x8x16xbf16, #tpu.memory_space<vmem>>, vector<1x8x16xbf16>
    %69 = vector.shape_cast %68 : vector<1x8x16xbf16> to vector<8x16xbf16>
    %cst_59 = arith.constant dense<0.000000e+00> : vector<8x256xf32>
    %70 = tpu.matmul %69, %63, %cst_59 {dimension_numbers = #tpu.dot_dimension_numbers<[1], [0], [0], [1], [0, 0, 1, 1], [], []>} : vector<8x16xbf16>, vector<16x256xbf16>, vector<8x256xf32> -> vector<8x256xf32>
    %71 = arith.truncf %70 : vector<8x256xf32> to vector<8x256xbf16>
    %c2_60 = arith.constant 2 : index
    %c0_61 = arith.constant 0 : index
    %c0_62 = arith.constant 0 : index
    %72 = vector.load %arg9[%c2_60, %c0_61, %c0_62] : memref<3x8x16xbf16, #tpu.memory_space<vmem>>, vector<1x8x16xbf16>
    %73 = vector.shape_cast %72 : vector<1x8x16xbf16> to vector<8x16xbf16>
    %cst_63 = arith.constant dense<0.000000e+00> : vector<8x256xf32>
    %74 = tpu.matmul %73, %63, %cst_63 {dimension_numbers = #tpu.dot_dimension_numbers<[1], [0], [0], [1], [0, 0, 1, 1], [], []>} : vector<8x16xbf16>, vector<16x256xbf16>, vector<8x256xf32> -> vector<8x256xf32>
    %75 = arith.truncf %74 : vector<8x256xf32> to vector<8x256xbf16>
    %76 = tpu.concatenate %67, %71, %75 in 1 : vector<8x256xbf16>, vector<8x256xbf16>, vector<8x256xbf16> -> vector<8x768xbf16>
    %c0_64 = arith.constant 0 : index
    %c0_65 = arith.constant 0 : index
    %77 = vector.load %arg4[%c0_64, %c0_65] : memref<768x128xbf16, #tpu.memory_space<vmem>>, vector<768x128xbf16>
    %cst_66 = arith.constant dense<0.000000e+00> : vector<8x128xf32>
    %78 = tpu.matmul %76, %77, %cst_66 {dimension_numbers = #tpu.dot_dimension_numbers<[1], [0], [0], [1], [0, 0, 1, 1], [], []>} : vector<8x768xbf16>, vector<768x128xbf16>, vector<8x128xf32> -> vector<8x128xf32>
    %c0_67 = arith.constant 0 : index
    %c0_68 = arith.constant 0 : index
    %79 = vector.load %arg14[%c0_67, %c0_68] : memref<1x128xf32, #tpu.memory_space<vmem>>, vector<1x128xf32>
    %80 = vector.broadcast %79 : vector<1x128xf32> to vector<8x128xf32>
    %81 = arith.addf %78, %80 : vector<8x128xf32>
    %cst_69 = arith.constant 0.000000e+00 : f32
    %82 = vector.broadcast %cst_69 : f32 to vector<8x128xf32>
    %83 = arith.maximumf %81, %82 : vector<8x128xf32>
    %84 = arith.truncf %83 : vector<8x128xf32> to vector<8x128xbf16>
    %c0_70 = arith.constant 0 : index
    %c0_71 = arith.constant 0 : index
    %c0_72 = arith.constant 0 : index
    %85 = vector.load %arg10[%c0_70, %c0_71, %c0_72] : memref<3x4x8xbf16, #tpu.memory_space<vmem>>, vector<1x4x8xbf16>
    %86 = vector.shape_cast %85 : vector<1x4x8xbf16> to vector<4x8xbf16>
    %cst_73 = arith.constant dense<0.000000e+00> : vector<4x128xf32>
    %87 = tpu.matmul %86, %84, %cst_73 {dimension_numbers = #tpu.dot_dimension_numbers<[1], [0], [0], [1], [0, 0, 1, 1], [], []>} : vector<4x8xbf16>, vector<8x128xbf16>, vector<4x128xf32> -> vector<4x128xf32>
    %88 = arith.truncf %87 : vector<4x128xf32> to vector<4x128xbf16>
    %c1_74 = arith.constant 1 : index
    %c0_75 = arith.constant 0 : index
    %c0_76 = arith.constant 0 : index
    %89 = vector.load %arg10[%c1_74, %c0_75, %c0_76] : memref<3x4x8xbf16, #tpu.memory_space<vmem>>, vector<1x4x8xbf16>
    %90 = vector.shape_cast %89 : vector<1x4x8xbf16> to vector<4x8xbf16>
    %cst_77 = arith.constant dense<0.000000e+00> : vector<4x128xf32>
    %91 = tpu.matmul %90, %84, %cst_77 {dimension_numbers = #tpu.dot_dimension_numbers<[1], [0], [0], [1], [0, 0, 1, 1], [], []>} : vector<4x8xbf16>, vector<8x128xbf16>, vector<4x128xf32> -> vector<4x128xf32>
    %92 = arith.truncf %91 : vector<4x128xf32> to vector<4x128xbf16>
    %c2_78 = arith.constant 2 : index
    %c0_79 = arith.constant 0 : index
    %c0_80 = arith.constant 0 : index
    %93 = vector.load %arg10[%c2_78, %c0_79, %c0_80] : memref<3x4x8xbf16, #tpu.memory_space<vmem>>, vector<1x4x8xbf16>
    %94 = vector.shape_cast %93 : vector<1x4x8xbf16> to vector<4x8xbf16>
    %cst_81 = arith.constant dense<0.000000e+00> : vector<4x128xf32>
    %95 = tpu.matmul %94, %84, %cst_81 {dimension_numbers = #tpu.dot_dimension_numbers<[1], [0], [0], [1], [0, 0, 1, 1], [], []>} : vector<4x8xbf16>, vector<8x128xbf16>, vector<4x128xf32> -> vector<4x128xf32>
    %96 = arith.truncf %95 : vector<4x128xf32> to vector<4x128xbf16>
    %97 = tpu.concatenate %88, %92, %96 in 1 : vector<4x128xbf16>, vector<4x128xbf16>, vector<4x128xbf16> -> vector<4x384xbf16>
    %c0_82 = arith.constant 0 : index
    %c0_83 = arith.constant 0 : index
    %98 = vector.load %arg5[%c0_82, %c0_83] : memref<384x2xbf16, #tpu.memory_space<vmem>>, vector<384x2xbf16>
    %cst_84 = arith.constant dense<0.000000e+00> : vector<4x2xf32>
    %99 = tpu.matmul %97, %98, %cst_84 {dimension_numbers = #tpu.dot_dimension_numbers<[1], [0], [0], [1], [0, 0, 1, 1], [], []>} : vector<4x384xbf16>, vector<384x2xbf16>, vector<4x2xf32> -> vector<4x2xf32>
    %c0_85 = arith.constant 0 : index
    %c0_86 = arith.constant 0 : index
    %100 = vector.load %arg15[%c0_85, %c0_86] : memref<1x2xf32, #tpu.memory_space<vmem>>, vector<1x2xf32>
    %101 = vector.broadcast %100 : vector<1x2xf32> to vector<4x2xf32>
    %102 = arith.addf %99, %101 : vector<4x2xf32>
    %cst_87 = arith.constant 0.000000e+00 : f32
    %103 = vector.broadcast %cst_87 : f32 to vector<4x2xf32>
    %104 = arith.subf %103, %102 : vector<4x2xf32>
    %105 = math.exp %104 : vector<4x2xf32>
    %cst_88 = arith.constant 1.000000e+00 : f32
    %106 = vector.broadcast %cst_88 : f32 to vector<4x2xf32>
    %107 = arith.addf %106, %105 : vector<4x2xf32>
    %cst_89 = arith.constant 1.000000e+00 : f32
    %108 = vector.broadcast %cst_89 : f32 to vector<4x2xf32>
    %109 = arith.divf %108, %107 : vector<4x2xf32>
    %c0_90 = arith.constant 0 : index
    %c0_91 = arith.constant 0 : index
    %110 = vector.load %arg16[%c0_90, %c0_91] : memref<4x2xf32, #tpu.memory_space<vmem>>, vector<4x2xf32>
    tpu.vector_store %arg16[%c0_90, %c0_91], %109 {strides = array<i32>} : memref<4x2xf32, #tpu.memory_space<vmem>>, vector<4x2xf32>,
    return
  }
}

</mosaic_0001>

<llo_original>
// kernel: discriminant_forward.1
$region0: #{discriminant_forward.1}
  #allocation0 [shape = 'u32[]', space=smem, size = 0x4, offset = 0x4, fixed_abs, tag = 'smem constant byte address 0x4 - core index']
  #allocation1 [shape = 'u32[144,128]{1,0:T(1,128)}', space=vmem, size = 0x12000, scoped, tag = 'internal scratch']
  %s0 = inlined_call_operand.vmem [shape: bf16[128,256], index: 0, kind: input, shape index: {}]
  %s1 = inlined_call_operand.vmem [shape: bf16[768,256], index: 1, kind: input, shape index: {}]
  %s2 = inlined_call_operand.vmem [shape: bf16[768,256], index: 2, kind: input, shape index: {}]
  %s3 = inlined_call_operand.hbm [shape: bf16[768,256], index: 3, kind: input, shape index: {}]
  %s4 = inlined_call_operand.vmem [shape: bf16[768,128], index: 4, kind: input, shape index: {}]
  %s5 = inlined_call_operand.vmem [shape: bf16[384,2], index: 5, kind: input, shape index: {}]
  %s6 = inlined_call_operand.vmem [shape: bf16[3,62,128], index: 6, kind: input, shape index: {}]
  %s7 = inlined_call_operand.vmem [shape: bf16[3,32,62], index: 7, kind: input, shape index: {}]
  %s8 = inlined_call_operand.vmem [shape: bf16[3,16,32], index: 8, kind: input, shape index: {}]
  %s9 = inlined_call_operand.vmem [shape: bf16[3,8,16], index: 9, kind: input, shape index: {}]
  %s10 = inlined_call_operand.vmem [shape: bf16[3,4,8], index: 10, kind: input, shape index: {}]
  %s11 = inlined_call_operand.vmem [shape: f32[1,256], index: 11, kind: input, shape index: {}]
  %s12 = inlined_call_operand.vmem [shape: f32[1,256], index: 12, kind: input, shape index: {}]
  %s13 = inlined_call_operand.vmem [shape: f32[1,256], index: 13, kind: input, shape index: {}]
  %s14 = inlined_call_operand.vmem [shape: f32[1,128], index: 14, kind: input, shape index: {}]
  %s15 = inlined_call_operand.vmem [shape: f32[1,2], index: 15, kind: input, shape index: {}]
  %s16 = inlined_call_operand.hbm [shape: f32[4,2], index: 16, kind: output, shape index: {}]
  %s17 = sld [smem:[#allocation0]]
  $region78: #{discriminant_forward.1} parent=0
    _
  %s19 = ssub.s32 1, %s17
  %s20 = scalar_select 0, %s19, %s17
  $region1: #{discriminant_forward.1} parent=0
    #allocation2 [shape = 'u8[393216]{0}', space=vmem, size = 0x60000, scoped, tag = 'input window, operand 3, single buffered']
    #allocation3 [shape = 's32[1]{0}', space=sflag, size = 0x4, scoped, tag = 'scoped memory for discriminant_forward.1']
    #allocation4 [shape = 's32[1]{0}', space=sflag, size = 0x4, scoped, tag = 'scoped memory for discriminant_forward.1']
    #allocation5 [shape = 'u8[2048]{0}', space=vmem, size = 0x800, scoped, tag = 'output window, operand 0, single buffered']
    %21 = vsyncpa [#allocation3], 0
    %22 = vsyncpa [#allocation4], 0
    // Predicated region
    $region2: #{discriminant_forward.1} parent=1 // pred_check
      _
    $region3: #{discriminant_forward.1} parent=1 // pred_check_branch
      %24 = sbr.rel (0) target = $region5
    $region4: #{discriminant_forward.1} parent=1 // pred_region
      _
    $region5: #{discriminant_forward.1} parent=1 // pred_fallthru
      _
    // Predicated region
    $region6: #{discriminant_forward.1} parent=1 // pred_check
      _
    $region7: #{discriminant_forward.1} parent=1 // pred_check_branch
      %26 = sbr.rel (0) target = $region9
    $region8: #{discriminant_forward.1} parent=1 // pred_region
      _
    $region9: #{discriminant_forward.1} parent=1 // pred_fallthru
      _
    // Predicated region
    $region10: #{discriminant_forward.1} parent=1 // pred_check
      _
    $region11: #{discriminant_forward.1} parent=1 // pred_check_branch
      %28 = sbr.rel (0) target = $region13
    $region12: #{discriminant_forward.1} parent=1 // pred_region
      _
    $region13: #{discriminant_forward.1} parent=1 // pred_fallthru
      _
    // Predicated region
    $region14: #{discriminant_forward.1} parent=1 // pred_check
      _
    $region15: #{discriminant_forward.1} parent=1 // pred_check_branch
      %30 = sbr.rel (0) target = $region17
    $region16: #{discriminant_forward.1} parent=1 // pred_region
      %s32 = ssub.s32 12288, 12288
      %33 = vsyncadd [#allocation3], %s32
      %s34 = sshll.u32 [#allocation2], 4
      %s35 = int_to_ptr.vmem [resolvable:$true] %s34
      %40 = dma.hbm_to_vmem [thread:$0]  %s3, 12288, %s35, [#allocation3], 128, 128, 8
    $region17: #{discriminant_forward.1} parent=1 // pred_fallthru
      _
    // Predicated region
    $region18: #{discriminant_forward.1} parent=1 // pred_check
      _
    $region19: #{discriminant_forward.1} parent=1 // pred_check_branch
      %42 = sbr.rel (0) target = $region21
    $region20: #{discriminant_forward.1} parent=1 // pred_region
      _
    $region21: #{discriminant_forward.1} parent=1 // pred_fallthru
      _
    // Predicated region
    $region22: #{discriminant_forward.1} parent=1 // pred_check
      _
    $region23: #{discriminant_forward.1} parent=1 // pred_check_branch
      %44 = sbr.rel (0) target = $region25
    $region24: #{discriminant_forward.1} parent=1 // pred_region
      _
    $region25: #{discriminant_forward.1} parent=1 // pred_fallthru
      _
    // Predicated region
    $region26: #{discriminant_forward.1} parent=1 // pred_check
      _
    $region27: #{discriminant_forward.1} parent=1 // pred_check_branch
      %46 = sbr.rel (0) target = $region29
    $region28: #{discriminant_forward.1} parent=1 // pred_region
      _
    $region29: #{discriminant_forward.1} parent=1 // pred_fallthru
      _
    // Predicated region
    $region30: #{discriminant_forward.1} parent=1 // pred_check
      _
    $region31: #{discriminant_forward.1} parent=1 // pred_check_branch
      %48 = sbr.rel (0) target = $region33
    $region32: #{discriminant_forward.1} parent=1 // pred_region
      _
    $region33: #{discriminant_forward.1} parent=1 // pred_fallthru
      _
    // Predicated region
    $region34: #{discriminant_forward.1} parent=1 // pred_check
      _
    $region35: #{discriminant_forward.1} parent=1 // pred_check_branch
      %50 = sbr.rel (0) target = $region37
    $region36: #{discriminant_forward.1} parent=1 // pred_region
      _
    $region37: #{discriminant_forward.1} parent=1 // pred_fallthru
      _
    // Predicated region
    $region38: #{discriminant_forward.1} parent=1 // pred_check
      _
    $region39: #{discriminant_forward.1} parent=1 // pred_check_branch
      %52 = sbr.rel (0) target = $region41
    $region40: #{discriminant_forward.1} parent=1 // pred_region
      _
    $region41: #{discriminant_forward.1} parent=1 // pred_fallthru
      _
    // Predicated region
    $region42: #{discriminant_forward.1} parent=1 // pred_check
      _
    $region43: #{discriminant_forward.1} parent=1 // pred_check_branch
      %54 = sbr.rel (0) target = $region45
    $region44: #{discriminant_forward.1} parent=1 // pred_region
      _
    $region45: #{discriminant_forward.1} parent=1 // pred_fallthru
      _
    // Predicated region
    $region46: #{discriminant_forward.1} parent=1 // pred_check
      _
    $region47: #{discriminant_forward.1} parent=1 // pred_check_branch
      %56 = sbr.rel (0) target = $region49
    $region48: #{discriminant_forward.1} parent=1 // pred_region
      _
    $region49: #{discriminant_forward.1} parent=1 // pred_fallthru
      _
    // Predicated region
    $region50: #{discriminant_forward.1} parent=1 // pred_check
      _
    $region51: #{discriminant_forward.1} parent=1 // pred_check_branch
      %58 = sbr.rel (0) target = $region53
    $region52: #{discriminant_forward.1} parent=1 // pred_region
      _
    $region53: #{discriminant_forward.1} parent=1 // pred_fallthru
      _
    // Predicated region
    $region54: #{discriminant_forward.1} parent=1 // pred_check
      _
    $region55: #{discriminant_forward.1} parent=1 // pred_check_branch
      %60 = sbr.rel (0) target = $region57
    $region56: #{discriminant_forward.1} parent=1 // pred_region
      _
    $region57: #{discriminant_forward.1} parent=1 // pred_fallthru
      _
    // Predicated region
    $region58: #{discriminant_forward.1} parent=1 // pred_check
      _
    $region59: #{discriminant_forward.1} parent=1 // pred_check_branch
      %62 = sbr.rel (0) target = $region61
    $region60: #{discriminant_forward.1} parent=1 // pred_region
      _
    $region61: #{discriminant_forward.1} parent=1 // pred_fallthru
      _
    // Predicated region
    $region62: #{discriminant_forward.1} parent=1 // pred_check
      _
    $region63: #{discriminant_forward.1} parent=1 // pred_check_branch
      %64 = sbr.rel (0) target = $region65
    $region64: #{discriminant_forward.1} parent=1 // pred_region
      _
    $region65: #{discriminant_forward.1} parent=1 // pred_fallthru
      _
    // Predicated region
    $region66: #{discriminant_forward.1} parent=1 // pred_check
      _
    $region67: #{discriminant_forward.1} parent=1 // pred_check_branch
      %66 = sbr.rel (0) target = $region69
    $region68: #{discriminant_forward.1} parent=1 // pred_region
      %67 = dma.done [#allocation3], 12288
    $region69: #{discriminant_forward.1} parent=1 // pred_fallthru
      _
    %v69 = vld [vmem:[%s0] sm:$0xff]
    %v70 = vld [vmem:[%s0 + $0x8] sm:$0xff]
    %v71 = vld [vmem:[%s0 + $0x10] sm:$0xff]
    %v72 = vld [vmem:[%s0 + $0x18] sm:$0xff]
    %v73 = vld [vmem:[%s0 + $0x20] sm:$0xff]
    %v74 = vld [vmem:[%s0 + $0x28] sm:$0xff]
    %v75 = vld [vmem:[%s0 + $0x30] sm:$0xff]
    %v76 = vld [vmem:[%s0 + $0x38] sm:$0xff]
    %v77 = vld [vmem:[%s0 + $0x40] sm:$0xff]
    %v78 = vld [vmem:[%s0 + $0x48] sm:$0xff]
    %v79 = vld [vmem:[%s0 + $0x50] sm:$0xff]
    %v80 = vld [vmem:[%s0 + $0x58] sm:$0xff]
    %v81 = vld [vmem:[%s0 + $0x60] sm:$0xff]
    %v82 = vld [vmem:[%s0 + $0x68] sm:$0xff]
    %v83 = vld [vmem:[%s0 + $0x70] sm:$0xff]
    %v84 = vld [vmem:[%s0 + $0x78] sm:$0xff]
    %v85 = vld [vmem:[%s6] sm:$0xf]
    %v86 = vld [vmem:[%s6 + $0x4] sm:$0xf]
    %v87 = vld [vmem:[%s6 + $0x8] sm:$0xf]
    %v88 = vld [vmem:[%s6 + $0xc] sm:$0xf]
    %v89 = vld [vmem:[%s6 + $0x10] sm:$0xf]
    %v90 = vld [vmem:[%s6 + $0x14] sm:$0xf]
    %v91 = vld [vmem:[%s6 + $0x18] sm:$0xf]
    %v92 = vld [vmem:[%s6 + $0x1c] sm:$0x7]
    %v101 = vunpack.c.l.b16 %v85
    %v102 = vunpack.c.l.b16 %v86
    %v103 = vunpack.c.l.b16 %v87
    %v104 = vunpack.c.l.b16 %v88
    %v105 = vunpack.c.l.b16 %v89
    %v106 = vunpack.c.l.b16 %v90
    %v107 = vunpack.c.l.b16 %v91
    %v108 = vunpack.c.l.b16 %v92
    %v109 = vpack.c.b16 %v102, %v101
    %v110 = vpack.c.b16 %v104, %v103
    %v111 = vpack.c.b16 %v106, %v105
    %v112 = vpack.c.b16 %v108, %v107
    %v133 = vunpack.c.l.b16 %v69
    %v134 = vunpack.c.h.b16 %v69
    %v135 = vunpack.c.l.b16 %v70
    %v136 = vunpack.c.h.b16 %v70
    %v137 = vunpack.c.l.b16 %v71
    %v138 = vunpack.c.h.b16 %v71
    %v139 = vunpack.c.l.b16 %v72
    %v140 = vunpack.c.h.b16 %v72
    %v141 = vunpack.c.l.b16 %v73
    %v142 = vunpack.c.h.b16 %v73
    %v143 = vunpack.c.l.b16 %v74
    %v144 = vunpack.c.h.b16 %v74
    %v145 = vunpack.c.l.b16 %v75
    %v146 = vunpack.c.h.b16 %v75
    %v147 = vunpack.c.l.b16 %v76
    %v148 = vunpack.c.h.b16 %v76
    %v149 = vunpack.c.l.b16 %v77
    %v150 = vunpack.c.h.b16 %v77
    %v151 = vunpack.c.l.b16 %v78
    %v152 = vunpack.c.h.b16 %v78
    %v153 = vunpack.c.l.b16 %v79
    %v154 = vunpack.c.h.b16 %v79
    %v155 = vunpack.c.l.b16 %v80
    %v156 = vunpack.c.h.b16 %v80
    %v157 = vunpack.c.l.b16 %v81
    %v158 = vunpack.c.h.b16 %v81
    %v159 = vunpack.c.l.b16 %v82
    %v160 = vunpack.c.h.b16 %v82
    %v161 = vunpack.c.l.b16 %v83
    %v162 = vunpack.c.h.b16 %v83
    %v163 = vunpack.c.l.b16 %v84
    %v164 = vunpack.c.h.b16 %v84
    %v165 = vpack.c.b16 %v135, %v133
    %v166 = vpack.c.b16 %v136, %v134
    %v167 = vpack.c.b16 %v139, %v137
    %v168 = vpack.c.b16 %v140, %v138
    %v169 = vpack.c.b16 %v143, %v141
    %v170 = vpack.c.b16 %v144, %v142
    %v171 = vpack.c.b16 %v147, %v145
    %v172 = vpack.c.b16 %v148, %v146
    %v173 = vpack.c.b16 %v151, %v149
    %v174 = vpack.c.b16 %v152, %v150
    %v175 = vpack.c.b16 %v155, %v153
    %v176 = vpack.c.b16 %v156, %v154
    %v177 = vpack.c.b16 %v159, %v157
    %v178 = vpack.c.b16 %v160, %v158
    %v179 = vpack.c.b16 %v163, %v161
    %v180 = vpack.c.b16 %v164, %v162
    %197 = vmatprep.subr.bf16.mxu0 %v166
    %198 = vmatpush1.bf16.msra.mxu0 %v165
    %199 = vmatprep.subr.bf16.mxu0 %v168
    %200 = vmatpush1.bf16.msra.mxu0 %v167
    %201 = vmatprep.subr.bf16.mxu0 %v170
    %202 = vmatpush1.bf16.msra.mxu0 %v169
    %203 = vmatprep.subr.bf16.mxu0 %v172
    %204 = vmatpush1.bf16.msra.mxu0 %v171
    %205 = vmatprep.subr.bf16.mxu0 %v174
    %206 = vmatpush1.bf16.msra.mxu0 %v173
    %207 = vmatprep.subr.bf16.mxu0 %v176
    %208 = vmatpush1.bf16.msra.mxu0 %v175
    %209 = vmatprep.subr.bf16.mxu0 %v178
    %210 = vmatpush1.bf16.msra.mxu0 %v177
    %211 = vmatprep.subr.bf16.mxu0 %v180
    %212 = vmatpush1.bf16.msra.mxu0 %v179
    %213 = vmatprep.subr.bf16.mxu0 0
    %214 = vmatpush1.bf16.msra.mxu0 0
    %215 = vmatprep.subr.bf16.mxu0 0
    %216 = vmatpush1.bf16.msra.mxu0 0
    %217 = vmatprep.subr.bf16.mxu0 0
    %218 = vmatpush1.bf16.msra.mxu0 0
    %219 = vmatprep.subr.bf16.mxu0 0
    %220 = vmatpush1.bf16.msra.mxu0 0
    %221 = vmatprep.subr.bf16.mxu0 0
    %222 = vmatpush1.bf16.msra.mxu0 0
    %223 = vmatprep.subr.bf16.mxu0 0
    %224 = vmatpush1.bf16.msra.mxu0 0
    %225 = vmatprep.subr.bf16.mxu0 0
    %226 = vmatpush1.bf16.msra.mxu0 0
    %227 = vmatprep.subr.bf16.mxu0 0
    %228 = vmatpush1.bf16.msra.mxu0 0
    %229 = vmatprep.mubr.bf16.mxu0 0
    %230 = vmatmul.mubr.bf16.gmra.mrb[0].mxu0 %v109
    %v231 = vpop.f32.mrb[0].mxu0
    %v232 = vadd.f32 0.0, %v231
    %v233 = vpop.f32.mrb[0].mxu0
    %v234 = vadd.f32 0.0, %v233
    %v235 = vpop.f32.mrb[0].mxu0
    %v236 = vadd.f32 0.0, %v235
    %v237 = vpop.f32.mrb[0].mxu0
    %v238 = vadd.f32 0.0, %v237
    %239 = vmatprep.mubr.bf16.mxu0 0
    %240 = vmatmul.mubr.bf16.gmra.mrb[0].mxu0 %v110
    %v241 = vpop.f32.mrb[0].mxu0
    %v242 = vadd.f32 0.0, %v241
    %v243 = vpop.f32.mrb[0].mxu0
    %v244 = vadd.f32 0.0, %v243
    %v245 = vpop.f32.mrb[0].mxu0
    %v246 = vadd.f32 0.0, %v245
    %v247 = vpop.f32.mrb[0].mxu0
    %v248 = vadd.f32 0.0, %v247
    %249 = vmatprep.mubr.bf16.mxu0 0
    %250 = vmatmul.mubr.bf16.gmra.mrb[0].mxu0 %v111
    %v251 = vpop.f32.mrb[0].mxu0
    %v252 = vadd.f32 0.0, %v251
    %v253 = vpop.f32.mrb[0].mxu0
    %v254 = vadd.f32 0.0, %v253
    %v255 = vpop.f32.mrb[0].mxu0
    %v256 = vadd.f32 0.0, %v255
    %v257 = vpop.f32.mrb[0].mxu0
    %v258 = vadd.f32 0.0, %v257
    %259 = vmatprep.mubr.bf16.mxu0 0
    %260 = vmatmul.mubr.bf16.gmra.mrb[0].mxu0 %v112
    %v261 = vpop.f32.mrb[0].mxu0
    %v262 = vadd.f32 0.0, %v261
    %v263 = vpop.f32.mrb[0].mxu0
    %v264 = vadd.f32 0.0, %v263
    %v265 = vpop.f32.mrb[0].mxu0
    %v266 = vadd.f32 0.0, %v265
    %v267 = vpop.f32.mrb[0].mxu0
    %v268 = vadd.f32 0.0, %v267
    %269 = vdwg.mxu0
    %v270 = vpack.c.bf16 %v236, %v232
    %v271 = vpack.c.bf16 %v238, %v234
    %v272 = vpack.c.bf16 %v246, %v242
    %v273 = vpack.c.bf16 %v248, %v244
    %v274 = vpack.c.bf16 %v256, %v252
    %v275 = vpack.c.bf16 %v258, %v254
    %v276 = vpack.c.bf16 %v266, %v262
    %v277 = vpack.c.bf16 %v268, %v264
    %s278 = scalar_lea.vmem %s6, 32
    %v279 = vld [vmem:[%s278] sm:$0xf]
    %v280 = vld [vmem:[%s278 + $0x4] sm:$0xf]
    %v281 = vld [vmem:[%s278 + $0x8] sm:$0xf]
    %v282 = vld [vmem:[%s278 + $0xc] sm:$0xf]
    %v283 = vld [vmem:[%s278 + $0x10] sm:$0xf]
    %v284 = vld [vmem:[%s278 + $0x14] sm:$0xf]
    %v285 = vld [vmem:[%s278 + $0x18] sm:$0xf]
    %v286 = vld [vmem:[%s278 + $0x1c] sm:$0x7]
    %v295 = vunpack.c.l.b16 %v279
    %v296 = vunpack.c.l.b16 %v280
    %v297 = vunpack.c.l.b16 %v281
    %v298 = vunpack.c.l.b16 %v282
    %v299 = vunpack.c.l.b16 %v283
    %v300 = vunpack.c.l.b16 %v284
    %v301 = vunpack.c.l.b16 %v285
    %v302 = vunpack.c.l.b16 %v286
    %v303 = vpack.c.b16 %v296, %v295
    %v304 = vpack.c.b16 %v298, %v297
    %v305 = vpack.c.b16 %v300, %v299
    %v306 = vpack.c.b16 %v302, %v301
    %311 = vmatprep.subr.bf16.mxu0 %v166
    %312 = vmatpush1.bf16.msra.mxu0 %v165
    %313 = vmatprep.subr.bf16.mxu0 %v168
    %314 = vmatpush1.bf16.msra.mxu0 %v167
    %315 = vmatprep.subr.bf16.mxu0 %v170
    %316 = vmatpush1.bf16.msra.mxu0 %v169
    %317 = vmatprep.subr.bf16.mxu0 %v172
    %318 = vmatpush1.bf16.msra.mxu0 %v171
    %319 = vmatprep.subr.bf16.mxu0 %v174
    %320 = vmatpush1.bf16.msra.mxu0 %v173
    %321 = vmatprep.subr.bf16.mxu0 %v176
    %322 = vmatpush1.bf16.msra.mxu0 %v175
    %323 = vmatprep.subr.bf16.mxu0 %v178
    %324 = vmatpush1.bf16.msra.mxu0 %v177
    %325 = vmatprep.subr.bf16.mxu0 %v180
    %326 = vmatpush1.bf16.msra.mxu0 %v179
    %327 = vmatprep.subr.bf16.mxu0 0
    %328 = vmatpush1.bf16.msra.mxu0 0
    %329 = vmatprep.subr.bf16.mxu0 0
    %330 = vmatpush1.bf16.msra.mxu0 0
    %331 = vmatprep.subr.bf16.mxu0 0
    %332 = vmatpush1.bf16.msra.mxu0 0
    %333 = vmatprep.subr.bf16.mxu0 0
    %334 = vmatpush1.bf16.msra.mxu0 0
    %335 = vmatprep.subr.bf16.mxu0 0
    %336 = vmatpush1.bf16.msra.mxu0 0
    %337 = vmatprep.subr.bf16.mxu0 0
    %338 = vmatpush1.bf16.msra.mxu0 0
    %339 = vmatprep.subr.bf16.mxu0 0
    %340 = vmatpush1.bf16.msra.mxu0 0
    %341 = vmatprep.subr.bf16.mxu0 0
    %342 = vmatpush1.bf16.msra.mxu0 0
    %343 = vmatprep.mubr.bf16.mxu0 0
    %344 = vmatmul.mubr.bf16.gmra.mrb[0].mxu0 %v303
    %v345 = vpop.f32.mrb[0].mxu0
    %v346 = vadd.f32 0.0, %v345
    %v347 = vpop.f32.mrb[0].mxu0
    %v348 = vadd.f32 0.0, %v347
    %v349 = vpop.f32.mrb[0].mxu0
    %v350 = vadd.f32 0.0, %v349
    %v351 = vpop.f32.mrb[0].mxu0
    %v352 = vadd.f32 0.0, %v351
    %353 = vmatprep.mubr.bf16.mxu0 0
    %354 = vmatmul.mubr.bf16.gmra.mrb[0].mxu0 %v304
    %v355 = vpop.f32.mrb[0].mxu0
    %v356 = vadd.f32 0.0, %v355
    %v357 = vpop.f32.mrb[0].mxu0
    %v358 = vadd.f32 0.0, %v357
    %v359 = vpop.f32.mrb[0].mxu0
    %v360 = vadd.f32 0.0, %v359
    %v361 = vpop.f32.mrb[0].mxu0
    %v362 = vadd.f32 0.0, %v361
    %363 = vmatprep.mubr.bf16.mxu0 0
    %364 = vmatmul.mubr.bf16.gmra.mrb[0].mxu0 %v305
    %v365 = vpop.f32.mrb[0].mxu0
    %v366 = vadd.f32 0.0, %v365
    %v367 = vpop.f32.mrb[0].mxu0
    %v368 = vadd.f32 0.0, %v367
    %v369 = vpop.f32.mrb[0].mxu0
    %v370 = vadd.f32 0.0, %v369
    %v371 = vpop.f32.mrb[0].mxu0
    %v372 = vadd.f32 0.0, %v371
    %373 = vmatprep.mubr.bf16.mxu0 0
    %374 = vmatmul.mubr.bf16.gmra.mrb[0].mxu0 %v306
    %v375 = vpop.f32.mrb[0].mxu0
    %v376 = vadd.f32 0.0, %v375
    %v377 = vpop.f32.mrb[0].mxu0
    %v378 = vadd.f32 0.0, %v377
    %v379 = vpop.f32.mrb[0].mxu0
    %v380 = vadd.f32 0.0, %v379
    %v381 = vpop.f32.mrb[0].mxu0
    %v382 = vadd.f32 0.0, %v381
    %383 = vdwg.mxu0
    %v384 = vpack.c.bf16 %v350, %v346
    %v385 = vpack.c.bf16 %v352, %v348
    %v386 = vpack.c.bf16 %v360, %v356
    %v387 = vpack.c.bf16 %v362, %v358
    %v388 = vpack.c.bf16 %v370, %v366
    %v389 = vpack.c.bf16 %v372, %v368
    %v390 = vpack.c.bf16 %v380, %v376
    %v391 = vpack.c.bf16 %v382, %v378
    %s392 = scalar_lea.vmem %s6, 64
    %v393 = vld [vmem:[%s392] sm:$0xf]
    %v394 = vld [vmem:[%s392 + $0x4] sm:$0xf]
    %v395 = vld [vmem:[%s392 + $0x8] sm:$0xf]
    %v396 = vld [vmem:[%s392 + $0xc] sm:$0xf]
    %v397 = vld [vmem:[%s392 + $0x10] sm:$0xf]
    %v398 = vld [vmem:[%s392 + $0x14] sm:$0xf]
    %v399 = vld [vmem:[%s392 + $0x18] sm:$0xf]
    %v400 = vld [vmem:[%s392 + $0x1c] sm:$0x7]
    %v409 = vunpack.c.l.b16 %v393
    %v410 = vunpack.c.l.b16 %v394
    %v411 = vunpack.c.l.b16 %v395
    %v412 = vunpack.c.l.b16 %v396
    %v413 = vunpack.c.l.b16 %v397
    %v414 = vunpack.c.l.b16 %v398
    %v415 = vunpack.c.l.b16 %v399
    %v416 = vunpack.c.l.b16 %v400
    %v417 = vpack.c.b16 %v410, %v409
    %v418 = vpack.c.b16 %v412, %v411
    %v419 = vpack.c.b16 %v414, %v413
    %v420 = vpack.c.b16 %v416, %v415
    %425 = vmatprep.subr.bf16.mxu0 %v166
    %426 = vmatpush1.bf16.msra.mxu0 %v165
    %427 = vmatprep.subr.bf16.mxu0 %v168
    %428 = vmatpush1.bf16.msra.mxu0 %v167
    %429 = vmatprep.subr.bf16.mxu0 %v170
    %430 = vmatpush1.bf16.msra.mxu0 %v169
    %431 = vmatprep.subr.bf16.mxu0 %v172
    %432 = vmatpush1.bf16.msra.mxu0 %v171
    %433 = vmatprep.subr.bf16.mxu0 %v174
    %434 = vmatpush1.bf16.msra.mxu0 %v173
    %435 = vmatprep.subr.bf16.mxu0 %v176
    %436 = vmatpush1.bf16.msra.mxu0 %v175
    %437 = vmatprep.subr.bf16.mxu0 %v178
    %438 = vmatpush1.bf16.msra.mxu0 %v177
    %439 = vmatprep.subr.bf16.mxu0 %v180
    %440 = vmatpush1.bf16.msra.mxu0 %v179
    %441 = vmatprep.subr.bf16.mxu0 0
    %442 = vmatpush1.bf16.msra.mxu0 0
    %443 = vmatprep.subr.bf16.mxu0 0
    %444 = vmatpush1.bf16.msra.mxu0 0
    %445 = vmatprep.subr.bf16.mxu0 0
    %446 = vmatpush1.bf16.msra.mxu0 0
    %447 = vmatprep.subr.bf16.mxu0 0
    %448 = vmatpush1.bf16.msra.mxu0 0
    %449 = vmatprep.subr.bf16.mxu0 0
    %450 = vmatpush1.bf16.msra.mxu0 0
    %451 = vmatprep.subr.bf16.mxu0 0
    %452 = vmatpush1.bf16.msra.mxu0 0
    %453 = vmatprep.subr.bf16.mxu0 0
    %454 = vmatpush1.bf16.msra.mxu0 0
    %455 = vmatprep.subr.bf16.mxu0 0
    %456 = vmatpush1.bf16.msra.mxu0 0
    %457 = vmatprep.mubr.bf16.mxu0 0
    %458 = vmatmul.mubr.bf16.gmra.mrb[0].mxu0 %v417
    %v459 = vpop.f32.mrb[0].mxu0
    %v460 = vadd.f32 0.0, %v459
    %v461 = vpop.f32.mrb[0].mxu0
    %v462 = vadd.f32 0.0, %v461
    %v463 = vpop.f32.mrb[0].mxu0
    %v464 = vadd.f32 0.0, %v463
    %v465 = vpop.f32.mrb[0].mxu0
    %v466 = vadd.f32 0.0, %v465
    %467 = vmatprep.mubr.bf16.mxu0 0
    %468 = vmatmul.mubr.bf16.gmra.mrb[0].mxu0 %v418
    %v469 = vpop.f32.mrb[0].mxu0
    %v470 = vadd.f32 0.0, %v469
    %v471 = vpop.f32.mrb[0].mxu0
    %v472 = vadd.f32 0.0, %v471
    %v473 = vpop.f32.mrb[0].mxu0
    %v474 = vadd.f32 0.0, %v473
    %v475 = vpop.f32.mrb[0].mxu0
    %v476 = vadd.f32 0.0, %v475
    %477 = vmatprep.mubr.bf16.mxu0 0
    %478 = vmatmul.mubr.bf16.gmra.mrb[0].mxu0 %v419
    %v479 = vpop.f32.mrb[0].mxu0
    %v480 = vadd.f32 0.0, %v479
    %v481 = vpop.f32.mrb[0].mxu0
    %v482 = vadd.f32 0.0, %v481
    %v483 = vpop.f32.mrb[0].mxu0
    %v484 = vadd.f32 0.0, %v483
    %v485 = vpop.f32.mrb[0].mxu0
    %v486 = vadd.f32 0.0, %v485
    %487 = vmatprep.mubr.bf16.mxu0 0
    %488 = vmatmul.mubr.bf16.gmra.mrb[0].mxu0 %v420
    %v489 = vpop.f32.mrb[0].mxu0
    %v490 = vadd.f32 0.0, %v489
    %v491 = vpop.f32.mrb[0].mxu0
    %v492 = vadd.f32 0.0, %v491
    %v493 = vpop.f32.mrb[0].mxu0
    %v494 = vadd.f32 0.0, %v493
    %v495 = vpop.f32.mrb[0].mxu0
    %v496 = vadd.f32 0.0, %v495
    %497 = vdwg.mxu0
    %v498 = vpack.c.bf16 %v464, %v460
    %v499 = vpack.c.bf16 %v466, %v462
    %v500 = vpack.c.bf16 %v474, %v470
    %v501 = vpack.c.bf16 %v476, %v472
    %v502 = vpack.c.bf16 %v484, %v480
    %v503 = vpack.c.bf16 %v486, %v482
    %v504 = vpack.c.bf16 %v494, %v490
    %v505 = vpack.c.bf16 %v496, %v492
    %v506 = vld [vmem:[%s1] sm:$0xff]
    %v507 = vld [vmem:[%s1 + $0x8] sm:$0xff]
    %v508 = vld [vmem:[%s1 + $0x10] sm:$0xff]
    %v509 = vld [vmem:[%s1 + $0x18] sm:$0xff]
    %v510 = vld [vmem:[%s1 + $0x20] sm:$0xff]
    %v511 = vld [vmem:[%s1 + $0x28] sm:$0xff]
    %v512 = vld [vmem:[%s1 + $0x30] sm:$0xff]
    %v513 = vld [vmem:[%s1 + $0x38] sm:$0xff]
    %v514 = vld [vmem:[%s1 + $0x40] sm:$0xff]
    %v515 = vld [vmem:[%s1 + $0x48] sm:$0xff]
    %v516 = vld [vmem:[%s1 + $0x50] sm:$0xff]
    %v517 = vld [vmem:[%s1 + $0x58] sm:$0xff]
    %v518 = vld [vmem:[%s1 + $0x60] sm:$0xff]
    %v519 = vld [vmem:[%s1 + $0x68] sm:$0xff]
    %v520 = vld [vmem:[%s1 + $0x70] sm:$0xff]
    %v521 = vld [vmem:[%s1 + $0x78] sm:$0xff]
    %v522 = vld [vmem:[%s1 + $0x80] sm:$0xff]
    %v523 = vld [vmem:[%s1 + $0x88] sm:$0xff]
    %v524 = vld [vmem:[%s1 + $0x90] sm:$0xff]
    %v525 = vld [vmem:[%s1 + $0x98] sm:$0xff]
    %v526 = vld [vmem:[%s1 + $0xa0] sm:$0xff]
    %v527 = vld [vmem:[%s1 + $0xa8] sm:$0xff]
    %v528 = vld [vmem:[%s1 + $0xb0] sm:$0xff]
    %v529 = vld [vmem:[%s1 + $0xb8] sm:$0xff]
    %v530 = vld [vmem:[%s1 + $0xc0] sm:$0xff]
    %v531 = vld [vmem:[%s1 + $0xc8] sm:$0xff]
    %v532 = vld [vmem:[%s1 + $0xd0] sm:$0xff]
    %v533 = vld [vmem:[%s1 + $0xd8] sm:$0xff]
    %v534 = vld [vmem:[%s1 + $0xe0] sm:$0xff]
    %v535 = vld [vmem:[%s1 + $0xe8] sm:$0xff]
    %v536 = vld [vmem:[%s1 + $0xf0] sm:$0xff]
    %v537 = vld [vmem:[%s1 + $0xf8] sm:$0xff]
    %v538 = vld [vmem:[%s1 + $0x100] sm:$0xff]
    %v539 = vld [vmem:[%s1 + $0x108] sm:$0xff]
    %v540 = vld [vmem:[%s1 + $0x110] sm:$0xff]
    %v541 = vld [vmem:[%s1 + $0x118] sm:$0xff]
    %v542 = vld [vmem:[%s1 + $0x120] sm:$0xff]
    %v543 = vld [vmem:[%s1 + $0x128] sm:$0xff]
    %v544 = vld [vmem:[%s1 + $0x130] sm:$0xff]
    %v545 = vld [vmem:[%s1 + $0x138] sm:$0xff]
    %v546 = vld [vmem:[%s1 + $0x140] sm:$0xff]
    %v547 = vld [vmem:[%s1 + $0x148] sm:$0xff]
    %v548 = vld [vmem:[%s1 + $0x150] sm:$0xff]
    %v549 = vld [vmem:[%s1 + $0x158] sm:$0xff]
    %v550 = vld [vmem:[%s1 + $0x160] sm:$0xff]
    %v551 = vld [vmem:[%s1 + $0x168] sm:$0xff]
    %v552 = vld [vmem:[%s1 + $0x170] sm:$0xff]
    %v553 = vld [vmem:[%s1 + $0x178] sm:$0xff]
    %v554 = vld [vmem:[%s1 + $0x180] sm:$0xff]
    %v555 = vld [vmem:[%s1 + $0x188] sm:$0xff]
    %v556 = vld [vmem:[%s1 + $0x190] sm:$0xff]
    %v557 = vld [vmem:[%s1 + $0x198] sm:$0xff]
    %v558 = vld [vmem:[%s1 + $0x1a0] sm:$0xff]
    %v559 = vld [vmem:[%s1 + $0x1a8] sm:$0xff]
    %v560 = vld [vmem:[%s1 + $0x1b0] sm:$0xff]
    %v561 = vld [vmem:[%s1 + $0x1b8] sm:$0xff]
    %v562 = vld [vmem:[%s1 + $0x1c0] sm:$0xff]
    %v563 = vld [vmem:[%s1 + $0x1c8] sm:$0xff]
    %v564 = vld [vmem:[%s1 + $0x1d0] sm:$0xff]
    %v565 = vld [vmem:[%s1 + $0x1d8] sm:$0xff]
    %v566 = vld [vmem:[%s1 + $0x1e0] sm:$0xff]
    %v567 = vld [vmem:[%s1 + $0x1e8] sm:$0xff]
    %v568 = vld [vmem:[%s1 + $0x1f0] sm:$0xff]
    %v569 = vld [vmem:[%s1 + $0x1f8] sm:$0xff]
    %v570 = vld [vmem:[%s1 + $0x200] sm:$0xff]
    %v571 = vld [vmem:[%s1 + $0x208] sm:$0xff]
    %v572 = vld [vmem:[%s1 + $0x210] sm:$0xff]
    %v573 = vld [vmem:[%s1 + $0x218] sm:$0xff]
    %v574 = vld [vmem:[%s1 + $0x220] sm:$0xff]
    %v575 = vld [vmem:[%s1 + $0x228] sm:$0xff]
    %v576 = vld [vmem:[%s1 + $0x230] sm:$0xff]
    %v577 = vld [vmem:[%s1 + $0x238] sm:$0xff]
    %v578 = vld [vmem:[%s1 + $0x240] sm:$0xff]
    %v579 = vld [vmem:[%s1 + $0x248] sm:$0xff]
    %v580 = vld [vmem:[%s1 + $0x250] sm:$0xff]
    %v581 = vld [vmem:[%s1 + $0x258] sm:$0xff]
    %v582 = vld [vmem:[%s1 + $0x260] sm:$0xff]
    %v583 = vld [vmem:[%s1 + $0x268] sm:$0xff]
    %v584 = vld [vmem:[%s1 + $0x270] sm:$0xff]
    %v585 = vld [vmem:[%s1 + $0x278] sm:$0xff]
    %v586 = vld [vmem:[%s1 + $0x280] sm:$0xff]
    %v587 = vld [vmem:[%s1 + $0x288] sm:$0xff]
    %v588 = vld [vmem:[%s1 + $0x290] sm:$0xff]
    %v589 = vld [vmem:[%s1 + $0x298] sm:$0xff]
    %v590 = vld [vmem:[%s1 + $0x2a0] sm:$0xff]
    %v591 = vld [vmem:[%s1 + $0x2a8] sm:$0xff]
    %v592 = vld [vmem:[%s1 + $0x2b0] sm:$0xff]
    %v593 = vld [vmem:[%s1 + $0x2b8] sm:$0xff]
    %v594 = vld [vmem:[%s1 + $0x2c0] sm:$0xff]
    %v595 = vld [vmem:[%s1 + $0x2c8] sm:$0xff]
    %v596 = vld [vmem:[%s1 + $0x2d0] sm:$0xff]
    %v597 = vld [vmem:[%s1 + $0x2d8] sm:$0xff]
    %v598 = vld [vmem:[%s1 + $0x2e0] sm:$0xff]
    %v599 = vld [vmem:[%s1 + $0x2e8] sm:$0xff]
    %v600 = vld [vmem:[%s1 + $0x2f0] sm:$0xff]
    %v601 = vld [vmem:[%s1 + $0x2f8] sm:$0xff]
    %v602 = vld [vmem:[%s11] sm:$0x3]
    %v604 = vlaneseq
    %v605 = vshrl.u32 %v604, 7
    %v606 = vsub.s32 0, %v605
    %v607 = vrot.slane %v602, %v606
    %v608 = vlaneseq
    %v609 = vshrl.u32 %v608, 7
    %v610 = vsub.s32 1, %v609
    %v611 = vrot.slane %v602, %v610
    %v710 = vunpack.c.l.b16 %v506
    %v711 = vunpack.c.h.b16 %v506
    %v712 = vunpack.c.l.b16 %v507
    %v713 = vunpack.c.h.b16 %v507
    %v714 = vunpack.c.l.b16 %v508
    %v715 = vunpack.c.h.b16 %v508
    %v716 = vunpack.c.l.b16 %v509
    %v717 = vunpack.c.h.b16 %v509
    %v718 = vunpack.c.l.b16 %v510
    %v719 = vunpack.c.h.b16 %v510
    %v720 = vunpack.c.l.b16 %v511
    %v721 = vunpack.c.h.b16 %v511
    %v722 = vunpack.c.l.b16 %v512
    %v723 = vunpack.c.h.b16 %v512
    %v724 = vunpack.c.l.b16 %v513
    %v725 = vunpack.c.h.b16 %v513
    %v726 = vunpack.c.l.b16 %v514
    %v727 = vunpack.c.h.b16 %v514
    %v728 = vunpack.c.l.b16 %v515
    %v729 = vunpack.c.h.b16 %v515
    %v730 = vunpack.c.l.b16 %v516
    %v731 = vunpack.c.h.b16 %v516
    %v732 = vunpack.c.l.b16 %v517
    %v733 = vunpack.c.h.b16 %v517
    %v734 = vunpack.c.l.b16 %v518
    %v735 = vunpack.c.h.b16 %v518
    %v736 = vunpack.c.l.b16 %v519
    %v737 = vunpack.c.h.b16 %v519
    %v738 = vunpack.c.l.b16 %v520
    %v739 = vunpack.c.h.b16 %v520
    %v740 = vunpack.c.l.b16 %v521
    %v741 = vunpack.c.h.b16 %v521
    %v742 = vunpack.c.l.b16 %v522
    %v743 = vunpack.c.h.b16 %v522
    %v744 = vunpack.c.l.b16 %v523
    %v745 = vunpack.c.h.b16 %v523
    %v746 = vunpack.c.l.b16 %v524
    %v747 = vunpack.c.h.b16 %v524
    %v748 = vunpack.c.l.b16 %v525
    %v749 = vunpack.c.h.b16 %v525
    %v750 = vunpack.c.l.b16 %v526
    %v751 = vunpack.c.h.b16 %v526
    %v752 = vunpack.c.l.b16 %v527
    %v753 = vunpack.c.h.b16 %v527
    %v754 = vunpack.c.l.b16 %v528
    %v755 = vunpack.c.h.b16 %v528
    %v756 = vunpack.c.l.b16 %v529
    %v757 = vunpack.c.h.b16 %v529
    %v758 = vunpack.c.l.b16 %v530
    %v759 = vunpack.c.h.b16 %v530
    %v760 = vunpack.c.l.b16 %v531
    %v761 = vunpack.c.h.b16 %v531
    %v762 = vunpack.c.l.b16 %v532
    %v763 = vunpack.c.h.b16 %v532
    %v764 = vunpack.c.l.b16 %v533
    %v765 = vunpack.c.h.b16 %v533
    %v766 = vunpack.c.l.b16 %v534
    %v767 = vunpack.c.h.b16 %v534
    %v768 = vunpack.c.l.b16 %v535
    %v769 = vunpack.c.h.b16 %v535
    %v770 = vunpack.c.l.b16 %v536
    %v771 = vunpack.c.h.b16 %v536
    %v772 = vunpack.c.l.b16 %v537
    %v773 = vunpack.c.h.b16 %v537
    %v774 = vunpack.c.l.b16 %v538
    %v775 = vunpack.c.h.b16 %v538
    %v776 = vunpack.c.l.b16 %v539
    %v777 = vunpack.c.h.b16 %v539
    %v778 = vunpack.c.l.b16 %v540
    %v779 = vunpack.c.h.b16 %v540
    %v780 = vunpack.c.l.b16 %v541
    %v781 = vunpack.c.h.b16 %v541
    %v782 = vunpack.c.l.b16 %v542
    %v783 = vunpack.c.h.b16 %v542
    %v784 = vunpack.c.l.b16 %v543
    %v785 = vunpack.c.h.b16 %v543
    %v786 = vunpack.c.l.b16 %v544
    %v787 = vunpack.c.h.b16 %v544
    %v788 = vunpack.c.l.b16 %v545
    %v789 = vunpack.c.h.b16 %v545
    %v790 = vunpack.c.l.b16 %v546
    %v791 = vunpack.c.h.b16 %v546
    %v792 = vunpack.c.l.b16 %v547
    %v793 = vunpack.c.h.b16 %v547
    %v794 = vunpack.c.l.b16 %v548
    %v795 = vunpack.c.h.b16 %v548
    %v796 = vunpack.c.l.b16 %v549
    %v797 = vunpack.c.h.b16 %v549
    %v798 = vunpack.c.l.b16 %v550
    %v799 = vunpack.c.h.b16 %v550
    %v800 = vunpack.c.l.b16 %v551
    %v801 = vunpack.c.h.b16 %v551
    %v802 = vunpack.c.l.b16 %v552
    %v803 = vunpack.c.h.b16 %v552
    %v804 = vunpack.c.l.b16 %v553
    %v805 = vunpack.c.h.b16 %v553
    %v806 = vunpack.c.l.b16 %v554
    %v807 = vunpack.c.h.b16 %v554
    %v808 = vunpack.c.l.b16 %v555
    %v809 = vunpack.c.h.b16 %v555
    %v810 = vunpack.c.l.b16 %v556
    %v811 = vunpack.c.h.b16 %v556
    %v812 = vunpack.c.l.b16 %v557
    %v813 = vunpack.c.h.b16 %v557
    %v814 = vunpack.c.l.b16 %v558
    %v815 = vunpack.c.h.b16 %v558
    %v816 = vunpack.c.l.b16 %v559
    %v817 = vunpack.c.h.b16 %v559
    %v818 = vunpack.c.l.b16 %v560
    %v819 = vunpack.c.h.b16 %v560
    %v820 = vunpack.c.l.b16 %v561
    %v821 = vunpack.c.h.b16 %v561
    %v822 = vunpack.c.l.b16 %v562
    %v823 = vunpack.c.h.b16 %v562
    %v824 = vunpack.c.l.b16 %v563
    %v825 = vunpack.c.h.b16 %v563
    %v826 = vunpack.c.l.b16 %v564
    %v827 = vunpack.c.h.b16 %v564
    %v828 = vunpack.c.l.b16 %v565
    %v829 = vunpack.c.h.b16 %v565
    %v830 = vunpack.c.l.b16 %v566
    %v831 = vunpack.c.h.b16 %v566
    %v832 = vunpack.c.l.b16 %v567
    %v833 = vunpack.c.h.b16 %v567
    %v834 = vunpack.c.l.b16 %v568
    %v835 = vunpack.c.h.b16 %v568
    %v836 = vunpack.c.l.b16 %v569
    %v837 = vunpack.c.h.b16 %v569
    %v838 = vunpack.c.l.b16 %v570
    %v839 = vunpack.c.h.b16 %v570
    %v840 = vunpack.c.l.b16 %v571
    %v841 = vunpack.c.h.b16 %v571
    %v842 = vunpack.c.l.b16 %v572
    %v843 = vunpack.c.h.b16 %v572
    %v844 = vunpack.c.l.b16 %v573
    %v845 = vunpack.c.h.b16 %v573
    %v846 = vunpack.c.l.b16 %v574
    %v847 = vunpack.c.h.b16 %v574
    %v848 = vunpack.c.l.b16 %v575
    %v849 = vunpack.c.h.b16 %v575
    %v850 = vunpack.c.l.b16 %v576
    %v851 = vunpack.c.h.b16 %v576
    %v852 = vunpack.c.l.b16 %v577
    %v853 = vunpack.c.h.b16 %v577
    %v854 = vunpack.c.l.b16 %v578
    %v855 = vunpack.c.h.b16 %v578
    %v856 = vunpack.c.l.b16 %v579
    %v857 = vunpack.c.h.b16 %v579
    %v858 = vunpack.c.l.b16 %v580
    %v859 = vunpack.c.h.b16 %v580
    %v860 = vunpack.c.l.b16 %v581
    %v861 = vunpack.c.h.b16 %v581
    %v862 = vunpack.c.l.b16 %v582
    %v863 = vunpack.c.h.b16 %v582
    %v864 = vunpack.c.l.b16 %v583
    %v865 = vunpack.c.h.b16 %v583
    %v866 = vunpack.c.l.b16 %v584
    %v867 = vunpack.c.h.b16 %v584
    %v868 = vunpack.c.l.b16 %v585
    %v869 = vunpack.c.h.b16 %v585
    %v870 = vunpack.c.l.b16 %v586
    %v871 = vunpack.c.h.b16 %v586
    %v872 = vunpack.c.l.b16 %v587
    %v873 = vunpack.c.h.b16 %v587
    %v874 = vunpack.c.l.b16 %v588
    %v875 = vunpack.c.h.b16 %v588
    %v876 = vunpack.c.l.b16 %v589
    %v877 = vunpack.c.h.b16 %v589
    %v878 = vunpack.c.l.b16 %v590
    %v879 = vunpack.c.h.b16 %v590
    %v880 = vunpack.c.l.b16 %v591
    %v881 = vunpack.c.h.b16 %v591
    %v882 = vunpack.c.l.b16 %v592
    %v883 = vunpack.c.h.b16 %v592
    %v884 = vunpack.c.l.b16 %v593
    %v885 = vunpack.c.h.b16 %v593
    %v886 = vunpack.c.l.b16 %v594
    %v887 = vunpack.c.h.b16 %v594
    %v888 = vunpack.c.l.b16 %v595
    %v889 = vunpack.c.h.b16 %v595
    %v890 = vunpack.c.l.b16 %v596
    %v891 = vunpack.c.h.b16 %v596
    %v892 = vunpack.c.l.b16 %v597
    %v893 = vunpack.c.h.b16 %v597
    %v894 = vunpack.c.l.b16 %v598
    %v895 = vunpack.c.h.b16 %v598
    %v896 = vunpack.c.l.b16 %v599
    %v897 = vunpack.c.h.b16 %v599
    %v898 = vunpack.c.l.b16 %v600
    %v899 = vunpack.c.h.b16 %v600
    %v900 = vunpack.c.l.b16 %v601
    %v901 = vunpack.c.h.b16 %v601
    %v902 = vpack.c.b16 %v712, %v710
    %v903 = vpack.c.b16 %v713, %v711
    %v904 = vpack.c.b16 %v716, %v714
    %v905 = vpack.c.b16 %v717, %v715
    %v906 = vpack.c.b16 %v720, %v718
    %v907 = vpack.c.b16 %v721, %v719
    %v908 = vpack.c.b16 %v724, %v722
    %v909 = vpack.c.b16 %v725, %v723
    %v910 = vpack.c.b16 %v728, %v726
    %v911 = vpack.c.b16 %v729, %v727
    %v912 = vpack.c.b16 %v732, %v730
    %v913 = vpack.c.b16 %v733, %v731
    %v914 = vpack.c.b16 %v736, %v734
    %v915 = vpack.c.b16 %v737, %v735
    %v916 = vpack.c.b16 %v740, %v738
    %v917 = vpack.c.b16 %v741, %v739
    %v918 = vpack.c.b16 %v744, %v742
    %v919 = vpack.c.b16 %v745, %v743
    %v920 = vpack.c.b16 %v748, %v746
    %v921 = vpack.c.b16 %v749, %v747
    %v922 = vpack.c.b16 %v752, %v750
    %v923 = vpack.c.b16 %v753, %v751
    %v924 = vpack.c.b16 %v756, %v754
    %v925 = vpack.c.b16 %v757, %v755
    %v926 = vpack.c.b16 %v760, %v758
    %v927 = vpack.c.b16 %v761, %v759
    %v928 = vpack.c.b16 %v764, %v762
    %v929 = vpack.c.b16 %v765, %v763
    %v930 = vpack.c.b16 %v768, %v766
    %v931 = vpack.c.b16 %v769, %v767
    %v932 = vpack.c.b16 %v772, %v770
    %v933 = vpack.c.b16 %v773, %v771
    %v934 = vpack.c.b16 %v776, %v774
    %v935 = vpack.c.b16 %v777, %v775
    %v936 = vpack.c.b16 %v780, %v778
    %v937 = vpack.c.b16 %v781, %v779
    %v938 = vpack.c.b16 %v784, %v782
    %v939 = vpack.c.b16 %v785, %v783
    %v940 = vpack.c.b16 %v788, %v786
    %v941 = vpack.c.b16 %v789, %v787
    %v942 = vpack.c.b16 %v792, %v790
    %v943 = vpack.c.b16 %v793, %v791
    %v944 = vpack.c.b16 %v796, %v794
    %v945 = vpack.c.b16 %v797, %v795
    %v946 = vpack.c.b16 %v800, %v798
    %v947 = vpack.c.b16 %v801, %v799
    %v948 = vpack.c.b16 %v804, %v802
    %v949 = vpack.c.b16 %v805, %v803
    %v950 = vpack.c.b16 %v808, %v806
    %v951 = vpack.c.b16 %v809, %v807
    %v952 = vpack.c.b16 %v812, %v810
    %v953 = vpack.c.b16 %v813, %v811
    %v954 = vpack.c.b16 %v816, %v814
    %v955 = vpack.c.b16 %v817, %v815
    %v956 = vpack.c.b16 %v820, %v818
    %v957 = vpack.c.b16 %v821, %v819
    %v958 = vpack.c.b16 %v824, %v822
    %v959 = vpack.c.b16 %v825, %v823
    %v960 = vpack.c.b16 %v828, %v826
    %v961 = vpack.c.b16 %v829, %v827
    %v962 = vpack.c.b16 %v832, %v830
    %v963 = vpack.c.b16 %v833, %v831
    %v964 = vpack.c.b16 %v836, %v834
    %v965 = vpack.c.b16 %v837, %v835
    %v966 = vpack.c.b16 %v840, %v838
    %v967 = vpack.c.b16 %v841, %v839
    %v968 = vpack.c.b16 %v844, %v842
    %v969 = vpack.c.b16 %v845, %v843
    %v970 = vpack.c.b16 %v848, %v846
    %v971 = vpack.c.b16 %v849, %v847
    %v972 = vpack.c.b16 %v852, %v850
    %v973 = vpack.c.b16 %v853, %v851
    %v974 = vpack.c.b16 %v856, %v854
    %v975 = vpack.c.b16 %v857, %v855
    %v976 = vpack.c.b16 %v860, %v858
    %v977 = vpack.c.b16 %v861, %v859
    %v978 = vpack.c.b16 %v864, %v862
    %v979 = vpack.c.b16 %v865, %v863
    %v980 = vpack.c.b16 %v868, %v866
    %v981 = vpack.c.b16 %v869, %v867
    %v982 = vpack.c.b16 %v872, %v870
    %v983 = vpack.c.b16 %v873, %v871
    %v984 = vpack.c.b16 %v876, %v874
    %v985 = vpack.c.b16 %v877, %v875
    %v986 = vpack.c.b16 %v880, %v878
    %v987 = vpack.c.b16 %v881, %v879
    %v988 = vpack.c.b16 %v884, %v882
    %v989 = vpack.c.b16 %v885, %v883
    %v990 = vpack.c.b16 %v888, %v886
    %v991 = vpack.c.b16 %v889, %v887
    %v992 = vpack.c.b16 %v892, %v890
    %v993 = vpack.c.b16 %v893, %v891
    %v994 = vpack.c.b16 %v896, %v894
    %v995 = vpack.c.b16 %v897, %v895
    %v996 = vpack.c.b16 %v900, %v898
    %v997 = vpack.c.b16 %v901, %v899
    %1094 = vmatprep.subr.bf16.mxu0 %v903
    %1095 = vmatpush1.bf16.msra.mxu0 %v902
    %1096 = vmatprep.subr.bf16.mxu0 %v905
    %1097 = vmatpush1.bf16.msra.mxu0 %v904
    %1098 = vmatprep.subr.bf16.mxu0 %v907
    %1099 = vmatpush1.bf16.msra.mxu0 %v906
    %1100 = vmatprep.subr.bf16.mxu0 %v909
    %1101 = vmatpush1.bf16.msra.mxu0 %v908
    %1102 = vmatprep.subr.bf16.mxu0 %v911
    %1103 = vmatpush1.bf16.msra.mxu0 %v910
    %1104 = vmatprep.subr.bf16.mxu0 %v913
    %1105 = vmatpush1.bf16.msra.mxu0 %v912
    %1106 = vmatprep.subr.bf16.mxu0 %v915
    %1107 = vmatpush1.bf16.msra.mxu0 %v914
    %1108 = vmatprep.subr.bf16.mxu0 %v917
    %1109 = vmatpush1.bf16.msra.mxu0 %v916
    %1110 = vmatprep.subr.bf16.mxu0 %v919
    %1111 = vmatpush1.bf16.msra.mxu0 %v918
    %1112 = vmatprep.subr.bf16.mxu0 %v921
    %1113 = vmatpush1.bf16.msra.mxu0 %v920
    %1114 = vmatprep.subr.bf16.mxu0 %v923
    %1115 = vmatpush1.bf16.msra.mxu0 %v922
    %1116 = vmatprep.subr.bf16.mxu0 %v925
    %1117 = vmatpush1.bf16.msra.mxu0 %v924
    %1118 = vmatprep.subr.bf16.mxu0 %v927
    %1119 = vmatpush1.bf16.msra.mxu0 %v926
    %1120 = vmatprep.subr.bf16.mxu0 %v929
    %1121 = vmatpush1.bf16.msra.mxu0 %v928
    %1122 = vmatprep.subr.bf16.mxu0 %v931
    %1123 = vmatpush1.bf16.msra.mxu0 %v930
    %1124 = vmatprep.subr.bf16.mxu0 %v933
    %1125 = vmatpush1.bf16.msra.mxu0 %v932
    %1126 = vmatprep.mubr.bf16.mxu0 %v271
    %1127 = vmatmul.mubr.bf16.gmra.mrb[0].mxu0 %v270
    %v1128 = vpop.f32.mrb[0].mxu0
    %v1129 = vadd.f32 %v607, %v1128
    %v1130 = vpop.f32.mrb[0].mxu0
    %v1131 = vadd.f32 %v611, %v1130
    %v1132 = vpop.f32.mrb[0].mxu0
    %v1133 = vadd.f32 %v607, %v1132
    %v1134 = vpop.f32.mrb[0].mxu0
    %v1135 = vadd.f32 %v611, %v1134
    %1136 = vmatprep.mubr.bf16.mxu0 %v273
    %1137 = vmatmul.mubr.bf16.gmra.mrb[0].mxu0 %v272
    %v1138 = vpop.f32.mrb[0].mxu0
    %v1139 = vadd.f32 %v607, %v1138
    %v1140 = vpop.f32.mrb[0].mxu0
    %v1141 = vadd.f32 %v611, %v1140
    %v1142 = vpop.f32.mrb[0].mxu0
    %v1143 = vadd.f32 %v607, %v1142
    %v1144 = vpop.f32.mrb[0].mxu0
    %v1145 = vadd.f32 %v611, %v1144
    %1146 = vmatprep.mubr.bf16.mxu0 %v275
    %1147 = vmatmul.mubr.bf16.gmra.mrb[0].mxu0 %v274
    %v1148 = vpop.f32.mrb[0].mxu0
    %v1149 = vadd.f32 %v607, %v1148
    %v1150 = vpop.f32.mrb[0].mxu0
    %v1151 = vadd.f32 %v611, %v1150
    %v1152 = vpop.f32.mrb[0].mxu0
    %v1153 = vadd.f32 %v607, %v1152
    %v1154 = vpop.f32.mrb[0].mxu0
    %v1155 = vadd.f32 %v611, %v1154
    %1156 = vmatprep.mubr.bf16.mxu0 %v277
    %1157 = vmatmul.mubr.bf16.gmra.mrb[0].mxu0 %v276
    %v1158 = vpop.f32.mrb[0].mxu0
    %v1159 = vadd.f32 %v607, %v1158
    %v1160 = vpop.f32.mrb[0].mxu0
    %v1161 = vadd.f32 %v611, %v1160
    %v1162 = vpop.f32.mrb[0].mxu0
    %v1163 = vadd.f32 %v607, %v1162
    %v1164 = vpop.f32.mrb[0].mxu0
    %v1165 = vadd.f32 %v611, %v1164
    %1166 = vdwg.mxu0
    %1167 = vmatprep.subr.bf16.mxu0 %v935
    %1168 = vmatpush1.bf16.msra.mxu0 %v934
    %1169 = vmatprep.subr.bf16.mxu0 %v937
    %1170 = vmatpush1.bf16.msra.mxu0 %v936
    %1171 = vmatprep.subr.bf16.mxu0 %v939
    %1172 = vmatpush1.bf16.msra.mxu0 %v938
    %1173 = vmatprep.subr.bf16.mxu0 %v941
    %1174 = vmatpush1.bf16.msra.mxu0 %v940
    %1175 = vmatprep.subr.bf16.mxu0 %v943
    %1176 = vmatpush1.bf16.msra.mxu0 %v942
    %1177 = vmatprep.subr.bf16.mxu0 %v945
    %1178 = vmatpush1.bf16.msra.mxu0 %v944
    %1179 = vmatprep.subr.bf16.mxu0 %v947
    %1180 = vmatpush1.bf16.msra.mxu0 %v946
    %1181 = vmatprep.subr.bf16.mxu0 %v949
    %1182 = vmatpush1.bf16.msra.mxu0 %v948
    %1183 = vmatprep.subr.bf16.mxu0 %v951
    %1184 = vmatpush1.bf16.msra.mxu0 %v950
    %1185 = vmatprep.subr.bf16.mxu0 %v953
    %1186 = vmatpush1.bf16.msra.mxu0 %v952
    %1187 = vmatprep.subr.bf16.mxu0 %v955
    %1188 = vmatpush1.bf16.msra.mxu0 %v954
    %1189 = vmatprep.subr.bf16.mxu0 %v957
    %1190 = vmatpush1.bf16.msra.mxu0 %v956
    %1191 = vmatprep.subr.bf16.mxu0 %v959
    %1192 = vmatpush1.bf16.msra.mxu0 %v958
    %1193 = vmatprep.subr.bf16.mxu0 %v961
    %1194 = vmatpush1.bf16.msra.mxu0 %v960
    %1195 = vmatprep.subr.bf16.mxu0 %v963
    %1196 = vmatpush1.bf16.msra.mxu0 %v962
    %1197 = vmatprep.subr.bf16.mxu0 %v965
    %1198 = vmatpush1.bf16.msra.mxu0 %v964
    %1199 = vmatprep.mubr.bf16.mxu0 %v385
    %1200 = vmatmul.mubr.bf16.gmra.mrb[0].mxu0 %v384
    %v1201 = vpop.f32.mrb[0].mxu0
    %v1202 = vadd.f32 %v1129, %v1201
    %v1203 = vpop.f32.mrb[0].mxu0
    %v1204 = vadd.f32 %v1131, %v1203
    %v1205 = vpop.f32.mrb[0].mxu0
    %v1206 = vadd.f32 %v1133, %v1205
    %v1207 = vpop.f32.mrb[0].mxu0
    %v1208 = vadd.f32 %v1135, %v1207
    %1209 = vmatprep.mubr.bf16.mxu0 %v387
    %1210 = vmatmul.mubr.bf16.gmra.mrb[0].mxu0 %v386
    %v1211 = vpop.f32.mrb[0].mxu0
    %v1212 = vadd.f32 %v1139, %v1211
    %v1213 = vpop.f32.mrb[0].mxu0
    %v1214 = vadd.f32 %v1141, %v1213
    %v1215 = vpop.f32.mrb[0].mxu0
    %v1216 = vadd.f32 %v1143, %v1215
    %v1217 = vpop.f32.mrb[0].mxu0
    %v1218 = vadd.f32 %v1145, %v1217
    %1219 = vmatprep.mubr.bf16.mxu0 %v389
    %1220 = vmatmul.mubr.bf16.gmra.mrb[0].mxu0 %v388
    %v1221 = vpop.f32.mrb[0].mxu0
    %v1222 = vadd.f32 %v1149, %v1221
    %v1223 = vpop.f32.mrb[0].mxu0
    %v1224 = vadd.f32 %v1151, %v1223
    %v1225 = vpop.f32.mrb[0].mxu0
    %v1226 = vadd.f32 %v1153, %v1225
    %v1227 = vpop.f32.mrb[0].mxu0
    %v1228 = vadd.f32 %v1155, %v1227
    %1229 = vmatprep.mubr.bf16.mxu0 %v391
    %1230 = vmatmul.mubr.bf16.gmra.mrb[0].mxu0 %v390
    %v1231 = vpop.f32.mrb[0].mxu0
    %v1232 = vadd.f32 %v1159, %v1231
    %v1233 = vpop.f32.mrb[0].mxu0
    %v1234 = vadd.f32 %v1161, %v1233
    %v1235 = vpop.f32.mrb[0].mxu0
    %v1236 = vadd.f32 %v1163, %v1235
    %v1237 = vpop.f32.mrb[0].mxu0
    %v1238 = vadd.f32 %v1165, %v1237
    %1239 = vdwg.mxu0
    %1240 = vmatprep.subr.bf16.mxu0 %v967
    %1241 = vmatpush1.bf16.msra.mxu0 %v966
    %1242 = vmatprep.subr.bf16.mxu0 %v969
    %1243 = vmatpush1.bf16.msra.mxu0 %v968
    %1244 = vmatprep.subr.bf16.mxu0 %v971
    %1245 = vmatpush1.bf16.msra.mxu0 %v970
    %1246 = vmatprep.subr.bf16.mxu0 %v973
    %1247 = vmatpush1.bf16.msra.mxu0 %v972
    %1248 = vmatprep.subr.bf16.mxu0 %v975
    %1249 = vmatpush1.bf16.msra.mxu0 %v974
    %1250 = vmatprep.subr.bf16.mxu0 %v977
    %1251 = vmatpush1.bf16.msra.mxu0 %v976
    %1252 = vmatprep.subr.bf16.mxu0 %v979
    %1253 = vmatpush1.bf16.msra.mxu0 %v978
    %1254 = vmatprep.subr.bf16.mxu0 %v981
    %1255 = vmatpush1.bf16.msra.mxu0 %v980
    %1256 = vmatprep.subr.bf16.mxu0 %v983
    %1257 = vmatpush1.bf16.msra.mxu0 %v982
    %1258 = vmatprep.subr.bf16.mxu0 %v985
    %1259 = vmatpush1.bf16.msra.mxu0 %v984
    %1260 = vmatprep.subr.bf16.mxu0 %v987
    %1261 = vmatpush1.bf16.msra.mxu0 %v986
    %1262 = vmatprep.subr.bf16.mxu0 %v989
    %1263 = vmatpush1.bf16.msra.mxu0 %v988
    %1264 = vmatprep.subr.bf16.mxu0 %v991
    %1265 = vmatpush1.bf16.msra.mxu0 %v990
    %1266 = vmatprep.subr.bf16.mxu0 %v993
    %1267 = vmatpush1.bf16.msra.mxu0 %v992
    %1268 = vmatprep.subr.bf16.mxu0 %v995
    %1269 = vmatpush1.bf16.msra.mxu0 %v994
    %1270 = vmatprep.subr.bf16.mxu0 %v997
    %1271 = vmatpush1.bf16.msra.mxu0 %v996
    %1272 = vmatprep.mubr.bf16.mxu0 %v499
    %1273 = vmatmul.mubr.bf16.gmra.mrb[0].mxu0 %v498
    %v1274 = vpop.f32.mrb[0].mxu0
    %v1275 = vadd.f32 %v1202, %v1274
    %v1276 = vpop.f32.mrb[0].mxu0
    %v1277 = vadd.f32 %v1204, %v1276
    %v1278 = vpop.f32.mrb[0].mxu0
    %v1279 = vadd.f32 %v1206, %v1278
    %v1280 = vpop.f32.mrb[0].mxu0
    %v1281 = vadd.f32 %v1208, %v1280
    %1282 = vmatprep.mubr.bf16.mxu0 %v501
    %1283 = vmatmul.mubr.bf16.gmra.mrb[0].mxu0 %v500
    %v1284 = vpop.f32.mrb[0].mxu0
    %v1285 = vadd.f32 %v1212, %v1284
    %v1286 = vpop.f32.mrb[0].mxu0
    %v1287 = vadd.f32 %v1214, %v1286
    %v1288 = vpop.f32.mrb[0].mxu0
    %v1289 = vadd.f32 %v1216, %v1288
    %v1290 = vpop.f32.mrb[0].mxu0
    %v1291 = vadd.f32 %v1218, %v1290
    %1292 = vmatprep.mubr.bf16.mxu0 %v503
    %1293 = vmatmul.mubr.bf16.gmra.mrb[0].mxu0 %v502
    %v1294 = vpop.f32.mrb[0].mxu0
    %v1295 = vadd.f32 %v1222, %v1294
    %v1296 = vpop.f32.mrb[0].mxu0
    %v1297 = vadd.f32 %v1224, %v1296
    %v1298 = vpop.f32.mrb[0].mxu0
    %v1299 = vadd.f32 %v1226, %v1298
    %v1300 = vpop.f32.mrb[0].mxu0
    %v1301 = vadd.f32 %v1228, %v1300
    %1302 = vmatprep.mubr.bf16.mxu0 %v505
    %1303 = vmatmul.mubr.bf16.gmra.mrb[0].mxu0 %v504
    %v1304 = vpop.f32.mrb[0].mxu0
    %v1305 = vadd.f32 %v1232, %v1304
    %v1306 = vpop.f32.mrb[0].mxu0
    %v1307 = vadd.f32 %v1234, %v1306
    %v1308 = vpop.f32.mrb[0].mxu0
    %v1309 = vadd.f32 %v1236, %v1308
    %v1310 = vpop.f32.mrb[0].mxu0
    %v1311 = vadd.f32 %v1238, %v1310
    %1312 = vdwg.mxu0
    %v1313 = vmax.f32 %v1275, 0.0
    %v1314 = vmax.f32 %v1277, 0.0
    %v1315 = vmax.f32 %v1279, 0.0
    %v1316 = vmax.f32 %v1281, 0.0
    %v1317 = vmax.f32 %v1285, 0.0
    %v1318 = vmax.f32 %v1287, 0.0
    %v1319 = vmax.f32 %v1289, 0.0
    %v1320 = vmax.f32 %v1291, 0.0
    %v1321 = vmax.f32 %v1295, 0.0
    %v1322 = vmax.f32 %v1297, 0.0
    %v1323 = vmax.f32 %v1299, 0.0
    %v1324 = vmax.f32 %v1301, 0.0
    %v1325 = vmax.f32 %v1305, 0.0
    %v1326 = vmax.f32 %v1307, 0.0
    %v1327 = vmax.f32 %v1309, 0.0
    %v1328 = vmax.f32 %v1311, 0.0
    %v1329 = vpack.c.bf16 %v1315, %v1313
    %v1330 = vpack.c.bf16 %v1316, %v1314
    %v1331 = vpack.c.bf16 %v1319, %v1317
    %v1332 = vpack.c.bf16 %v1320, %v1318
    %v1333 = vpack.c.bf16 %v1323, %v1321
    %v1334 = vpack.c.bf16 %v1324, %v1322
    %v1335 = vpack.c.bf16 %v1327, %v1325
    %v1336 = vpack.c.bf16 %v1328, %v1326
    %v1337 = vld [vmem:[%s7] sm:$0xf]
    %v1338 = vld [vmem:[%s7 + $0x4] sm:$0xf]
    %v1339 = vld [vmem:[%s7 + $0x8] sm:$0xf]
    %v1340 = vld [vmem:[%s7 + $0xc] sm:$0xf]
    %v1345 = vunpack.c.l.b16 %v1337
    %v1346 = vunpack.c.l.b16 %v1338
    %v1347 = vunpack.c.l.b16 %v1339
    %v1348 = vunpack.c.l.b16 %v1340
    %v1349 = vpack.c.b16 %v1346, %v1345
    %v1350 = vpack.c.b16 %v1348, %v1347
    %vm1351 = vcmask 506880
    %v1353 = vsel %vm1351, %v1349, 0
    %v1356 = vsel %vm1351, %v1350, 0
    %vm1358 = vcmask 1046528
    %v1360 = vsel %vm1358, %v1335, 0
    %v1363 = vsel %vm1358, %v1336, 0
    %1365 = vmatprep.subr.bf16.mxu0 %v1330
    %1366 = vmatpush1.bf16.msra.mxu0 %v1329
    %1367 = vmatprep.subr.bf16.mxu0 %v1332
    %1368 = vmatpush1.bf16.msra.mxu0 %v1331
    %1369 = vmatprep.subr.bf16.mxu0 %v1334
    %1370 = vmatpush1.bf16.msra.mxu0 %v1333
    %1371 = vmatprep.subr.bf16.mxu0 %v1363
    %1372 = vmatpush1.bf16.msra.mxu0 %v1360
    %1373 = vmatprep.subr.bf16.mxu0 0
    %1374 = vmatpush1.bf16.msra.mxu0 0
    %1375 = vmatprep.subr.bf16.mxu0 0
    %1376 = vmatpush1.bf16.msra.mxu0 0
    %1377 = vmatprep.subr.bf16.mxu0 0
    %1378 = vmatpush1.bf16.msra.mxu0 0
    %1379 = vmatprep.subr.bf16.mxu0 0
    %1380 = vmatpush1.bf16.msra.mxu0 0
    %1381 = vmatprep.subr.bf16.mxu0 0
    %1382 = vmatpush1.bf16.msra.mxu0 0
    %1383 = vmatprep.subr.bf16.mxu0 0
    %1384 = vmatpush1.bf16.msra.mxu0 0
    %1385 = vmatprep.subr.bf16.mxu0 0
    %1386 = vmatpush1.bf16.msra.mxu0 0
    %1387 = vmatprep.subr.bf16.mxu0 0
    %1388 = vmatpush1.bf16.msra.mxu0 0
    %1389 = vmatprep.subr.bf16.mxu0 0
    %1390 = vmatpush1.bf16.msra.mxu0 0
    %1391 = vmatprep.subr.bf16.mxu0 0
    %1392 = vmatpush1.bf16.msra.mxu0 0
    %1393 = vmatprep.subr.bf16.mxu0 0
    %1394 = vmatpush1.bf16.msra.mxu0 0
    %1395 = vmatprep.subr.bf16.mxu0 0
    %1396 = vmatpush1.bf16.msra.mxu0 0
    %1397 = vmatprep.mubr.bf16.mxu0 0
    %1398 = vmatmul.mubr.bf16.gmra.mrb[0].mxu0 %v1353
    %v1399 = vpop.f32.mrb[0].mxu0
    %v1400 = vadd.f32 0.0, %v1399
    %v1401 = vpop.f32.mrb[0].mxu0
    %v1402 = vadd.f32 0.0, %v1401
    %v1403 = vpop.f32.mrb[0].mxu0
    %v1404 = vadd.f32 0.0, %v1403
    %v1405 = vpop.f32.mrb[0].mxu0
    %v1406 = vadd.f32 0.0, %v1405
    %1407 = vmatprep.mubr.bf16.mxu0 0
    %1408 = vmatmul.mubr.bf16.gmra.mrb[0].mxu0 %v1356
    %v1409 = vpop.f32.mrb[0].mxu0
    %v1410 = vadd.f32 0.0, %v1409
    %v1411 = vpop.f32.mrb[0].mxu0
    %v1412 = vadd.f32 0.0, %v1411
    %v1413 = vpop.f32.mrb[0].mxu0
    %v1414 = vadd.f32 0.0, %v1413
    %v1415 = vpop.f32.mrb[0].mxu0
    %v1416 = vadd.f32 0.0, %v1415
    %1417 = vdwg.mxu0
    %v1418 = vpack.c.bf16 %v1404, %v1400
    %v1419 = vpack.c.bf16 %v1406, %v1402
    %v1420 = vpack.c.bf16 %v1414, %v1410
    %v1421 = vpack.c.bf16 %v1416, %v1412
    %s1422 = scalar_lea.vmem %s7, 16
    %v1423 = vld [vmem:[%s1422] sm:$0xf]
    %v1424 = vld [vmem:[%s1422 + $0x4] sm:$0xf]
    %v1425 = vld [vmem:[%s1422 + $0x8] sm:$0xf]
    %v1426 = vld [vmem:[%s1422 + $0xc] sm:$0xf]
    %v1431 = vunpack.c.l.b16 %v1423
    %v1432 = vunpack.c.l.b16 %v1424
    %v1433 = vunpack.c.l.b16 %v1425
    %v1434 = vunpack.c.l.b16 %v1426
    %v1435 = vpack.c.b16 %v1432, %v1431
    %v1436 = vpack.c.b16 %v1434, %v1433
    %v1438 = vsel %vm1351, %v1435, 0
    %v1441 = vsel %vm1351, %v1436, 0
    %1443 = vmatprep.subr.bf16.mxu0 %v1330
    %1444 = vmatpush1.bf16.msra.mxu0 %v1329
    %1445 = vmatprep.subr.bf16.mxu0 %v1332
    %1446 = vmatpush1.bf16.msra.mxu0 %v1331
    %1447 = vmatprep.subr.bf16.mxu0 %v1334
    %1448 = vmatpush1.bf16.msra.mxu0 %v1333
    %1449 = vmatprep.subr.bf16.mxu0 %v1363
    %1450 = vmatpush1.bf16.msra.mxu0 %v1360
    %1451 = vmatprep.subr.bf16.mxu0 0
    %1452 = vmatpush1.bf16.msra.mxu0 0
    %1453 = vmatprep.subr.bf16.mxu0 0
    %1454 = vmatpush1.bf16.msra.mxu0 0
    %1455 = vmatprep.subr.bf16.mxu0 0
    %1456 = vmatpush1.bf16.msra.mxu0 0
    %1457 = vmatprep.subr.bf16.mxu0 0
    %1458 = vmatpush1.bf16.msra.mxu0 0
    %1459 = vmatprep.subr.bf16.mxu0 0
    %1460 = vmatpush1.bf16.msra.mxu0 0
    %1461 = vmatprep.subr.bf16.mxu0 0
    %1462 = vmatpush1.bf16.msra.mxu0 0
    %1463 = vmatprep.subr.bf16.mxu0 0
    %1464 = vmatpush1.bf16.msra.mxu0 0
    %1465 = vmatprep.subr.bf16.mxu0 0
    %1466 = vmatpush1.bf16.msra.mxu0 0
    %1467 = vmatprep.subr.bf16.mxu0 0
    %1468 = vmatpush1.bf16.msra.mxu0 0
    %1469 = vmatprep.subr.bf16.mxu0 0
    %1470 = vmatpush1.bf16.msra.mxu0 0
    %1471 = vmatprep.subr.bf16.mxu0 0
    %1472 = vmatpush1.bf16.msra.mxu0 0
    %1473 = vmatprep.subr.bf16.mxu0 0
    %1474 = vmatpush1.bf16.msra.mxu0 0
    %1475 = vmatprep.mubr.bf16.mxu0 0
    %1476 = vmatmul.mubr.bf16.gmra.mrb[0].mxu0 %v1438
    %v1477 = vpop.f32.mrb[0].mxu0
    %v1478 = vadd.f32 0.0, %v1477
    %v1479 = vpop.f32.mrb[0].mxu0
    %v1480 = vadd.f32 0.0, %v1479
    %v1481 = vpop.f32.mrb[0].mxu0
    %v1482 = vadd.f32 0.0, %v1481
    %v1483 = vpop.f32.mrb[0].mxu0
    %v1484 = vadd.f32 0.0, %v1483
    %1485 = vmatprep.mubr.bf16.mxu0 0
    %1486 = vmatmul.mubr.bf16.gmra.mrb[0].mxu0 %v1441
    %v1487 = vpop.f32.mrb[0].mxu0
    %v1488 = vadd.f32 0.0, %v1487
    %v1489 = vpop.f32.mrb[0].mxu0
    %v1490 = vadd.f32 0.0, %v1489
    %v1491 = vpop.f32.mrb[0].mxu0
    %v1492 = vadd.f32 0.0, %v1491
    %v1493 = vpop.f32.mrb[0].mxu0
    %v1494 = vadd.f32 0.0, %v1493
    %1495 = vdwg.mxu0
    %v1496 = vpack.c.bf16 %v1482, %v1478
    %v1497 = vpack.c.bf16 %v1484, %v1480
    %v1498 = vpack.c.bf16 %v1492, %v1488
    %v1499 = vpack.c.bf16 %v1494, %v1490
    %s1500 = scalar_lea.vmem %s7, 32
    %v1501 = vld [vmem:[%s1500] sm:$0xf]
    %v1502 = vld [vmem:[%s1500 + $0x4] sm:$0xf]
    %v1503 = vld [vmem:[%s1500 + $0x8] sm:$0xf]
    %v1504 = vld [vmem:[%s1500 + $0xc] sm:$0xf]
    %v1509 = vunpack.c.l.b16 %v1501
    %v1510 = vunpack.c.l.b16 %v1502
    %v1511 = vunpack.c.l.b16 %v1503
    %v1512 = vunpack.c.l.b16 %v1504
    %v1513 = vpack.c.b16 %v1510, %v1509
    %v1514 = vpack.c.b16 %v1512, %v1511
    %v1516 = vsel %vm1351, %v1513, 0
    %v1519 = vsel %vm1351, %v1514, 0
    %1521 = vmatprep.subr.bf16.mxu0 %v1330
    %1522 = vmatpush1.bf16.msra.mxu0 %v1329
    %1523 = vmatprep.subr.bf16.mxu0 %v1332
    %1524 = vmatpush1.bf16.msra.mxu0 %v1331
    %1525 = vmatprep.subr.bf16.mxu0 %v1334
    %1526 = vmatpush1.bf16.msra.mxu0 %v1333
    %1527 = vmatprep.subr.bf16.mxu0 %v1363
    %1528 = vmatpush1.bf16.msra.mxu0 %v1360
    %1529 = vmatprep.subr.bf16.mxu0 0
    %1530 = vmatpush1.bf16.msra.mxu0 0
    %1531 = vmatprep.subr.bf16.mxu0 0
    %1532 = vmatpush1.bf16.msra.mxu0 0
    %1533 = vmatprep.subr.bf16.mxu0 0
    %1534 = vmatpush1.bf16.msra.mxu0 0
    %1535 = vmatprep.subr.bf16.mxu0 0
    %1536 = vmatpush1.bf16.msra.mxu0 0
    %1537 = vmatprep.subr.bf16.mxu0 0
    %1538 = vmatpush1.bf16.msra.mxu0 0
    %1539 = vmatprep.subr.bf16.mxu0 0
    %1540 = vmatpush1.bf16.msra.mxu0 0
    %1541 = vmatprep.subr.bf16.mxu0 0
    %1542 = vmatpush1.bf16.msra.mxu0 0
    %1543 = vmatprep.subr.bf16.mxu0 0
    %1544 = vmatpush1.bf16.msra.mxu0 0
    %1545 = vmatprep.subr.bf16.mxu0 0
    %1546 = vmatpush1.bf16.msra.mxu0 0
    %1547 = vmatprep.subr.bf16.mxu0 0
    %1548 = vmatpush1.bf16.msra.mxu0 0
    %1549 = vmatprep.subr.bf16.mxu0 0
    %1550 = vmatpush1.bf16.msra.mxu0 0
    %1551 = vmatprep.subr.bf16.mxu0 0
    %1552 = vmatpush1.bf16.msra.mxu0 0
    %1553 = vmatprep.mubr.bf16.mxu0 0
    %1554 = vmatmul.mubr.bf16.gmra.mrb[0].mxu0 %v1516
    %v1555 = vpop.f32.mrb[0].mxu0
    %v1556 = vadd.f32 0.0, %v1555
    %v1557 = vpop.f32.mrb[0].mxu0
    %v1558 = vadd.f32 0.0, %v1557
    %v1559 = vpop.f32.mrb[0].mxu0
    %v1560 = vadd.f32 0.0, %v1559
    %v1561 = vpop.f32.mrb[0].mxu0
    %v1562 = vadd.f32 0.0, %v1561
    %1563 = vmatprep.mubr.bf16.mxu0 0
    %1564 = vmatmul.mubr.bf16.gmra.mrb[0].mxu0 %v1519
    %v1565 = vpop.f32.mrb[0].mxu0
    %v1566 = vadd.f32 0.0, %v1565
    %v1567 = vpop.f32.mrb[0].mxu0
    %v1568 = vadd.f32 0.0, %v1567
    %v1569 = vpop.f32.mrb[0].mxu0
    %v1570 = vadd.f32 0.0, %v1569
    %v1571 = vpop.f32.mrb[0].mxu0
    %v1572 = vadd.f32 0.0, %v1571
    %1573 = vdwg.mxu0
    %v1574 = vpack.c.bf16 %v1560, %v1556
    %v1575 = vpack.c.bf16 %v1562, %v1558
    %v1576 = vpack.c.bf16 %v1570, %v1566
    %v1577 = vpack.c.bf16 %v1572, %v1568
    %v1578 = vld [vmem:[%s2] sm:$0xff]
    %v1579 = vld [vmem:[%s2 + $0x8] sm:$0xff]
    %v1580 = vld [vmem:[%s2 + $0x10] sm:$0xff]
    %v1581 = vld [vmem:[%s2 + $0x18] sm:$0xff]
    %v1582 = vld [vmem:[%s2 + $0x20] sm:$0xff]
    %v1583 = vld [vmem:[%s2 + $0x28] sm:$0xff]
    %v1584 = vld [vmem:[%s2 + $0x30] sm:$0xff]
    %v1585 = vld [vmem:[%s2 + $0x38] sm:$0xff]
    %v1586 = vld [vmem:[%s2 + $0x40] sm:$0xff]
    %v1587 = vld [vmem:[%s2 + $0x48] sm:$0xff]
    %v1588 = vld [vmem:[%s2 + $0x50] sm:$0xff]
    %v1589 = vld [vmem:[%s2 + $0x58] sm:$0xff]
    %v1590 = vld [vmem:[%s2 + $0x60] sm:$0xff]
    %v1591 = vld [vmem:[%s2 + $0x68] sm:$0xff]
    %v1592 = vld [vmem:[%s2 + $0x70] sm:$0xff]
    %v1593 = vld [vmem:[%s2 + $0x78] sm:$0xff]
    %v1594 = vld [vmem:[%s2 + $0x80] sm:$0xff]
    %v1595 = vld [vmem:[%s2 + $0x88] sm:$0xff]
    %v1596 = vld [vmem:[%s2 + $0x90] sm:$0xff]
    %v1597 = vld [vmem:[%s2 + $0x98] sm:$0xff]
    %v1598 = vld [vmem:[%s2 + $0xa0] sm:$0xff]
    %v1599 = vld [vmem:[%s2 + $0xa8] sm:$0xff]
    %v1600 = vld [vmem:[%s2 + $0xb0] sm:$0xff]
    %v1601 = vld [vmem:[%s2 + $0xb8] sm:$0xff]
    %v1602 = vld [vmem:[%s2 + $0xc0] sm:$0xff]
    %v1603 = vld [vmem:[%s2 + $0xc8] sm:$0xff]
    %v1604 = vld [vmem:[%s2 + $0xd0] sm:$0xff]
    %v1605 = vld [vmem:[%s2 + $0xd8] sm:$0xff]
    %v1606 = vld [vmem:[%s2 + $0xe0] sm:$0xff]
    %v1607 = vld [vmem:[%s2 + $0xe8] sm:$0xff]
    %v1608 = vld [vmem:[%s2 + $0xf0] sm:$0xff]
    %v1609 = vld [vmem:[%s2 + $0xf8] sm:$0xff]
    %v1610 = vld [vmem:[%s2 + $0x100] sm:$0xff]
    %v1611 = vld [vmem:[%s2 + $0x108] sm:$0xff]
    %v1612 = vld [vmem:[%s2 + $0x110] sm:$0xff]
    %v1613 = vld [vmem:[%s2 + $0x118] sm:$0xff]
    %v1614 = vld [vmem:[%s2 + $0x120] sm:$0xff]
    %v1615 = vld [vmem:[%s2 + $0x128] sm:$0xff]
    %v1616 = vld [vmem:[%s2 + $0x130] sm:$0xff]
    %v1617 = vld [vmem:[%s2 + $0x138] sm:$0xff]
    %v1618 = vld [vmem:[%s2 + $0x140] sm:$0xff]
    %v1619 = vld [vmem:[%s2 + $0x148] sm:$0xff]
    %v1620 = vld [vmem:[%s2 + $0x150] sm:$0xff]
    %v1621 = vld [vmem:[%s2 + $0x158] sm:$0xff]
    %v1622 = vld [vmem:[%s2 + $0x160] sm:$0xff]
    %v1623 = vld [vmem:[%s2 + $0x168] sm:$0xff]
    %v1624 = vld [vmem:[%s2 + $0x170] sm:$0xff]
    %v1625 = vld [vmem:[%s2 + $0x178] sm:$0xff]
    %v1626 = vld [vmem:[%s2 + $0x180] sm:$0xff]
    %v1627 = vld [vmem:[%s2 + $0x188] sm:$0xff]
    %v1628 = vld [vmem:[%s2 + $0x190] sm:$0xff]
    %v1629 = vld [vmem:[%s2 + $0x198] sm:$0xff]
    %v1630 = vld [vmem:[%s2 + $0x1a0] sm:$0xff]
    %v1631 = vld [vmem:[%s2 + $0x1a8] sm:$0xff]
    %v1632 = vld [vmem:[%s2 + $0x1b0] sm:$0xff]
    %v1633 = vld [vmem:[%s2 + $0x1b8] sm:$0xff]
    %v1634 = vld [vmem:[%s2 + $0x1c0] sm:$0xff]
    %v1635 = vld [vmem:[%s2 + $0x1c8] sm:$0xff]
    %v1636 = vld [vmem:[%s2 + $0x1d0] sm:$0xff]
    %v1637 = vld [vmem:[%s2 + $0x1d8] sm:$0xff]
    %v1638 = vld [vmem:[%s2 + $0x1e0] sm:$0xff]
    %v1639 = vld [vmem:[%s2 + $0x1e8] sm:$0xff]
    %v1640 = vld [vmem:[%s2 + $0x1f0] sm:$0xff]
    %v1641 = vld [vmem:[%s2 + $0x1f8] sm:$0xff]
    %v1642 = vld [vmem:[%s2 + $0x200] sm:$0xff]
    %v1643 = vld [vmem:[%s2 + $0x208] sm:$0xff]
    %v1644 = vld [vmem:[%s2 + $0x210] sm:$0xff]
    %v1645 = vld [vmem:[%s2 + $0x218] sm:$0xff]
    %v1646 = vld [vmem:[%s2 + $0x220] sm:$0xff]
    %v1647 = vld [vmem:[%s2 + $0x228] sm:$0xff]
    %v1648 = vld [vmem:[%s2 + $0x230] sm:$0xff]
    %v1649 = vld [vmem:[%s2 + $0x238] sm:$0xff]
    %v1650 = vld [vmem:[%s2 + $0x240] sm:$0xff]
    %v1651 = vld [vmem:[%s2 + $0x248] sm:$0xff]
    %v1652 = vld [vmem:[%s2 + $0x250] sm:$0xff]
    %v1653 = vld [vmem:[%s2 + $0x258] sm:$0xff]
    %v1654 = vld [vmem:[%s2 + $0x260] sm:$0xff]
    %v1655 = vld [vmem:[%s2 + $0x268] sm:$0xff]
    %v1656 = vld [vmem:[%s2 + $0x270] sm:$0xff]
    %v1657 = vld [vmem:[%s2 + $0x278] sm:$0xff]
    %v1658 = vld [vmem:[%s2 + $0x280] sm:$0xff]
    %v1659 = vld [vmem:[%s2 + $0x288] sm:$0xff]
    %v1660 = vld [vmem:[%s2 + $0x290] sm:$0xff]
    %v1661 = vld [vmem:[%s2 + $0x298] sm:$0xff]
    %v1662 = vld [vmem:[%s2 + $0x2a0] sm:$0xff]
    %v1663 = vld [vmem:[%s2 + $0x2a8] sm:$0xff]
    %v1664 = vld [vmem:[%s2 + $0x2b0] sm:$0xff]
    %v1665 = vld [vmem:[%s2 + $0x2b8] sm:$0xff]
    %v1666 = vld [vmem:[%s2 + $0x2c0] sm:$0xff]
    %v1667 = vld [vmem:[%s2 + $0x2c8] sm:$0xff]
    %v1668 = vld [vmem:[%s2 + $0x2d0] sm:$0xff]
    %v1669 = vld [vmem:[%s2 + $0x2d8] sm:$0xff]
    %v1670 = vld [vmem:[%s2 + $0x2e0] sm:$0xff]
    %v1671 = vld [vmem:[%s2 + $0x2e8] sm:$0xff]
    %v1672 = vld [vmem:[%s2 + $0x2f0] sm:$0xff]
    %v1673 = vld [vmem:[%s2 + $0x2f8] sm:$0xff]
    %v1674 = vld [vmem:[%s12] sm:$0x3]
    %v1676 = vlaneseq
    %v1677 = vshrl.u32 %v1676, 7
    %v1678 = vsub.s32 0, %v1677
    %v1679 = vrot.slane %v1674, %v1678
    %v1680 = vlaneseq
    %v1681 = vshrl.u32 %v1680, 7
    %v1682 = vsub.s32 1, %v1681
    %v1683 = vrot.slane %v1674, %v1682
    %v1782 = vunpack.c.l.b16 %v1578
    %v1783 = vunpack.c.h.b16 %v1578
    %v1784 = vunpack.c.l.b16 %v1579
    %v1785 = vunpack.c.h.b16 %v1579
    %v1786 = vunpack.c.l.b16 %v1580
    %v1787 = vunpack.c.h.b16 %v1580
    %v1788 = vunpack.c.l.b16 %v1581
    %v1789 = vunpack.c.h.b16 %v1581
    %v1790 = vunpack.c.l.b16 %v1582
    %v1791 = vunpack.c.h.b16 %v1582
    %v1792 = vunpack.c.l.b16 %v1583
    %v1793 = vunpack.c.h.b16 %v1583
    %v1794 = vunpack.c.l.b16 %v1584
    %v1795 = vunpack.c.h.b16 %v1584
    %v1796 = vunpack.c.l.b16 %v1585
    %v1797 = vunpack.c.h.b16 %v1585
    %v1798 = vunpack.c.l.b16 %v1586
    %v1799 = vunpack.c.h.b16 %v1586
    %v1800 = vunpack.c.l.b16 %v1587
    %v1801 = vunpack.c.h.b16 %v1587
    %v1802 = vunpack.c.l.b16 %v1588
    %v1803 = vunpack.c.h.b16 %v1588
    %v1804 = vunpack.c.l.b16 %v1589
    %v1805 = vunpack.c.h.b16 %v1589
    %v1806 = vunpack.c.l.b16 %v1590
    %v1807 = vunpack.c.h.b16 %v1590
    %v1808 = vunpack.c.l.b16 %v1591
    %v1809 = vunpack.c.h.b16 %v1591
    %v1810 = vunpack.c.l.b16 %v1592
    %v1811 = vunpack.c.h.b16 %v1592
    %v1812 = vunpack.c.l.b16 %v1593
    %v1813 = vunpack.c.h.b16 %v1593
    %v1814 = vunpack.c.l.b16 %v1594
    %v1815 = vunpack.c.h.b16 %v1594
    %v1816 = vunpack.c.l.b16 %v1595
    %v1817 = vunpack.c.h.b16 %v1595
    %v1818 = vunpack.c.l.b16 %v1596
    %v1819 = vunpack.c.h.b16 %v1596
    %v1820 = vunpack.c.l.b16 %v1597
    %v1821 = vunpack.c.h.b16 %v1597
    %v1822 = vunpack.c.l.b16 %v1598
    %v1823 = vunpack.c.h.b16 %v1598
    %v1824 = vunpack.c.l.b16 %v1599
    %v1825 = vunpack.c.h.b16 %v1599
    %v1826 = vunpack.c.l.b16 %v1600
    %v1827 = vunpack.c.h.b16 %v1600
    %v1828 = vunpack.c.l.b16 %v1601
    %v1829 = vunpack.c.h.b16 %v1601
    %v1830 = vunpack.c.l.b16 %v1602
    %v1831 = vunpack.c.h.b16 %v1602
    %v1832 = vunpack.c.l.b16 %v1603
    %v1833 = vunpack.c.h.b16 %v1603
    %v1834 = vunpack.c.l.b16 %v1604
    %v1835 = vunpack.c.h.b16 %v1604
    %v1836 = vunpack.c.l.b16 %v1605
    %v1837 = vunpack.c.h.b16 %v1605
    %v1838 = vunpack.c.l.b16 %v1606
    %v1839 = vunpack.c.h.b16 %v1606
    %v1840 = vunpack.c.l.b16 %v1607
    %v1841 = vunpack.c.h.b16 %v1607
    %v1842 = vunpack.c.l.b16 %v1608
    %v1843 = vunpack.c.h.b16 %v1608
    %v1844 = vunpack.c.l.b16 %v1609
    %v1845 = vunpack.c.h.b16 %v1609
    %v1846 = vunpack.c.l.b16 %v1610
    %v1847 = vunpack.c.h.b16 %v1610
    %v1848 = vunpack.c.l.b16 %v1611
    %v1849 = vunpack.c.h.b16 %v1611
    %v1850 = vunpack.c.l.b16 %v1612
    %v1851 = vunpack.c.h.b16 %v1612
    %v1852 = vunpack.c.l.b16 %v1613
    %v1853 = vunpack.c.h.b16 %v1613
    %v1854 = vunpack.c.l.b16 %v1614
    %v1855 = vunpack.c.h.b16 %v1614
    %v1856 = vunpack.c.l.b16 %v1615
    %v1857 = vunpack.c.h.b16 %v1615
    %v1858 = vunpack.c.l.b16 %v1616
    %v1859 = vunpack.c.h.b16 %v1616
    %v1860 = vunpack.c.l.b16 %v1617
    %v1861 = vunpack.c.h.b16 %v1617
    %v1862 = vunpack.c.l.b16 %v1618
    %v1863 = vunpack.c.h.b16 %v1618
    %v1864 = vunpack.c.l.b16 %v1619
    %v1865 = vunpack.c.h.b16 %v1619
    %v1866 = vunpack.c.l.b16 %v1620
    %v1867 = vunpack.c.h.b16 %v1620
    %v1868 = vunpack.c.l.b16 %v1621
    %v1869 = vunpack.c.h.b16 %v1621
    %v1870 = vunpack.c.l.b16 %v1622
    %v1871 = vunpack.c.h.b16 %v1622
    %v1872 = vunpack.c.l.b16 %v1623
    %v1873 = vunpack.c.h.b16 %v1623
    %v1874 = vunpack.c.l.b16 %v1624
    %v1875 = vunpack.c.h.b16 %v1624
    %v1876 = vunpack.c.l.b16 %v1625
    %v1877 = vunpack.c.h.b16 %v1625
    %v1878 = vunpack.c.l.b16 %v1626
    %v1879 = vunpack.c.h.b16 %v1626
    %v1880 = vunpack.c.l.b16 %v1627
    %v1881 = vunpack.c.h.b16 %v1627
    %v1882 = vunpack.c.l.b16 %v1628
    %v1883 = vunpack.c.h.b16 %v1628
    %v1884 = vunpack.c.l.b16 %v1629
    %v1885 = vunpack.c.h.b16 %v1629
    %v1886 = vunpack.c.l.b16 %v1630
    %v1887 = vunpack.c.h.b16 %v1630
    %v1888 = vunpack.c.l.b16 %v1631
    %v1889 = vunpack.c.h.b16 %v1631
    %v1890 = vunpack.c.l.b16 %v1632
    %v1891 = vunpack.c.h.b16 %v1632
    %v1892 = vunpack.c.l.b16 %v1633
    %v1893 = vunpack.c.h.b16 %v1633
    %v1894 = vunpack.c.l.b16 %v1634
    %v1895 = vunpack.c.h.b16 %v1634
    %v1896 = vunpack.c.l.b16 %v1635
    %v1897 = vunpack.c.h.b16 %v1635
    %v1898 = vunpack.c.l.b16 %v1636
    %v1899 = vunpack.c.h.b16 %v1636
    %v1900 = vunpack.c.l.b16 %v1637
    %v1901 = vunpack.c.h.b16 %v1637
    %v1902 = vunpack.c.l.b16 %v1638
    %v1903 = vunpack.c.h.b16 %v1638
    %v1904 = vunpack.c.l.b16 %v1639
    %v1905 = vunpack.c.h.b16 %v1639
    %v1906 = vunpack.c.l.b16 %v1640
    %v1907 = vunpack.c.h.b16 %v1640
    %v1908 = vunpack.c.l.b16 %v1641
    %v1909 = vunpack.c.h.b16 %v1641
    %v1910 = vunpack.c.l.b16 %v1642
    %v1911 = vunpack.c.h.b16 %v1642
    %v1912 = vunpack.c.l.b16 %v1643
    %v1913 = vunpack.c.h.b16 %v1643
    %v1914 = vunpack.c.l.b16 %v1644
    %v1915 = vunpack.c.h.b16 %v1644
    %v1916 = vunpack.c.l.b16 %v1645
    %v1917 = vunpack.c.h.b16 %v1645
    %v1918 = vunpack.c.l.b16 %v1646
    %v1919 = vunpack.c.h.b16 %v1646
    %v1920 = vunpack.c.l.b16 %v1647
    %v1921 = vunpack.c.h.b16 %v1647
    %v1922 = vunpack.c.l.b16 %v1648
    %v1923 = vunpack.c.h.b16 %v1648
    %v1924 = vunpack.c.l.b16 %v1649
    %v1925 = vunpack.c.h.b16 %v1649
    %v1926 = vunpack.c.l.b16 %v1650
    %v1927 = vunpack.c.h.b16 %v1650
    %v1928 = vunpack.c.l.b16 %v1651
    %v1929 = vunpack.c.h.b16 %v1651
    %v1930 = vunpack.c.l.b16 %v1652
    %v1931 = vunpack.c.h.b16 %v1652
    %v1932 = vunpack.c.l.b16 %v1653
    %v1933 = vunpack.c.h.b16 %v1653
    %v1934 = vunpack.c.l.b16 %v1654
    %v1935 = vunpack.c.h.b16 %v1654
    %v1936 = vunpack.c.l.b16 %v1655
    %v1937 = vunpack.c.h.b16 %v1655
    %v1938 = vunpack.c.l.b16 %v1656
    %v1939 = vunpack.c.h.b16 %v1656
    %v1940 = vunpack.c.l.b16 %v1657
    %v1941 = vunpack.c.h.b16 %v1657
    %v1942 = vunpack.c.l.b16 %v1658
    %v1943 = vunpack.c.h.b16 %v1658
    %v1944 = vunpack.c.l.b16 %v1659
    %v1945 = vunpack.c.h.b16 %v1659
    %v1946 = vunpack.c.l.b16 %v1660
    %v1947 = vunpack.c.h.b16 %v1660
    %v1948 = vunpack.c.l.b16 %v1661
    %v1949 = vunpack.c.h.b16 %v1661
    %v1950 = vunpack.c.l.b16 %v1662
    %v1951 = vunpack.c.h.b16 %v1662
    %v1952 = vunpack.c.l.b16 %v1663
    %v1953 = vunpack.c.h.b16 %v1663
    %v1954 = vunpack.c.l.b16 %v1664
    %v1955 = vunpack.c.h.b16 %v1664
    %v1956 = vunpack.c.l.b16 %v1665
    %v1957 = vunpack.c.h.b16 %v1665
    %v1958 = vunpack.c.l.b16 %v1666
    %v1959 = vunpack.c.h.b16 %v1666
    %v1960 = vunpack.c.l.b16 %v1667
    %v1961 = vunpack.c.h.b16 %v1667
    %v1962 = vunpack.c.l.b16 %v1668
    %v1963 = vunpack.c.h.b16 %v1668
    %v1964 = vunpack.c.l.b16 %v1669
    %v1965 = vunpack.c.h.b16 %v1669
    %v1966 = vunpack.c.l.b16 %v1670
    %v1967 = vunpack.c.h.b16 %v1670
    %v1968 = vunpack.c.l.b16 %v1671
    %v1969 = vunpack.c.h.b16 %v1671
    %v1970 = vunpack.c.l.b16 %v1672
    %v1971 = vunpack.c.h.b16 %v1672
    %v1972 = vunpack.c.l.b16 %v1673
    %v1973 = vunpack.c.h.b16 %v1673
    %v1974 = vpack.c.b16 %v1784, %v1782
    %v1975 = vpack.c.b16 %v1785, %v1783
    %v1976 = vpack.c.b16 %v1788, %v1786
    %v1977 = vpack.c.b16 %v1789, %v1787
    %v1978 = vpack.c.b16 %v1792, %v1790
    %v1979 = vpack.c.b16 %v1793, %v1791
    %v1980 = vpack.c.b16 %v1796, %v1794
    %v1981 = vpack.c.b16 %v1797, %v1795
    %v1982 = vpack.c.b16 %v1800, %v1798
    %v1983 = vpack.c.b16 %v1801, %v1799
    %v1984 = vpack.c.b16 %v1804, %v1802
    %v1985 = vpack.c.b16 %v1805, %v1803
    %v1986 = vpack.c.b16 %v1808, %v1806
    %v1987 = vpack.c.b16 %v1809, %v1807
    %v1988 = vpack.c.b16 %v1812, %v1810
    %v1989 = vpack.c.b16 %v1813, %v1811
    %v1990 = vpack.c.b16 %v1816, %v1814
    %v1991 = vpack.c.b16 %v1817, %v1815
    %v1992 = vpack.c.b16 %v1820, %v1818
    %v1993 = vpack.c.b16 %v1821, %v1819
    %v1994 = vpack.c.b16 %v1824, %v1822
    %v1995 = vpack.c.b16 %v1825, %v1823
    %v1996 = vpack.c.b16 %v1828, %v1826
    %v1997 = vpack.c.b16 %v1829, %v1827
    %v1998 = vpack.c.b16 %v1832, %v1830
    %v1999 = vpack.c.b16 %v1833, %v1831
    %v2000 = vpack.c.b16 %v1836, %v1834
    %v2001 = vpack.c.b16 %v1837, %v1835
    %v2002 = vpack.c.b16 %v1840, %v1838
    %v2003 = vpack.c.b16 %v1841, %v1839
    %v2004 = vpack.c.b16 %v1844, %v1842
    %v2005 = vpack.c.b16 %v1845, %v1843
    %v2006 = vpack.c.b16 %v1848, %v1846
    %v2007 = vpack.c.b16 %v1849, %v1847
    %v2008 = vpack.c.b16 %v1852, %v1850
    %v2009 = vpack.c.b16 %v1853, %v1851
    %v2010 = vpack.c.b16 %v1856, %v1854
    %v2011 = vpack.c.b16 %v1857, %v1855
    %v2012 = vpack.c.b16 %v1860, %v1858
    %v2013 = vpack.c.b16 %v1861, %v1859
    %v2014 = vpack.c.b16 %v1864, %v1862
    %v2015 = vpack.c.b16 %v1865, %v1863
    %v2016 = vpack.c.b16 %v1868, %v1866
    %v2017 = vpack.c.b16 %v1869, %v1867
    %v2018 = vpack.c.b16 %v1872, %v1870
    %v2019 = vpack.c.b16 %v1873, %v1871
    %v2020 = vpack.c.b16 %v1876, %v1874
    %v2021 = vpack.c.b16 %v1877, %v1875
    %v2022 = vpack.c.b16 %v1880, %v1878
    %v2023 = vpack.c.b16 %v1881, %v1879
    %v2024 = vpack.c.b16 %v1884, %v1882
    %v2025 = vpack.c.b16 %v1885, %v1883
    %v2026 = vpack.c.b16 %v1888, %v1886
    %v2027 = vpack.c.b16 %v1889, %v1887
    %v2028 = vpack.c.b16 %v1892, %v1890
    %v2029 = vpack.c.b16 %v1893, %v1891
    %v2030 = vpack.c.b16 %v1896, %v1894
    %v2031 = vpack.c.b16 %v1897, %v1895
    %v2032 = vpack.c.b16 %v1900, %v1898
    %v2033 = vpack.c.b16 %v1901, %v1899
    %v2034 = vpack.c.b16 %v1904, %v1902
    %v2035 = vpack.c.b16 %v1905, %v1903
    %v2036 = vpack.c.b16 %v1908, %v1906
    %v2037 = vpack.c.b16 %v1909, %v1907
    %v2038 = vpack.c.b16 %v1912, %v1910
    %v2039 = vpack.c.b16 %v1913, %v1911
    %v2040 = vpack.c.b16 %v1916, %v1914
    %v2041 = vpack.c.b16 %v1917, %v1915
    %v2042 = vpack.c.b16 %v1920, %v1918
    %v2043 = vpack.c.b16 %v1921, %v1919
    %v2044 = vpack.c.b16 %v1924, %v1922
    %v2045 = vpack.c.b16 %v1925, %v1923
    %v2046 = vpack.c.b16 %v1928, %v1926
    %v2047 = vpack.c.b16 %v1929, %v1927
    %v2048 = vpack.c.b16 %v1932, %v1930
    %v2049 = vpack.c.b16 %v1933, %v1931
    %v2050 = vpack.c.b16 %v1936, %v1934
    %v2051 = vpack.c.b16 %v1937, %v1935
    %v2052 = vpack.c.b16 %v1940, %v1938
    %v2053 = vpack.c.b16 %v1941, %v1939
    %v2054 = vpack.c.b16 %v1944, %v1942
    %v2055 = vpack.c.b16 %v1945, %v1943
    %v2056 = vpack.c.b16 %v1948, %v1946
    %v2057 = vpack.c.b16 %v1949, %v1947
    %v2058 = vpack.c.b16 %v1952, %v1950
    %v2059 = vpack.c.b16 %v1953, %v1951
    %v2060 = vpack.c.b16 %v1956, %v1954
    %v2061 = vpack.c.b16 %v1957, %v1955
    %v2062 = vpack.c.b16 %v1960, %v1958
    %v2063 = vpack.c.b16 %v1961, %v1959
    %v2064 = vpack.c.b16 %v1964, %v1962
    %v2065 = vpack.c.b16 %v1965, %v1963
    %v2066 = vpack.c.b16 %v1968, %v1966
    %v2067 = vpack.c.b16 %v1969, %v1967
    %v2068 = vpack.c.b16 %v1972, %v1970
    %v2069 = vpack.c.b16 %v1973, %v1971
    %2166 = vmatprep.subr.bf16.mxu0 %v1975
    %2167 = vmatpush1.bf16.msra.mxu0 %v1974
    %2168 = vmatprep.subr.bf16.mxu0 %v1977
    %2169 = vmatpush1.bf16.msra.mxu0 %v1976
    %2170 = vmatprep.subr.bf16.mxu0 %v1979
    %2171 = vmatpush1.bf16.msra.mxu0 %v1978
    %2172 = vmatprep.subr.bf16.mxu0 %v1981
    %2173 = vmatpush1.bf16.msra.mxu0 %v1980
    %2174 = vmatprep.subr.bf16.mxu0 %v1983
    %2175 = vmatpush1.bf16.msra.mxu0 %v1982
    %2176 = vmatprep.subr.bf16.mxu0 %v1985
    %2177 = vmatpush1.bf16.msra.mxu0 %v1984
    %2178 = vmatprep.subr.bf16.mxu0 %v1987
    %2179 = vmatpush1.bf16.msra.mxu0 %v1986
    %2180 = vmatprep.subr.bf16.mxu0 %v1989
    %2181 = vmatpush1.bf16.msra.mxu0 %v1988
    %2182 = vmatprep.subr.bf16.mxu0 %v1991
    %2183 = vmatpush1.bf16.msra.mxu0 %v1990
    %2184 = vmatprep.subr.bf16.mxu0 %v1993
    %2185 = vmatpush1.bf16.msra.mxu0 %v1992
    %2186 = vmatprep.subr.bf16.mxu0 %v1995
    %2187 = vmatpush1.bf16.msra.mxu0 %v1994
    %2188 = vmatprep.subr.bf16.mxu0 %v1997
    %2189 = vmatpush1.bf16.msra.mxu0 %v1996
    %2190 = vmatprep.subr.bf16.mxu0 %v1999
    %2191 = vmatpush1.bf16.msra.mxu0 %v1998
    %2192 = vmatprep.subr.bf16.mxu0 %v2001
    %2193 = vmatpush1.bf16.msra.mxu0 %v2000
    %2194 = vmatprep.subr.bf16.mxu0 %v2003
    %2195 = vmatpush1.bf16.msra.mxu0 %v2002
    %2196 = vmatprep.subr.bf16.mxu0 %v2005
    %2197 = vmatpush1.bf16.msra.mxu0 %v2004
    %2198 = vmatprep.mubr.bf16.mxu0 %v1419
    %2199 = vmatmul.mubr.bf16.gmra.mrb[0].mxu0 %v1418
    %v2200 = vpop.f32.mrb[0].mxu0
    %v2201 = vadd.f32 %v1679, %v2200
    %v2202 = vpop.f32.mrb[0].mxu0
    %v2203 = vadd.f32 %v1683, %v2202
    %v2204 = vpop.f32.mrb[0].mxu0
    %v2205 = vadd.f32 %v1679, %v2204
    %v2206 = vpop.f32.mrb[0].mxu0
    %v2207 = vadd.f32 %v1683, %v2206
    %2208 = vmatprep.mubr.bf16.mxu0 %v1421
    %2209 = vmatmul.mubr.bf16.gmra.mrb[0].mxu0 %v1420
    %v2210 = vpop.f32.mrb[0].mxu0
    %v2211 = vadd.f32 %v1679, %v2210
    %v2212 = vpop.f32.mrb[0].mxu0
    %v2213 = vadd.f32 %v1683, %v2212
    %v2214 = vpop.f32.mrb[0].mxu0
    %v2215 = vadd.f32 %v1679, %v2214
    %v2216 = vpop.f32.mrb[0].mxu0
    %v2217 = vadd.f32 %v1683, %v2216
    %2218 = vdwg.mxu0
    %2219 = vmatprep.subr.bf16.mxu0 %v2007
    %2220 = vmatpush1.bf16.msra.mxu0 %v2006
    %2221 = vmatprep.subr.bf16.mxu0 %v2009
    %2222 = vmatpush1.bf16.msra.mxu0 %v2008
    %2223 = vmatprep.subr.bf16.mxu0 %v2011
    %2224 = vmatpush1.bf16.msra.mxu0 %v2010
    %2225 = vmatprep.subr.bf16.mxu0 %v2013
    %2226 = vmatpush1.bf16.msra.mxu0 %v2012
    %2227 = vmatprep.subr.bf16.mxu0 %v2015
    %2228 = vmatpush1.bf16.msra.mxu0 %v2014
    %2229 = vmatprep.subr.bf16.mxu0 %v2017
    %2230 = vmatpush1.bf16.msra.mxu0 %v2016
    %2231 = vmatprep.subr.bf16.mxu0 %v2019
    %2232 = vmatpush1.bf16.msra.mxu0 %v2018
    %2233 = vmatprep.subr.bf16.mxu0 %v2021
    %2234 = vmatpush1.bf16.msra.mxu0 %v2020
    %2235 = vmatprep.subr.bf16.mxu0 %v2023
    %2236 = vmatpush1.bf16.msra.mxu0 %v2022
    %2237 = vmatprep.subr.bf16.mxu0 %v2025
    %2238 = vmatpush1.bf16.msra.mxu0 %v2024
    %2239 = vmatprep.subr.bf16.mxu0 %v2027
    %2240 = vmatpush1.bf16.msra.mxu0 %v2026
    %2241 = vmatprep.subr.bf16.mxu0 %v2029
    %2242 = vmatpush1.bf16.msra.mxu0 %v2028
    %2243 = vmatprep.subr.bf16.mxu0 %v2031
    %2244 = vmatpush1.bf16.msra.mxu0 %v2030
    %2245 = vmatprep.subr.bf16.mxu0 %v2033
    %2246 = vmatpush1.bf16.msra.mxu0 %v2032
    %2247 = vmatprep.subr.bf16.mxu0 %v2035
    %2248 = vmatpush1.bf16.msra.mxu0 %v2034
    %2249 = vmatprep.subr.bf16.mxu0 %v2037
    %2250 = vmatpush1.bf16.msra.mxu0 %v2036
    %2251 = vmatprep.mubr.bf16.mxu0 %v1497
    %2252 = vmatmul.mubr.bf16.gmra.mrb[0].mxu0 %v1496
    %v2253 = vpop.f32.mrb[0].mxu0
    %v2254 = vadd.f32 %v2201, %v2253
    %v2255 = vpop.f32.mrb[0].mxu0
    %v2256 = vadd.f32 %v2203, %v2255
    %v2257 = vpop.f32.mrb[0].mxu0
    %v2258 = vadd.f32 %v2205, %v2257
    %v2259 = vpop.f32.mrb[0].mxu0
    %v2260 = vadd.f32 %v2207, %v2259
    %2261 = vmatprep.mubr.bf16.mxu0 %v1499
    %2262 = vmatmul.mubr.bf16.gmra.mrb[0].mxu0 %v1498
    %v2263 = vpop.f32.mrb[0].mxu0
    %v2264 = vadd.f32 %v2211, %v2263
    %v2265 = vpop.f32.mrb[0].mxu0
    %v2266 = vadd.f32 %v2213, %v2265
    %v2267 = vpop.f32.mrb[0].mxu0
    %v2268 = vadd.f32 %v2215, %v2267
    %v2269 = vpop.f32.mrb[0].mxu0
    %v2270 = vadd.f32 %v2217, %v2269
    %2271 = vdwg.mxu0
    %2272 = vmatprep.subr.bf16.mxu0 %v2039
    %2273 = vmatpush1.bf16.msra.mxu0 %v2038
    %2274 = vmatprep.subr.bf16.mxu0 %v2041
    %2275 = vmatpush1.bf16.msra.mxu0 %v2040
    %2276 = vmatprep.subr.bf16.mxu0 %v2043
    %2277 = vmatpush1.bf16.msra.mxu0 %v2042
    %2278 = vmatprep.subr.bf16.mxu0 %v2045
    %2279 = vmatpush1.bf16.msra.mxu0 %v2044
    %2280 = vmatprep.subr.bf16.mxu0 %v2047
    %2281 = vmatpush1.bf16.msra.mxu0 %v2046
    %2282 = vmatprep.subr.bf16.mxu0 %v2049
    %2283 = vmatpush1.bf16.msra.mxu0 %v2048
    %2284 = vmatprep.subr.bf16.mxu0 %v2051
    %2285 = vmatpush1.bf16.msra.mxu0 %v2050
    %2286 = vmatprep.subr.bf16.mxu0 %v2053
    %2287 = vmatpush1.bf16.msra.mxu0 %v2052
    %2288 = vmatprep.subr.bf16.mxu0 %v2055
    %2289 = vmatpush1.bf16.msra.mxu0 %v2054
    %2290 = vmatprep.subr.bf16.mxu0 %v2057
    %2291 = vmatpush1.bf16.msra.mxu0 %v2056
    %2292 = vmatprep.subr.bf16.mxu0 %v2059
    %2293 = vmatpush1.bf16.msra.mxu0 %v2058
    %2294 = vmatprep.subr.bf16.mxu0 %v2061
    %2295 = vmatpush1.bf16.msra.mxu0 %v2060
    %2296 = vmatprep.subr.bf16.mxu0 %v2063
    %2297 = vmatpush1.bf16.msra.mxu0 %v2062
    %2298 = vmatprep.subr.bf16.mxu0 %v2065
    %2299 = vmatpush1.bf16.msra.mxu0 %v2064
    %2300 = vmatprep.subr.bf16.mxu0 %v2067
    %2301 = vmatpush1.bf16.msra.mxu0 %v2066
    %2302 = vmatprep.subr.bf16.mxu0 %v2069
    %2303 = vmatpush1.bf16.msra.mxu0 %v2068
    %2304 = vmatprep.mubr.bf16.mxu0 %v1575
    %2305 = vmatmul.mubr.bf16.gmra.mrb[0].mxu0 %v1574
    %v2306 = vpop.f32.mrb[0].mxu0
    %v2307 = vadd.f32 %v2254, %v2306
    %v2308 = vpop.f32.mrb[0].mxu0
    %v2309 = vadd.f32 %v2256, %v2308
    %v2310 = vpop.f32.mrb[0].mxu0
    %v2311 = vadd.f32 %v2258, %v2310
    %v2312 = vpop.f32.mrb[0].mxu0
    %v2313 = vadd.f32 %v2260, %v2312
    %2314 = vmatprep.mubr.bf16.mxu0 %v1577
    %2315 = vmatmul.mubr.bf16.gmra.mrb[0].mxu0 %v1576
    %v2316 = vpop.f32.mrb[0].mxu0
    %v2317 = vadd.f32 %v2264, %v2316
    %v2318 = vpop.f32.mrb[0].mxu0
    %v2319 = vadd.f32 %v2266, %v2318
    %v2320 = vpop.f32.mrb[0].mxu0
    %v2321 = vadd.f32 %v2268, %v2320
    %v2322 = vpop.f32.mrb[0].mxu0
    %v2323 = vadd.f32 %v2270, %v2322
    %2324 = vdwg.mxu0
    %v2325 = vmax.f32 %v2307, 0.0
    %v2326 = vmax.f32 %v2309, 0.0
    %v2327 = vmax.f32 %v2311, 0.0
    %v2328 = vmax.f32 %v2313, 0.0
    %v2329 = vmax.f32 %v2317, 0.0
    %v2330 = vmax.f32 %v2319, 0.0
    %v2331 = vmax.f32 %v2321, 0.0
    %v2332 = vmax.f32 %v2323, 0.0
    %v2333 = vpack.c.bf16 %v2327, %v2325
    %v2334 = vpack.c.bf16 %v2328, %v2326
    %v2335 = vpack.c.bf16 %v2331, %v2329
    %v2336 = vpack.c.bf16 %v2332, %v2330
    %v2337 = vld [vmem:[%s8] sm:$0xf]
    %v2338 = vld [vmem:[%s8 + $0x4] sm:$0xf]
    %v2341 = vunpack.c.l.b16 %v2337
    %v2342 = vunpack.c.l.b16 %v2338
    %v2343 = vpack.c.b16 %v2342, %v2341
    %vm2344 = vcmask 261120
    %v2346 = vsel %vm2344, %v2343, 0
    %2348 = vmatprep.subr.bf16.mxu0 %v2334
    %2349 = vmatpush1.bf16.msra.mxu0 %v2333
    %2350 = vmatprep.subr.bf16.mxu0 %v2336
    %2351 = vmatpush1.bf16.msra.mxu0 %v2335
    %2352 = vmatprep.subr.bf16.mxu0 0
    %2353 = vmatpush1.bf16.msra.mxu0 0
    %2354 = vmatprep.subr.bf16.mxu0 0
    %2355 = vmatpush1.bf16.msra.mxu0 0
    %2356 = vmatprep.subr.bf16.mxu0 0
    %2357 = vmatpush1.bf16.msra.mxu0 0
    %2358 = vmatprep.subr.bf16.mxu0 0
    %2359 = vmatpush1.bf16.msra.mxu0 0
    %2360 = vmatprep.subr.bf16.mxu0 0
    %2361 = vmatpush1.bf16.msra.mxu0 0
    %2362 = vmatprep.subr.bf16.mxu0 0
    %2363 = vmatpush1.bf16.msra.mxu0 0
    %2364 = vmatprep.subr.bf16.mxu0 0
    %2365 = vmatpush1.bf16.msra.mxu0 0
    %2366 = vmatprep.subr.bf16.mxu0 0
    %2367 = vmatpush1.bf16.msra.mxu0 0
    %2368 = vmatprep.subr.bf16.mxu0 0
    %2369 = vmatpush1.bf16.msra.mxu0 0
    %2370 = vmatprep.subr.bf16.mxu0 0
    %2371 = vmatpush1.bf16.msra.mxu0 0
    %2372 = vmatprep.subr.bf16.mxu0 0
    %2373 = vmatpush1.bf16.msra.mxu0 0
    %2374 = vmatprep.subr.bf16.mxu0 0
    %2375 = vmatpush1.bf16.msra.mxu0 0
    %2376 = vmatprep.subr.bf16.mxu0 0
    %2377 = vmatpush1.bf16.msra.mxu0 0
    %2378 = vmatprep.subr.bf16.mxu0 0
    %2379 = vmatpush1.bf16.msra.mxu0 0
    %2380 = vmatprep.mubr.bf16.mxu0 0
    %2381 = vmatmul.mubr.bf16.gmra.mrb[0].mxu0 %v2346
    %v2382 = vpop.f32.mrb[0].mxu0
    %v2383 = vadd.f32 0.0, %v2382
    %v2384 = vpop.f32.mrb[0].mxu0
    %v2385 = vadd.f32 0.0, %v2384
    %v2386 = vpop.f32.mrb[0].mxu0
    %v2387 = vadd.f32 0.0, %v2386
    %v2388 = vpop.f32.mrb[0].mxu0
    %v2389 = vadd.f32 0.0, %v2388
    %2390 = vdwg.mxu0
    %v2391 = vpack.c.bf16 %v2387, %v2383
    %v2392 = vpack.c.bf16 %v2389, %v2385
    %s2393 = scalar_lea.vmem %s8, 8
    %v2394 = vld [vmem:[%s2393] sm:$0xf]
    %v2395 = vld [vmem:[%s2393 + $0x4] sm:$0xf]
    %v2398 = vunpack.c.l.b16 %v2394
    %v2399 = vunpack.c.l.b16 %v2395
    %v2400 = vpack.c.b16 %v2399, %v2398
    %v2402 = vsel %vm2344, %v2400, 0
    %2404 = vmatprep.subr.bf16.mxu0 %v2334
    %2405 = vmatpush1.bf16.msra.mxu0 %v2333
    %2406 = vmatprep.subr.bf16.mxu0 %v2336
    %2407 = vmatpush1.bf16.msra.mxu0 %v2335
    %2408 = vmatprep.subr.bf16.mxu0 0
    %2409 = vmatpush1.bf16.msra.mxu0 0
    %2410 = vmatprep.subr.bf16.mxu0 0
    %2411 = vmatpush1.bf16.msra.mxu0 0
    %2412 = vmatprep.subr.bf16.mxu0 0
    %2413 = vmatpush1.bf16.msra.mxu0 0
    %2414 = vmatprep.subr.bf16.mxu0 0
    %2415 = vmatpush1.bf16.msra.mxu0 0
    %2416 = vmatprep.subr.bf16.mxu0 0
    %2417 = vmatpush1.bf16.msra.mxu0 0
    %2418 = vmatprep.subr.bf16.mxu0 0
    %2419 = vmatpush1.bf16.msra.mxu0 0
    %2420 = vmatprep.subr.bf16.mxu0 0
    %2421 = vmatpush1.bf16.msra.mxu0 0
    %2422 = vmatprep.subr.bf16.mxu0 0
    %2423 = vmatpush1.bf16.msra.mxu0 0
    %2424 = vmatprep.subr.bf16.mxu0 0
    %2425 = vmatpush1.bf16.msra.mxu0 0
    %2426 = vmatprep.subr.bf16.mxu0 0
    %2427 = vmatpush1.bf16.msra.mxu0 0
    %2428 = vmatprep.subr.bf16.mxu0 0
    %2429 = vmatpush1.bf16.msra.mxu0 0
    %2430 = vmatprep.subr.bf16.mxu0 0
    %2431 = vmatpush1.bf16.msra.mxu0 0
    %2432 = vmatprep.subr.bf16.mxu0 0
    %2433 = vmatpush1.bf16.msra.mxu0 0
    %2434 = vmatprep.subr.bf16.mxu0 0
    %2435 = vmatpush1.bf16.msra.mxu0 0
    %2436 = vmatprep.mubr.bf16.mxu0 0
    %2437 = vmatmul.mubr.bf16.gmra.mrb[0].mxu0 %v2402
    %v2438 = vpop.f32.mrb[0].mxu0
    %v2439 = vadd.f32 0.0, %v2438
    %v2440 = vpop.f32.mrb[0].mxu0
    %v2441 = vadd.f32 0.0, %v2440
    %v2442 = vpop.f32.mrb[0].mxu0
    %v2443 = vadd.f32 0.0, %v2442
    %v2444 = vpop.f32.mrb[0].mxu0
    %v2445 = vadd.f32 0.0, %v2444
    %2446 = vdwg.mxu0
    %v2447 = vpack.c.bf16 %v2443, %v2439
    %v2448 = vpack.c.bf16 %v2445, %v2441
    %s2449 = scalar_lea.vmem %s8, 16
    %v2450 = vld [vmem:[%s2449] sm:$0xf]
    %v2451 = vld [vmem:[%s2449 + $0x4] sm:$0xf]
    %v2454 = vunpack.c.l.b16 %v2450
    %v2455 = vunpack.c.l.b16 %v2451
    %v2456 = vpack.c.b16 %v2455, %v2454
    %v2458 = vsel %vm2344, %v2456, 0
    %2460 = vmatprep.subr.bf16.mxu0 %v2334
    %2461 = vmatpush1.bf16.msra.mxu0 %v2333
    %2462 = vmatprep.subr.bf16.mxu0 %v2336
    %2463 = vmatpush1.bf16.msra.mxu0 %v2335
    %2464 = vmatprep.subr.bf16.mxu0 0
    %2465 = vmatpush1.bf16.msra.mxu0 0
    %2466 = vmatprep.subr.bf16.mxu0 0
    %2467 = vmatpush1.bf16.msra.mxu0 0
    %2468 = vmatprep.subr.bf16.mxu0 0
    %2469 = vmatpush1.bf16.msra.mxu0 0
    %2470 = vmatprep.subr.bf16.mxu0 0
    %2471 = vmatpush1.bf16.msra.mxu0 0
    %2472 = vmatprep.subr.bf16.mxu0 0
    %2473 = vmatpush1.bf16.msra.mxu0 0
    %2474 = vmatprep.subr.bf16.mxu0 0
    %2475 = vmatpush1.bf16.msra.mxu0 0
    %2476 = vmatprep.subr.bf16.mxu0 0
    %2477 = vmatpush1.bf16.msra.mxu0 0
    %2478 = vmatprep.subr.bf16.mxu0 0
    %2479 = vmatpush1.bf16.msra.mxu0 0
    %2480 = vmatprep.subr.bf16.mxu0 0
    %2481 = vmatpush1.bf16.msra.mxu0 0
    %2482 = vmatprep.subr.bf16.mxu0 0
    %2483 = vmatpush1.bf16.msra.mxu0 0
    %2484 = vmatprep.subr.bf16.mxu0 0
    %2485 = vmatpush1.bf16.msra.mxu0 0
    %2486 = vmatprep.subr.bf16.mxu0 0
    %2487 = vmatpush1.bf16.msra.mxu0 0
    %2488 = vmatprep.subr.bf16.mxu0 0
    %2489 = vmatpush1.bf16.msra.mxu0 0
    %2490 = vmatprep.subr.bf16.mxu0 0
    %2491 = vmatpush1.bf16.msra.mxu0 0
    %2492 = vmatprep.mubr.bf16.mxu0 0
    %2493 = vmatmul.mubr.bf16.gmra.mrb[0].mxu0 %v2458
    %v2494 = vpop.f32.mrb[0].mxu0
    %v2495 = vadd.f32 0.0, %v2494
    %v2496 = vpop.f32.mrb[0].mxu0
    %v2497 = vadd.f32 0.0, %v2496
    %v2498 = vpop.f32.mrb[0].mxu0
    %v2499 = vadd.f32 0.0, %v2498
    %v2500 = vpop.f32.mrb[0].mxu0
    %v2501 = vadd.f32 0.0, %v2500
    %2502 = vdwg.mxu0
    %v2503 = vpack.c.bf16 %v2499, %v2495
    %v2504 = vpack.c.bf16 %v2501, %v2497
    %v2505 = vld [vmem:[#allocation2] sm:$0xff]
    %v2506 = vld [vmem:[#allocation2 + $0x8] sm:$0xff]
    %v2507 = vld [vmem:[#allocation2 + $0x10] sm:$0xff]
    %v2508 = vld [vmem:[#allocation2 + $0x18] sm:$0xff]
    %v2509 = vld [vmem:[#allocation2 + $0x20] sm:$0xff]
    %v2510 = vld [vmem:[#allocation2 + $0x28] sm:$0xff]
    %v2511 = vld [vmem:[#allocation2 + $0x30] sm:$0xff]
    %v2512 = vld [vmem:[#allocation2 + $0x38] sm:$0xff]
    %v2513 = vld [vmem:[#allocation2 + $0x40] sm:$0xff]
    %v2514 = vld [vmem:[#allocation2 + $0x48] sm:$0xff]
    %v2515 = vld [vmem:[#allocation2 + $0x50] sm:$0xff]
    %v2516 = vld [vmem:[#allocation2 + $0x58] sm:$0xff]
    %v2517 = vld [vmem:[#allocation2 + $0x60] sm:$0xff]
    %v2518 = vld [vmem:[#allocation2 + $0x68] sm:$0xff]
    %v2519 = vld [vmem:[#allocation2 + $0x70] sm:$0xff]
    %v2520 = vld [vmem:[#allocation2 + $0x78] sm:$0xff]
    %v2521 = vld [vmem:[#allocation2 + $0x80] sm:$0xff]
    %v2522 = vld [vmem:[#allocation2 + $0x88] sm:$0xff]
    %v2523 = vld [vmem:[#allocation2 + $0x90] sm:$0xff]
    %v2524 = vld [vmem:[#allocation2 + $0x98] sm:$0xff]
    %v2525 = vld [vmem:[#allocation2 + $0xa0] sm:$0xff]
    %v2526 = vld [vmem:[#allocation2 + $0xa8] sm:$0xff]
    %v2527 = vld [vmem:[#allocation2 + $0xb0] sm:$0xff]
    %v2528 = vld [vmem:[#allocation2 + $0xb8] sm:$0xff]
    %v2529 = vld [vmem:[#allocation2 + $0xc0] sm:$0xff]
    %v2530 = vld [vmem:[#allocation2 + $0xc8] sm:$0xff]
    %v2531 = vld [vmem:[#allocation2 + $0xd0] sm:$0xff]
    %v2532 = vld [vmem:[#allocation2 + $0xd8] sm:$0xff]
    %v2533 = vld [vmem:[#allocation2 + $0xe0] sm:$0xff]
    %v2534 = vld [vmem:[#allocation2 + $0xe8] sm:$0xff]
    %v2535 = vld [vmem:[#allocation2 + $0xf0] sm:$0xff]
    %v2536 = vld [vmem:[#allocation2 + $0xf8] sm:$0xff]
    %v2537 = vld [vmem:[#allocation2 + $0x100] sm:$0xff]
    %v2538 = vld [vmem:[#allocation2 + $0x108] sm:$0xff]
    %v2539 = vld [vmem:[#allocation2 + $0x110] sm:$0xff]
    %v2540 = vld [vmem:[#allocation2 + $0x118] sm:$0xff]
    %v2541 = vld [vmem:[#allocation2 + $0x120] sm:$0xff]
    %v2542 = vld [vmem:[#allocation2 + $0x128] sm:$0xff]
    %v2543 = vld [vmem:[#allocation2 + $0x130] sm:$0xff]
    %v2544 = vld [vmem:[#allocation2 + $0x138] sm:$0xff]
    %v2545 = vld [vmem:[#allocation2 + $0x140] sm:$0xff]
    %v2546 = vld [vmem:[#allocation2 + $0x148] sm:$0xff]
    %v2547 = vld [vmem:[#allocation2 + $0x150] sm:$0xff]
    %v2548 = vld [vmem:[#allocation2 + $0x158] sm:$0xff]
    %v2549 = vld [vmem:[#allocation2 + $0x160] sm:$0xff]
    %v2550 = vld [vmem:[#allocation2 + $0x168] sm:$0xff]
    %v2551 = vld [vmem:[#allocation2 + $0x170] sm:$0xff]
    %v2552 = vld [vmem:[#allocation2 + $0x178] sm:$0xff]
    %v2553 = vld [vmem:[#allocation2 + $0x180] sm:$0xff]
    %v2554 = vld [vmem:[#allocation2 + $0x188] sm:$0xff]
    %v2555 = vld [vmem:[#allocation2 + $0x190] sm:$0xff]
    %v2556 = vld [vmem:[#allocation2 + $0x198] sm:$0xff]
    %v2557 = vld [vmem:[#allocation2 + $0x1a0] sm:$0xff]
    %v2558 = vld [vmem:[#allocation2 + $0x1a8] sm:$0xff]
    %v2559 = vld [vmem:[#allocation2 + $0x1b0] sm:$0xff]
    %v2560 = vld [vmem:[#allocation2 + $0x1b8] sm:$0xff]
    %v2561 = vld [vmem:[#allocation2 + $0x1c0] sm:$0xff]
    %v2562 = vld [vmem:[#allocation2 + $0x1c8] sm:$0xff]
    %v2563 = vld [vmem:[#allocation2 + $0x1d0] sm:$0xff]
    %v2564 = vld [vmem:[#allocation2 + $0x1d8] sm:$0xff]
    %v2565 = vld [vmem:[#allocation2 + $0x1e0] sm:$0xff]
    %v2566 = vld [vmem:[#allocation2 + $0x1e8] sm:$0xff]
    %v2567 = vld [vmem:[#allocation2 + $0x1f0] sm:$0xff]
    %v2568 = vld [vmem:[#allocation2 + $0x1f8] sm:$0xff]
    %v2569 = vld [vmem:[#allocation2 + $0x200] sm:$0xff]
    %v2570 = vld [vmem:[#allocation2 + $0x208] sm:$0xff]
    %v2571 = vld [vmem:[#allocation2 + $0x210] sm:$0xff]
    %v2572 = vld [vmem:[#allocation2 + $0x218] sm:$0xff]
    %v2573 = vld [vmem:[#allocation2 + $0x220] sm:$0xff]
    %v2574 = vld [vmem:[#allocation2 + $0x228] sm:$0xff]
    %v2575 = vld [vmem:[#allocation2 + $0x230] sm:$0xff]
    %v2576 = vld [vmem:[#allocation2 + $0x238] sm:$0xff]
    %v2577 = vld [vmem:[#allocation2 + $0x240] sm:$0xff]
    %v2578 = vld [vmem:[#allocation2 + $0x248] sm:$0xff]
    %v2579 = vld [vmem:[#allocation2 + $0x250] sm:$0xff]
    %v2580 = vld [vmem:[#allocation2 + $0x258] sm:$0xff]
    %v2581 = vld [vmem:[#allocation2 + $0x260] sm:$0xff]
    %v2582 = vld [vmem:[#allocation2 + $0x268] sm:$0xff]
    %v2583 = vld [vmem:[#allocation2 + $0x270] sm:$0xff]
    %v2584 = vld [vmem:[#allocation2 + $0x278] sm:$0xff]
    %v2585 = vld [vmem:[#allocation2 + $0x280] sm:$0xff]
    %v2586 = vld [vmem:[#allocation2 + $0x288] sm:$0xff]
    %v2587 = vld [vmem:[#allocation2 + $0x290] sm:$0xff]
    %v2588 = vld [vmem:[#allocation2 + $0x298] sm:$0xff]
    %v2589 = vld [vmem:[#allocation2 + $0x2a0] sm:$0xff]
    %v2590 = vld [vmem:[#allocation2 + $0x2a8] sm:$0xff]
    %v2591 = vld [vmem:[#allocation2 + $0x2b0] sm:$0xff]
    %v2592 = vld [vmem:[#allocation2 + $0x2b8] sm:$0xff]
    %v2593 = vld [vmem:[#allocation2 + $0x2c0] sm:$0xff]
    %v2594 = vld [vmem:[#allocation2 + $0x2c8] sm:$0xff]
    %v2595 = vld [vmem:[#allocation2 + $0x2d0] sm:$0xff]
    %v2596 = vld [vmem:[#allocation2 + $0x2d8] sm:$0xff]
    %v2597 = vld [vmem:[#allocation2 + $0x2e0] sm:$0xff]
    %v2598 = vld [vmem:[#allocation2 + $0x2e8] sm:$0xff]
    %v2599 = vld [vmem:[#allocation2 + $0x2f0] sm:$0xff]
    %v2600 = vld [vmem:[#allocation2 + $0x2f8] sm:$0xff]
    %v2601 = vld [vmem:[%s13] sm:$0x3]
    %v2603 = vlaneseq
    %v2604 = vshrl.u32 %v2603, 7
    %v2605 = vsub.s32 0, %v2604
    %v2606 = vrot.slane %v2601, %v2605
    %v2607 = vlaneseq
    %v2608 = vshrl.u32 %v2607, 7
    %v2609 = vsub.s32 1, %v2608
    %v2610 = vrot.slane %v2601, %v2609
    %v2709 = vunpack.c.l.b16 %v2505
    %v2710 = vunpack.c.h.b16 %v2505
    %v2711 = vunpack.c.l.b16 %v2506
    %v2712 = vunpack.c.h.b16 %v2506
    %v2713 = vunpack.c.l.b16 %v2507
    %v2714 = vunpack.c.h.b16 %v2507
    %v2715 = vunpack.c.l.b16 %v2508
    %v2716 = vunpack.c.h.b16 %v2508
    %v2717 = vunpack.c.l.b16 %v2509
    %v2718 = vunpack.c.h.b16 %v2509
    %v2719 = vunpack.c.l.b16 %v2510
    %v2720 = vunpack.c.h.b16 %v2510
    %v2721 = vunpack.c.l.b16 %v2511
    %v2722 = vunpack.c.h.b16 %v2511
    %v2723 = vunpack.c.l.b16 %v2512
    %v2724 = vunpack.c.h.b16 %v2512
    %v2725 = vunpack.c.l.b16 %v2513
    %v2726 = vunpack.c.h.b16 %v2513
    %v2727 = vunpack.c.l.b16 %v2514
    %v2728 = vunpack.c.h.b16 %v2514
    %v2729 = vunpack.c.l.b16 %v2515
    %v2730 = vunpack.c.h.b16 %v2515
    %v2731 = vunpack.c.l.b16 %v2516
    %v2732 = vunpack.c.h.b16 %v2516
    %v2733 = vunpack.c.l.b16 %v2517
    %v2734 = vunpack.c.h.b16 %v2517
    %v2735 = vunpack.c.l.b16 %v2518
    %v2736 = vunpack.c.h.b16 %v2518
    %v2737 = vunpack.c.l.b16 %v2519
    %v2738 = vunpack.c.h.b16 %v2519
    %v2739 = vunpack.c.l.b16 %v2520
    %v2740 = vunpack.c.h.b16 %v2520
    %v2741 = vunpack.c.l.b16 %v2521
    %v2742 = vunpack.c.h.b16 %v2521
    %v2743 = vunpack.c.l.b16 %v2522
    %v2744 = vunpack.c.h.b16 %v2522
    %v2745 = vunpack.c.l.b16 %v2523
    %v2746 = vunpack.c.h.b16 %v2523
    %v2747 = vunpack.c.l.b16 %v2524
    %v2748 = vunpack.c.h.b16 %v2524
    %v2749 = vunpack.c.l.b16 %v2525
    %v2750 = vunpack.c.h.b16 %v2525
    %v2751 = vunpack.c.l.b16 %v2526
    %v2752 = vunpack.c.h.b16 %v2526
    %v2753 = vunpack.c.l.b16 %v2527
    %v2754 = vunpack.c.h.b16 %v2527
    %v2755 = vunpack.c.l.b16 %v2528
    %v2756 = vunpack.c.h.b16 %v2528
    %v2757 = vunpack.c.l.b16 %v2529
    %v2758 = vunpack.c.h.b16 %v2529
    %v2759 = vunpack.c.l.b16 %v2530
    %v2760 = vunpack.c.h.b16 %v2530
    %v2761 = vunpack.c.l.b16 %v2531
    %v2762 = vunpack.c.h.b16 %v2531
    %v2763 = vunpack.c.l.b16 %v2532
    %v2764 = vunpack.c.h.b16 %v2532
    %v2765 = vunpack.c.l.b16 %v2533
    %v2766 = vunpack.c.h.b16 %v2533
    %v2767 = vunpack.c.l.b16 %v2534
    %v2768 = vunpack.c.h.b16 %v2534
    %v2769 = vunpack.c.l.b16 %v2535
    %v2770 = vunpack.c.h.b16 %v2535
    %v2771 = vunpack.c.l.b16 %v2536
    %v2772 = vunpack.c.h.b16 %v2536
    %v2773 = vunpack.c.l.b16 %v2537
    %v2774 = vunpack.c.h.b16 %v2537
    %v2775 = vunpack.c.l.b16 %v2538
    %v2776 = vunpack.c.h.b16 %v2538
    %v2777 = vunpack.c.l.b16 %v2539
    %v2778 = vunpack.c.h.b16 %v2539
    %v2779 = vunpack.c.l.b16 %v2540
    %v2780 = vunpack.c.h.b16 %v2540
    %v2781 = vunpack.c.l.b16 %v2541
    %v2782 = vunpack.c.h.b16 %v2541
    %v2783 = vunpack.c.l.b16 %v2542
    %v2784 = vunpack.c.h.b16 %v2542
    %v2785 = vunpack.c.l.b16 %v2543
    %v2786 = vunpack.c.h.b16 %v2543
    %v2787 = vunpack.c.l.b16 %v2544
    %v2788 = vunpack.c.h.b16 %v2544
    %v2789 = vunpack.c.l.b16 %v2545
    %v2790 = vunpack.c.h.b16 %v2545
    %v2791 = vunpack.c.l.b16 %v2546
    %v2792 = vunpack.c.h.b16 %v2546
    %v2793 = vunpack.c.l.b16 %v2547
    %v2794 = vunpack.c.h.b16 %v2547
    %v2795 = vunpack.c.l.b16 %v2548
    %v2796 = vunpack.c.h.b16 %v2548
    %v2797 = vunpack.c.l.b16 %v2549
    %v2798 = vunpack.c.h.b16 %v2549
    %v2799 = vunpack.c.l.b16 %v2550
    %v2800 = vunpack.c.h.b16 %v2550
    %v2801 = vunpack.c.l.b16 %v2551
    %v2802 = vunpack.c.h.b16 %v2551
    %v2803 = vunpack.c.l.b16 %v2552
    %v2804 = vunpack.c.h.b16 %v2552
    %v2805 = vunpack.c.l.b16 %v2553
    %v2806 = vunpack.c.h.b16 %v2553
    %v2807 = vunpack.c.l.b16 %v2554
    %v2808 = vunpack.c.h.b16 %v2554
    %v2809 = vunpack.c.l.b16 %v2555
    %v2810 = vunpack.c.h.b16 %v2555
    %v2811 = vunpack.c.l.b16 %v2556
    %v2812 = vunpack.c.h.b16 %v2556
    %v2813 = vunpack.c.l.b16 %v2557
    %v2814 = vunpack.c.h.b16 %v2557
    %v2815 = vunpack.c.l.b16 %v2558
    %v2816 = vunpack.c.h.b16 %v2558
    %v2817 = vunpack.c.l.b16 %v2559
    %v2818 = vunpack.c.h.b16 %v2559
    %v2819 = vunpack.c.l.b16 %v2560
    %v2820 = vunpack.c.h.b16 %v2560
    %v2821 = vunpack.c.l.b16 %v2561
    %v2822 = vunpack.c.h.b16 %v2561
    %v2823 = vunpack.c.l.b16 %v2562
    %v2824 = vunpack.c.h.b16 %v2562
    %v2825 = vunpack.c.l.b16 %v2563
    %v2826 = vunpack.c.h.b16 %v2563
    %v2827 = vunpack.c.l.b16 %v2564
    %v2828 = vunpack.c.h.b16 %v2564
    %v2829 = vunpack.c.l.b16 %v2565
    %v2830 = vunpack.c.h.b16 %v2565
    %v2831 = vunpack.c.l.b16 %v2566
    %v2832 = vunpack.c.h.b16 %v2566
    %v2833 = vunpack.c.l.b16 %v2567
    %v2834 = vunpack.c.h.b16 %v2567
    %v2835 = vunpack.c.l.b16 %v2568
    %v2836 = vunpack.c.h.b16 %v2568
    %v2837 = vunpack.c.l.b16 %v2569
    %v2838 = vunpack.c.h.b16 %v2569
    %v2839 = vunpack.c.l.b16 %v2570
    %v2840 = vunpack.c.h.b16 %v2570
    %v2841 = vunpack.c.l.b16 %v2571
    %v2842 = vunpack.c.h.b16 %v2571
    %v2843 = vunpack.c.l.b16 %v2572
    %v2844 = vunpack.c.h.b16 %v2572
    %v2845 = vunpack.c.l.b16 %v2573
    %v2846 = vunpack.c.h.b16 %v2573
    %v2847 = vunpack.c.l.b16 %v2574
    %v2848 = vunpack.c.h.b16 %v2574
    %v2849 = vunpack.c.l.b16 %v2575
    %v2850 = vunpack.c.h.b16 %v2575
    %v2851 = vunpack.c.l.b16 %v2576
    %v2852 = vunpack.c.h.b16 %v2576
    %v2853 = vunpack.c.l.b16 %v2577
    %v2854 = vunpack.c.h.b16 %v2577
    %v2855 = vunpack.c.l.b16 %v2578
    %v2856 = vunpack.c.h.b16 %v2578
    %v2857 = vunpack.c.l.b16 %v2579
    %v2858 = vunpack.c.h.b16 %v2579
    %v2859 = vunpack.c.l.b16 %v2580
    %v2860 = vunpack.c.h.b16 %v2580
    %v2861 = vunpack.c.l.b16 %v2581
    %v2862 = vunpack.c.h.b16 %v2581
    %v2863 = vunpack.c.l.b16 %v2582
    %v2864 = vunpack.c.h.b16 %v2582
    %v2865 = vunpack.c.l.b16 %v2583
    %v2866 = vunpack.c.h.b16 %v2583
    %v2867 = vunpack.c.l.b16 %v2584
    %v2868 = vunpack.c.h.b16 %v2584
    %v2869 = vunpack.c.l.b16 %v2585
    %v2870 = vunpack.c.h.b16 %v2585
    %v2871 = vunpack.c.l.b16 %v2586
    %v2872 = vunpack.c.h.b16 %v2586
    %v2873 = vunpack.c.l.b16 %v2587
    %v2874 = vunpack.c.h.b16 %v2587
    %v2875 = vunpack.c.l.b16 %v2588
    %v2876 = vunpack.c.h.b16 %v2588
    %v2877 = vunpack.c.l.b16 %v2589
    %v2878 = vunpack.c.h.b16 %v2589
    %v2879 = vunpack.c.l.b16 %v2590
    %v2880 = vunpack.c.h.b16 %v2590
    %v2881 = vunpack.c.l.b16 %v2591
    %v2882 = vunpack.c.h.b16 %v2591
    %v2883 = vunpack.c.l.b16 %v2592
    %v2884 = vunpack.c.h.b16 %v2592
    %v2885 = vunpack.c.l.b16 %v2593
    %v2886 = vunpack.c.h.b16 %v2593
    %v2887 = vunpack.c.l.b16 %v2594
    %v2888 = vunpack.c.h.b16 %v2594
    %v2889 = vunpack.c.l.b16 %v2595
    %v2890 = vunpack.c.h.b16 %v2595
    %v2891 = vunpack.c.l.b16 %v2596
    %v2892 = vunpack.c.h.b16 %v2596
    %v2893 = vunpack.c.l.b16 %v2597
    %v2894 = vunpack.c.h.b16 %v2597
    %v2895 = vunpack.c.l.b16 %v2598
    %v2896 = vunpack.c.h.b16 %v2598
    %v2897 = vunpack.c.l.b16 %v2599
    %v2898 = vunpack.c.h.b16 %v2599
    %v2899 = vunpack.c.l.b16 %v2600
    %v2900 = vunpack.c.h.b16 %v2600
    %v2901 = vpack.c.b16 %v2711, %v2709
    %v2902 = vpack.c.b16 %v2712, %v2710
    %v2903 = vpack.c.b16 %v2715, %v2713
    %v2904 = vpack.c.b16 %v2716, %v2714
    %v2905 = vpack.c.b16 %v2719, %v2717
    %v2906 = vpack.c.b16 %v2720, %v2718
    %v2907 = vpack.c.b16 %v2723, %v2721
    %v2908 = vpack.c.b16 %v2724, %v2722
    %v2909 = vpack.c.b16 %v2727, %v2725
    %v2910 = vpack.c.b16 %v2728, %v2726
    %v2911 = vpack.c.b16 %v2731, %v2729
    %v2912 = vpack.c.b16 %v2732, %v2730
    %v2913 = vpack.c.b16 %v2735, %v2733
    %v2914 = vpack.c.b16 %v2736, %v2734
    %v2915 = vpack.c.b16 %v2739, %v2737
    %v2916 = vpack.c.b16 %v2740, %v2738
    %v2917 = vpack.c.b16 %v2743, %v2741
    %v2918 = vpack.c.b16 %v2744, %v2742
    %v2919 = vpack.c.b16 %v2747, %v2745
    %v2920 = vpack.c.b16 %v2748, %v2746
    %v2921 = vpack.c.b16 %v2751, %v2749
    %v2922 = vpack.c.b16 %v2752, %v2750
    %v2923 = vpack.c.b16 %v2755, %v2753
    %v2924 = vpack.c.b16 %v2756, %v2754
    %v2925 = vpack.c.b16 %v2759, %v2757
    %v2926 = vpack.c.b16 %v2760, %v2758
    %v2927 = vpack.c.b16 %v2763, %v2761
    %v2928 = vpack.c.b16 %v2764, %v2762
    %v2929 = vpack.c.b16 %v2767, %v2765
    %v2930 = vpack.c.b16 %v2768, %v2766
    %v2931 = vpack.c.b16 %v2771, %v2769
    %v2932 = vpack.c.b16 %v2772, %v2770
    %v2933 = vpack.c.b16 %v2775, %v2773
    %v2934 = vpack.c.b16 %v2776, %v2774
    %v2935 = vpack.c.b16 %v2779, %v2777
    %v2936 = vpack.c.b16 %v2780, %v2778
    %v2937 = vpack.c.b16 %v2783, %v2781
    %v2938 = vpack.c.b16 %v2784, %v2782
    %v2939 = vpack.c.b16 %v2787, %v2785
    %v2940 = vpack.c.b16 %v2788, %v2786
    %v2941 = vpack.c.b16 %v2791, %v2789
    %v2942 = vpack.c.b16 %v2792, %v2790
    %v2943 = vpack.c.b16 %v2795, %v2793
    %v2944 = vpack.c.b16 %v2796, %v2794
    %v2945 = vpack.c.b16 %v2799, %v2797
    %v2946 = vpack.c.b16 %v2800, %v2798
    %v2947 = vpack.c.b16 %v2803, %v2801
    %v2948 = vpack.c.b16 %v2804, %v2802
    %v2949 = vpack.c.b16 %v2807, %v2805
    %v2950 = vpack.c.b16 %v2808, %v2806
    %v2951 = vpack.c.b16 %v2811, %v2809
    %v2952 = vpack.c.b16 %v2812, %v2810
    %v2953 = vpack.c.b16 %v2815, %v2813
    %v2954 = vpack.c.b16 %v2816, %v2814
    %v2955 = vpack.c.b16 %v2819, %v2817
    %v2956 = vpack.c.b16 %v2820, %v2818
    %v2957 = vpack.c.b16 %v2823, %v2821
    %v2958 = vpack.c.b16 %v2824, %v2822
    %v2959 = vpack.c.b16 %v2827, %v2825
    %v2960 = vpack.c.b16 %v2828, %v2826
    %v2961 = vpack.c.b16 %v2831, %v2829
    %v2962 = vpack.c.b16 %v2832, %v2830
    %v2963 = vpack.c.b16 %v2835, %v2833
    %v2964 = vpack.c.b16 %v2836, %v2834
    %v2965 = vpack.c.b16 %v2839, %v2837
    %v2966 = vpack.c.b16 %v2840, %v2838
    %v2967 = vpack.c.b16 %v2843, %v2841
    %v2968 = vpack.c.b16 %v2844, %v2842
    %v2969 = vpack.c.b16 %v2847, %v2845
    %v2970 = vpack.c.b16 %v2848, %v2846
    %v2971 = vpack.c.b16 %v2851, %v2849
    %v2972 = vpack.c.b16 %v2852, %v2850
    %v2973 = vpack.c.b16 %v2855, %v2853
    %v2974 = vpack.c.b16 %v2856, %v2854
    %v2975 = vpack.c.b16 %v2859, %v2857
    %v2976 = vpack.c.b16 %v2860, %v2858
    %v2977 = vpack.c.b16 %v2863, %v2861
    %v2978 = vpack.c.b16 %v2864, %v2862
    %v2979 = vpack.c.b16 %v2867, %v2865
    %v2980 = vpack.c.b16 %v2868, %v2866
    %v2981 = vpack.c.b16 %v2871, %v2869
    %v2982 = vpack.c.b16 %v2872, %v2870
    %v2983 = vpack.c.b16 %v2875, %v2873
    %v2984 = vpack.c.b16 %v2876, %v2874
    %v2985 = vpack.c.b16 %v2879, %v2877
    %v2986 = vpack.c.b16 %v2880, %v2878
    %v2987 = vpack.c.b16 %v2883, %v2881
    %v2988 = vpack.c.b16 %v2884, %v2882
    %v2989 = vpack.c.b16 %v2887, %v2885
    %v2990 = vpack.c.b16 %v2888, %v2886
    %v2991 = vpack.c.b16 %v2891, %v2889
    %v2992 = vpack.c.b16 %v2892, %v2890
    %v2993 = vpack.c.b16 %v2895, %v2893
    %v2994 = vpack.c.b16 %v2896, %v2894
    %v2995 = vpack.c.b16 %v2899, %v2897
    %v2996 = vpack.c.b16 %v2900, %v2898
    %3093 = vmatprep.subr.bf16.mxu0 %v2902
    %3094 = vmatpush1.bf16.msra.mxu0 %v2901
    %3095 = vmatprep.subr.bf16.mxu0 %v2904
    %3096 = vmatpush1.bf16.msra.mxu0 %v2903
    %3097 = vmatprep.subr.bf16.mxu0 %v2906
    %3098 = vmatpush1.bf16.msra.mxu0 %v2905
    %3099 = vmatprep.subr.bf16.mxu0 %v2908
    %3100 = vmatpush1.bf16.msra.mxu0 %v2907
    %3101 = vmatprep.subr.bf16.mxu0 %v2910
    %3102 = vmatpush1.bf16.msra.mxu0 %v2909
    %3103 = vmatprep.subr.bf16.mxu0 %v2912
    %3104 = vmatpush1.bf16.msra.mxu0 %v2911
    %3105 = vmatprep.subr.bf16.mxu0 %v2914
    %3106 = vmatpush1.bf16.msra.mxu0 %v2913
    %3107 = vmatprep.subr.bf16.mxu0 %v2916
    %3108 = vmatpush1.bf16.msra.mxu0 %v2915
    %3109 = vmatprep.subr.bf16.mxu0 %v2918
    %3110 = vmatpush1.bf16.msra.mxu0 %v2917
    %3111 = vmatprep.subr.bf16.mxu0 %v2920
    %3112 = vmatpush1.bf16.msra.mxu0 %v2919
    %3113 = vmatprep.subr.bf16.mxu0 %v2922
    %3114 = vmatpush1.bf16.msra.mxu0 %v2921
    %3115 = vmatprep.subr.bf16.mxu0 %v2924
    %3116 = vmatpush1.bf16.msra.mxu0 %v2923
    %3117 = vmatprep.subr.bf16.mxu0 %v2926
    %3118 = vmatpush1.bf16.msra.mxu0 %v2925
    %3119 = vmatprep.subr.bf16.mxu0 %v2928
    %3120 = vmatpush1.bf16.msra.mxu0 %v2927
    %3121 = vmatprep.subr.bf16.mxu0 %v2930
    %3122 = vmatpush1.bf16.msra.mxu0 %v2929
    %3123 = vmatprep.subr.bf16.mxu0 %v2932
    %3124 = vmatpush1.bf16.msra.mxu0 %v2931
    %3125 = vmatprep.mubr.bf16.mxu0 %v2392
    %3126 = vmatmul.mubr.bf16.gmra.mrb[0].mxu0 %v2391
    %v3127 = vpop.f32.mrb[0].mxu0
    %v3128 = vadd.f32 %v2606, %v3127
    %v3129 = vpop.f32.mrb[0].mxu0
    %v3130 = vadd.f32 %v2610, %v3129
    %v3131 = vpop.f32.mrb[0].mxu0
    %v3132 = vadd.f32 %v2606, %v3131
    %v3133 = vpop.f32.mrb[0].mxu0
    %v3134 = vadd.f32 %v2610, %v3133
    %3135 = vdwg.mxu0
    %3136 = vmatprep.subr.bf16.mxu0 %v2934
    %3137 = vmatpush1.bf16.msra.mxu0 %v2933
    %3138 = vmatprep.subr.bf16.mxu0 %v2936
    %3139 = vmatpush1.bf16.msra.mxu0 %v2935
    %3140 = vmatprep.subr.bf16.mxu0 %v2938
    %3141 = vmatpush1.bf16.msra.mxu0 %v2937
    %3142 = vmatprep.subr.bf16.mxu0 %v2940
    %3143 = vmatpush1.bf16.msra.mxu0 %v2939
    %3144 = vmatprep.subr.bf16.mxu0 %v2942
    %3145 = vmatpush1.bf16.msra.mxu0 %v2941
    %3146 = vmatprep.subr.bf16.mxu0 %v2944
    %3147 = vmatpush1.bf16.msra.mxu0 %v2943
    %3148 = vmatprep.subr.bf16.mxu0 %v2946
    %3149 = vmatpush1.bf16.msra.mxu0 %v2945
    %3150 = vmatprep.subr.bf16.mxu0 %v2948
    %3151 = vmatpush1.bf16.msra.mxu0 %v2947
    %3152 = vmatprep.subr.bf16.mxu0 %v2950
    %3153 = vmatpush1.bf16.msra.mxu0 %v2949
    %3154 = vmatprep.subr.bf16.mxu0 %v2952
    %3155 = vmatpush1.bf16.msra.mxu0 %v2951
    %3156 = vmatprep.subr.bf16.mxu0 %v2954
    %3157 = vmatpush1.bf16.msra.mxu0 %v2953
    %3158 = vmatprep.subr.bf16.mxu0 %v2956
    %3159 = vmatpush1.bf16.msra.mxu0 %v2955
    %3160 = vmatprep.subr.bf16.mxu0 %v2958
    %3161 = vmatpush1.bf16.msra.mxu0 %v2957
    %3162 = vmatprep.subr.bf16.mxu0 %v2960
    %3163 = vmatpush1.bf16.msra.mxu0 %v2959
    %3164 = vmatprep.subr.bf16.mxu0 %v2962
    %3165 = vmatpush1.bf16.msra.mxu0 %v2961
    %3166 = vmatprep.subr.bf16.mxu0 %v2964
    %3167 = vmatpush1.bf16.msra.mxu0 %v2963
    %3168 = vmatprep.mubr.bf16.mxu0 %v2448
    %3169 = vmatmul.mubr.bf16.gmra.mrb[0].mxu0 %v2447
    %v3170 = vpop.f32.mrb[0].mxu0
    %v3171 = vadd.f32 %v3128, %v3170
    %v3172 = vpop.f32.mrb[0].mxu0
    %v3173 = vadd.f32 %v3130, %v3172
    %v3174 = vpop.f32.mrb[0].mxu0
    %v3175 = vadd.f32 %v3132, %v3174
    %v3176 = vpop.f32.mrb[0].mxu0
    %v3177 = vadd.f32 %v3134, %v3176
    %3178 = vdwg.mxu0
    %3179 = vmatprep.subr.bf16.mxu0 %v2966
    %3180 = vmatpush1.bf16.msra.mxu0 %v2965
    %3181 = vmatprep.subr.bf16.mxu0 %v2968
    %3182 = vmatpush1.bf16.msra.mxu0 %v2967
    %3183 = vmatprep.subr.bf16.mxu0 %v2970
    %3184 = vmatpush1.bf16.msra.mxu0 %v2969
    %3185 = vmatprep.subr.bf16.mxu0 %v2972
    %3186 = vmatpush1.bf16.msra.mxu0 %v2971
    %3187 = vmatprep.subr.bf16.mxu0 %v2974
    %3188 = vmatpush1.bf16.msra.mxu0 %v2973
    %3189 = vmatprep.subr.bf16.mxu0 %v2976
    %3190 = vmatpush1.bf16.msra.mxu0 %v2975
    %3191 = vmatprep.subr.bf16.mxu0 %v2978
    %3192 = vmatpush1.bf16.msra.mxu0 %v2977
    %3193 = vmatprep.subr.bf16.mxu0 %v2980
    %3194 = vmatpush1.bf16.msra.mxu0 %v2979
    %3195 = vmatprep.subr.bf16.mxu0 %v2982
    %3196 = vmatpush1.bf16.msra.mxu0 %v2981
    %3197 = vmatprep.subr.bf16.mxu0 %v2984
    %3198 = vmatpush1.bf16.msra.mxu0 %v2983
    %3199 = vmatprep.subr.bf16.mxu0 %v2986
    %3200 = vmatpush1.bf16.msra.mxu0 %v2985
    %3201 = vmatprep.subr.bf16.mxu0 %v2988
    %3202 = vmatpush1.bf16.msra.mxu0 %v2987
    %3203 = vmatprep.subr.bf16.mxu0 %v2990
    %3204 = vmatpush1.bf16.msra.mxu0 %v2989
    %3205 = vmatprep.subr.bf16.mxu0 %v2992
    %3206 = vmatpush1.bf16.msra.mxu0 %v2991
    %3207 = vmatprep.subr.bf16.mxu0 %v2994
    %3208 = vmatpush1.bf16.msra.mxu0 %v2993
    %3209 = vmatprep.subr.bf16.mxu0 %v2996
    %3210 = vmatpush1.bf16.msra.mxu0 %v2995
    %3211 = vmatprep.mubr.bf16.mxu0 %v2504
    %3212 = vmatmul.mubr.bf16.gmra.mrb[0].mxu0 %v2503
    %v3213 = vpop.f32.mrb[0].mxu0
    %v3214 = vadd.f32 %v3171, %v3213
    %v3215 = vpop.f32.mrb[0].mxu0
    %v3216 = vadd.f32 %v3173, %v3215
    %v3217 = vpop.f32.mrb[0].mxu0
    %v3218 = vadd.f32 %v3175, %v3217
    %v3219 = vpop.f32.mrb[0].mxu0
    %v3220 = vadd.f32 %v3177, %v3219
    %3221 = vdwg.mxu0
    %v3222 = vmax.f32 %v3214, 0.0
    %v3223 = vmax.f32 %v3216, 0.0
    %v3224 = vmax.f32 %v3218, 0.0
    %v3225 = vmax.f32 %v3220, 0.0
    %v3226 = vpack.c.bf16 %v3224, %v3222
    %v3227 = vpack.c.bf16 %v3225, %v3223
    %v3228 = vld [vmem:[%s9] sm:$0xf]
    %vm3229 = vcmask 130048
    %v3231 = vsel %vm3229, %v3228, 0
    %3233 = vmatprep.subr.bf16.mxu0 %v3227
    %3234 = vmatpush1.bf16.msra.mxu0 %v3226
    %3235 = vmatprep.subr.bf16.mxu0 0
    %3236 = vmatpush1.bf16.msra.mxu0 0
    %3237 = vmatprep.subr.bf16.mxu0 0
    %3238 = vmatpush1.bf16.msra.mxu0 0
    %3239 = vmatprep.subr.bf16.mxu0 0
    %3240 = vmatpush1.bf16.msra.mxu0 0
    %3241 = vmatprep.subr.bf16.mxu0 0
    %3242 = vmatpush1.bf16.msra.mxu0 0
    %3243 = vmatprep.subr.bf16.mxu0 0
    %3244 = vmatpush1.bf16.msra.mxu0 0
    %3245 = vmatprep.subr.bf16.mxu0 0
    %3246 = vmatpush1.bf16.msra.mxu0 0
    %3247 = vmatprep.subr.bf16.mxu0 0
    %3248 = vmatpush1.bf16.msra.mxu0 0
    %3249 = vmatprep.subr.bf16.mxu0 0
    %3250 = vmatpush1.bf16.msra.mxu0 0
    %3251 = vmatprep.subr.bf16.mxu0 0
    %3252 = vmatpush1.bf16.msra.mxu0 0
    %3253 = vmatprep.subr.bf16.mxu0 0
    %3254 = vmatpush1.bf16.msra.mxu0 0
    %3255 = vmatprep.subr.bf16.mxu0 0
    %3256 = vmatpush1.bf16.msra.mxu0 0
    %3257 = vmatprep.subr.bf16.mxu0 0
    %3258 = vmatpush1.bf16.msra.mxu0 0
    %3259 = vmatprep.subr.bf16.mxu0 0
    %3260 = vmatpush1.bf16.msra.mxu0 0
    %3261 = vmatprep.subr.bf16.mxu0 0
    %3262 = vmatpush1.bf16.msra.mxu0 0
    %3263 = vmatprep.subr.bf16.mxu0 0
    %3264 = vmatpush1.bf16.msra.mxu0 0
    %3265 = vmatprep.mubr.bf16.mxu0 0
    %3266 = vmatmul.mubr.bf16.gmra.mrb[0].mxu0 %v3231
    %v3267 = vpop.f32.mrb[0].mxu0
    %v3268 = vadd.f32 0.0, %v3267
    %v3269 = vpop.f32.mrb[0].mxu0
    %v3270 = vadd.f32 0.0, %v3269
    %v3271 = vpop.f32.mrb[0].mxu0
    %v3272 = vpop.f32.mrb[0].mxu0
    %3273 = vdwg.mxu0
    %v3274 = vpack.c.bf16 %v3268, %v3268
    %v3275 = vpack.c.bf16 %v3270, %v3270
    %s3276 = scalar_lea.vmem %s9, 4
    %v3277 = vld [vmem:[%s3276] sm:$0xf]
    %v3279 = vsel %vm3229, %v3277, 0
    %3281 = vmatprep.subr.bf16.mxu0 %v3227
    %3282 = vmatpush1.bf16.msra.mxu0 %v3226
    %3283 = vmatprep.subr.bf16.mxu0 0
    %3284 = vmatpush1.bf16.msra.mxu0 0
    %3285 = vmatprep.subr.bf16.mxu0 0
    %3286 = vmatpush1.bf16.msra.mxu0 0
    %3287 = vmatprep.subr.bf16.mxu0 0
    %3288 = vmatpush1.bf16.msra.mxu0 0
    %3289 = vmatprep.subr.bf16.mxu0 0
    %3290 = vmatpush1.bf16.msra.mxu0 0
    %3291 = vmatprep.subr.bf16.mxu0 0
    %3292 = vmatpush1.bf16.msra.mxu0 0
    %3293 = vmatprep.subr.bf16.mxu0 0
    %3294 = vmatpush1.bf16.msra.mxu0 0
    %3295 = vmatprep.subr.bf16.mxu0 0
    %3296 = vmatpush1.bf16.msra.mxu0 0
    %3297 = vmatprep.subr.bf16.mxu0 0
    %3298 = vmatpush1.bf16.msra.mxu0 0
    %3299 = vmatprep.subr.bf16.mxu0 0
    %3300 = vmatpush1.bf16.msra.mxu0 0
    %3301 = vmatprep.subr.bf16.mxu0 0
    %3302 = vmatpush1.bf16.msra.mxu0 0
    %3303 = vmatprep.subr.bf16.mxu0 0
    %3304 = vmatpush1.bf16.msra.mxu0 0
    %3305 = vmatprep.subr.bf16.mxu0 0
    %3306 = vmatpush1.bf16.msra.mxu0 0
    %3307 = vmatprep.subr.bf16.mxu0 0
    %3308 = vmatpush1.bf16.msra.mxu0 0
    %3309 = vmatprep.subr.bf16.mxu0 0
    %3310 = vmatpush1.bf16.msra.mxu0 0
    %3311 = vmatprep.subr.bf16.mxu0 0
    %3312 = vmatpush1.bf16.msra.mxu0 0
    %3313 = vmatprep.mubr.bf16.mxu0 0
    %3314 = vmatmul.mubr.bf16.gmra.mrb[0].mxu0 %v3279
    %v3315 = vpop.f32.mrb[0].mxu0
    %v3316 = vadd.f32 0.0, %v3315
    %v3317 = vpop.f32.mrb[0].mxu0
    %v3318 = vadd.f32 0.0, %v3317
    %v3319 = vpop.f32.mrb[0].mxu0
    %v3320 = vpop.f32.mrb[0].mxu0
    %3321 = vdwg.mxu0
    %v3322 = vpack.c.bf16 %v3316, %v3316
    %v3323 = vpack.c.bf16 %v3318, %v3318
    %s3324 = scalar_lea.vmem %s9, 8
    %v3325 = vld [vmem:[%s3324] sm:$0xf]
    %v3327 = vsel %vm3229, %v3325, 0
    %3329 = vmatprep.subr.bf16.mxu0 %v3227
    %3330 = vmatpush1.bf16.msra.mxu0 %v3226
    %3331 = vmatprep.subr.bf16.mxu0 0
    %3332 = vmatpush1.bf16.msra.mxu0 0
    %3333 = vmatprep.subr.bf16.mxu0 0
    %3334 = vmatpush1.bf16.msra.mxu0 0
    %3335 = vmatprep.subr.bf16.mxu0 0
    %3336 = vmatpush1.bf16.msra.mxu0 0
    %3337 = vmatprep.subr.bf16.mxu0 0
    %3338 = vmatpush1.bf16.msra.mxu0 0
    %3339 = vmatprep.subr.bf16.mxu0 0
    %3340 = vmatpush1.bf16.msra.mxu0 0
    %3341 = vmatprep.subr.bf16.mxu0 0
    %3342 = vmatpush1.bf16.msra.mxu0 0
    %3343 = vmatprep.subr.bf16.mxu0 0
    %3344 = vmatpush1.bf16.msra.mxu0 0
    %3345 = vmatprep.subr.bf16.mxu0 0
    %3346 = vmatpush1.bf16.msra.mxu0 0
    %3347 = vmatprep.subr.bf16.mxu0 0
    %3348 = vmatpush1.bf16.msra.mxu0 0
    %3349 = vmatprep.subr.bf16.mxu0 0
    %3350 = vmatpush1.bf16.msra.mxu0 0
    %3351 = vmatprep.subr.bf16.mxu0 0
    %3352 = vmatpush1.bf16.msra.mxu0 0
    %3353 = vmatprep.subr.bf16.mxu0 0
    %3354 = vmatpush1.bf16.msra.mxu0 0
    %3355 = vmatprep.subr.bf16.mxu0 0
    %3356 = vmatpush1.bf16.msra.mxu0 0
    %3357 = vmatprep.subr.bf16.mxu0 0
    %3358 = vmatpush1.bf16.msra.mxu0 0
    %3359 = vmatprep.subr.bf16.mxu0 0
    %3360 = vmatpush1.bf16.msra.mxu0 0
    %3361 = vmatprep.mubr.bf16.mxu0 0
    %3362 = vmatmul.mubr.bf16.gmra.mrb[0].mxu0 %v3327
    %v3363 = vpop.f32.mrb[0].mxu0
    %v3364 = vadd.f32 0.0, %v3363
    %v3365 = vpop.f32.mrb[0].mxu0
    %v3366 = vadd.f32 0.0, %v3365
    %v3367 = vpop.f32.mrb[0].mxu0
    %v3368 = vpop.f32.mrb[0].mxu0
    %3369 = vdwg.mxu0
    %v3370 = vpack.c.bf16 %v3364, %v3364
    %v3371 = vpack.c.bf16 %v3366, %v3366
    %v3372 = vld [vmem:[%s4] sm:$0xf]
    %v3373 = vld [vmem:[%s4 + $0x4] sm:$0xf]
    %v3374 = vld [vmem:[%s4 + $0x8] sm:$0xf]
    %v3375 = vld [vmem:[%s4 + $0xc] sm:$0xf]
    %v3376 = vld [vmem:[%s4 + $0x10] sm:$0xf]
    %v3377 = vld [vmem:[%s4 + $0x14] sm:$0xf]
    %v3378 = vld [vmem:[%s4 + $0x18] sm:$0xf]
    %v3379 = vld [vmem:[%s4 + $0x1c] sm:$0xf]
    %v3380 = vld [vmem:[%s4 + $0x20] sm:$0xf]
    %v3381 = vld [vmem:[%s4 + $0x24] sm:$0xf]
    %v3382 = vld [vmem:[%s4 + $0x28] sm:$0xf]
    %v3383 = vld [vmem:[%s4 + $0x2c] sm:$0xf]
    %v3384 = vld [vmem:[%s4 + $0x30] sm:$0xf]
    %v3385 = vld [vmem:[%s4 + $0x34] sm:$0xf]
    %v3386 = vld [vmem:[%s4 + $0x38] sm:$0xf]
    %v3387 = vld [vmem:[%s4 + $0x3c] sm:$0xf]
    %v3388 = vld [vmem:[%s4 + $0x40] sm:$0xf]
    %v3389 = vld [vmem:[%s4 + $0x44] sm:$0xf]
    %v3390 = vld [vmem:[%s4 + $0x48] sm:$0xf]
    %v3391 = vld [vmem:[%s4 + $0x4c] sm:$0xf]
    %v3392 = vld [vmem:[%s4 + $0x50] sm:$0xf]
    %v3393 = vld [vmem:[%s4 + $0x54] sm:$0xf]
    %v3394 = vld [vmem:[%s4 + $0x58] sm:$0xf]
    %v3395 = vld [vmem:[%s4 + $0x5c] sm:$0xf]
    %v3396 = vld [vmem:[%s4 + $0x60] sm:$0xf]
    %v3397 = vld [vmem:[%s4 + $0x64] sm:$0xf]
    %v3398 = vld [vmem:[%s4 + $0x68] sm:$0xf]
    %v3399 = vld [vmem:[%s4 + $0x6c] sm:$0xf]
    %v3400 = vld [vmem:[%s4 + $0x70] sm:$0xf]
    %v3401 = vld [vmem:[%s4 + $0x74] sm:$0xf]
    %v3402 = vld [vmem:[%s4 + $0x78] sm:$0xf]
    %v3403 = vld [vmem:[%s4 + $0x7c] sm:$0xf]
    %v3404 = vld [vmem:[%s4 + $0x80] sm:$0xf]
    %v3405 = vld [vmem:[%s4 + $0x84] sm:$0xf]
    %v3406 = vld [vmem:[%s4 + $0x88] sm:$0xf]
    %v3407 = vld [vmem:[%s4 + $0x8c] sm:$0xf]
    %v3408 = vld [vmem:[%s4 + $0x90] sm:$0xf]
    %v3409 = vld [vmem:[%s4 + $0x94] sm:$0xf]
    %v3410 = vld [vmem:[%s4 + $0x98] sm:$0xf]
    %v3411 = vld [vmem:[%s4 + $0x9c] sm:$0xf]
    %v3412 = vld [vmem:[%s4 + $0xa0] sm:$0xf]
    %v3413 = vld [vmem:[%s4 + $0xa4] sm:$0xf]
    %v3414 = vld [vmem:[%s4 + $0xa8] sm:$0xf]
    %v3415 = vld [vmem:[%s4 + $0xac] sm:$0xf]
    %v3416 = vld [vmem:[%s4 + $0xb0] sm:$0xf]
    %v3417 = vld [vmem:[%s4 + $0xb4] sm:$0xf]
    %v3418 = vld [vmem:[%s4 + $0xb8] sm:$0xf]
    %v3419 = vld [vmem:[%s4 + $0xbc] sm:$0xf]
    %v3420 = vld [vmem:[%s4 + $0xc0] sm:$0xf]
    %v3421 = vld [vmem:[%s4 + $0xc4] sm:$0xf]
    %v3422 = vld [vmem:[%s4 + $0xc8] sm:$0xf]
    %v3423 = vld [vmem:[%s4 + $0xcc] sm:$0xf]
    %v3424 = vld [vmem:[%s4 + $0xd0] sm:$0xf]
    %v3425 = vld [vmem:[%s4 + $0xd4] sm:$0xf]
    %v3426 = vld [vmem:[%s4 + $0xd8] sm:$0xf]
    %v3427 = vld [vmem:[%s4 + $0xdc] sm:$0xf]
    %v3428 = vld [vmem:[%s4 + $0xe0] sm:$0xf]
    %v3429 = vld [vmem:[%s4 + $0xe4] sm:$0xf]
    %v3430 = vld [vmem:[%s4 + $0xe8] sm:$0xf]
    %v3431 = vld [vmem:[%s4 + $0xec] sm:$0xf]
    %v3432 = vld [vmem:[%s4 + $0xf0] sm:$0xf]
    %v3433 = vld [vmem:[%s4 + $0xf4] sm:$0xf]
    %v3434 = vld [vmem:[%s4 + $0xf8] sm:$0xf]
    %v3435 = vld [vmem:[%s4 + $0xfc] sm:$0xf]
    %v3436 = vld [vmem:[%s4 + $0x100] sm:$0xf]
    %v3437 = vld [vmem:[%s4 + $0x104] sm:$0xf]
    %v3438 = vld [vmem:[%s4 + $0x108] sm:$0xf]
    %v3439 = vld [vmem:[%s4 + $0x10c] sm:$0xf]
    %v3440 = vld [vmem:[%s4 + $0x110] sm:$0xf]
    %v3441 = vld [vmem:[%s4 + $0x114] sm:$0xf]
    %v3442 = vld [vmem:[%s4 + $0x118] sm:$0xf]
    %v3443 = vld [vmem:[%s4 + $0x11c] sm:$0xf]
    %v3444 = vld [vmem:[%s4 + $0x120] sm:$0xf]
    %v3445 = vld [vmem:[%s4 + $0x124] sm:$0xf]
    %v3446 = vld [vmem:[%s4 + $0x128] sm:$0xf]
    %v3447 = vld [vmem:[%s4 + $0x12c] sm:$0xf]
    %v3448 = vld [vmem:[%s4 + $0x130] sm:$0xf]
    %v3449 = vld [vmem:[%s4 + $0x134] sm:$0xf]
    %v3450 = vld [vmem:[%s4 + $0x138] sm:$0xf]
    %v3451 = vld [vmem:[%s4 + $0x13c] sm:$0xf]
    %v3452 = vld [vmem:[%s4 + $0x140] sm:$0xf]
    %v3453 = vld [vmem:[%s4 + $0x144] sm:$0xf]
    %v3454 = vld [vmem:[%s4 + $0x148] sm:$0xf]
    %v3455 = vld [vmem:[%s4 + $0x14c] sm:$0xf]
    %v3456 = vld [vmem:[%s4 + $0x150] sm:$0xf]
    %v3457 = vld [vmem:[%s4 + $0x154] sm:$0xf]
    %v3458 = vld [vmem:[%s4 + $0x158] sm:$0xf]
    %v3459 = vld [vmem:[%s4 + $0x15c] sm:$0xf]
    %v3460 = vld [vmem:[%s4 + $0x160] sm:$0xf]
    %v3461 = vld [vmem:[%s4 + $0x164] sm:$0xf]
    %v3462 = vld [vmem:[%s4 + $0x168] sm:$0xf]
    %v3463 = vld [vmem:[%s4 + $0x16c] sm:$0xf]
    %v3464 = vld [vmem:[%s4 + $0x170] sm:$0xf]
    %v3465 = vld [vmem:[%s4 + $0x174] sm:$0xf]
    %v3466 = vld [vmem:[%s4 + $0x178] sm:$0xf]
    %v3467 = vld [vmem:[%s4 + $0x17c] sm:$0xf]
    %v3468 = vld [vmem:[%s14] sm:$0x1]
    %v3470 = vlaneseq
    %v3471 = vshrl.u32 %v3470, 7
    %v3472 = vsub.s32 0, %v3471
    %v3473 = vrot.slane %v3468, %v3472
    %v3571 = vunpack.c.l.b16 %v3372
    %v3572 = vunpack.c.l.b16 %v3373
    %v3573 = vunpack.c.l.b16 %v3374
    %v3574 = vunpack.c.l.b16 %v3375
    %v3575 = vunpack.c.l.b16 %v3376
    %v3576 = vunpack.c.l.b16 %v3377
    %v3577 = vunpack.c.l.b16 %v3378
    %v3578 = vunpack.c.l.b16 %v3379
    %v3579 = vunpack.c.l.b16 %v3380
    %v3580 = vunpack.c.l.b16 %v3381
    %v3581 = vunpack.c.l.b16 %v3382
    %v3582 = vunpack.c.l.b16 %v3383
    %v3583 = vunpack.c.l.b16 %v3384
    %v3584 = vunpack.c.l.b16 %v3385
    %v3585 = vunpack.c.l.b16 %v3386
    %v3586 = vunpack.c.l.b16 %v3387
    %v3587 = vunpack.c.l.b16 %v3388
    %v3588 = vunpack.c.l.b16 %v3389
    %v3589 = vunpack.c.l.b16 %v3390
    %v3590 = vunpack.c.l.b16 %v3391
    %v3591 = vunpack.c.l.b16 %v3392
    %v3592 = vunpack.c.l.b16 %v3393
    %v3593 = vunpack.c.l.b16 %v3394
    %v3594 = vunpack.c.l.b16 %v3395
    %v3595 = vunpack.c.l.b16 %v3396
    %v3596 = vunpack.c.l.b16 %v3397
    %v3597 = vunpack.c.l.b16 %v3398
    %v3598 = vunpack.c.l.b16 %v3399
    %v3599 = vunpack.c.l.b16 %v3400
    %v3600 = vunpack.c.l.b16 %v3401
    %v3601 = vunpack.c.l.b16 %v3402
    %v3602 = vunpack.c.l.b16 %v3403
    %v3603 = vunpack.c.l.b16 %v3404
    %v3604 = vunpack.c.l.b16 %v3405
    %v3605 = vunpack.c.l.b16 %v3406
    %v3606 = vunpack.c.l.b16 %v3407
    %v3607 = vunpack.c.l.b16 %v3408
    %v3608 = vunpack.c.l.b16 %v3409
    %v3609 = vunpack.c.l.b16 %v3410
    %v3610 = vunpack.c.l.b16 %v3411
    %v3611 = vunpack.c.l.b16 %v3412
    %v3612 = vunpack.c.l.b16 %v3413
    %v3613 = vunpack.c.l.b16 %v3414
    %v3614 = vunpack.c.l.b16 %v3415
    %v3615 = vunpack.c.l.b16 %v3416
    %v3616 = vunpack.c.l.b16 %v3417
    %v3617 = vunpack.c.l.b16 %v3418
    %v3618 = vunpack.c.l.b16 %v3419
    %v3619 = vunpack.c.l.b16 %v3420
    %v3620 = vunpack.c.l.b16 %v3421
    %v3621 = vunpack.c.l.b16 %v3422
    %v3622 = vunpack.c.l.b16 %v3423
    %v3623 = vunpack.c.l.b16 %v3424
    %v3624 = vunpack.c.l.b16 %v3425
    %v3625 = vunpack.c.l.b16 %v3426
    %v3626 = vunpack.c.l.b16 %v3427
    %v3627 = vunpack.c.l.b16 %v3428
    %v3628 = vunpack.c.l.b16 %v3429
    %v3629 = vunpack.c.l.b16 %v3430
    %v3630 = vunpack.c.l.b16 %v3431
    %v3631 = vunpack.c.l.b16 %v3432
    %v3632 = vunpack.c.l.b16 %v3433
    %v3633 = vunpack.c.l.b16 %v3434
    %v3634 = vunpack.c.l.b16 %v3435
    %v3635 = vunpack.c.l.b16 %v3436
    %v3636 = vunpack.c.l.b16 %v3437
    %v3637 = vunpack.c.l.b16 %v3438
    %v3638 = vunpack.c.l.b16 %v3439
    %v3639 = vunpack.c.l.b16 %v3440
    %v3640 = vunpack.c.l.b16 %v3441
    %v3641 = vunpack.c.l.b16 %v3442
    %v3642 = vunpack.c.l.b16 %v3443
    %v3643 = vunpack.c.l.b16 %v3444
    %v3644 = vunpack.c.l.b16 %v3445
    %v3645 = vunpack.c.l.b16 %v3446
    %v3646 = vunpack.c.l.b16 %v3447
    %v3647 = vunpack.c.l.b16 %v3448
    %v3648 = vunpack.c.l.b16 %v3449
    %v3649 = vunpack.c.l.b16 %v3450
    %v3650 = vunpack.c.l.b16 %v3451
    %v3651 = vunpack.c.l.b16 %v3452
    %v3652 = vunpack.c.l.b16 %v3453
    %v3653 = vunpack.c.l.b16 %v3454
    %v3654 = vunpack.c.l.b16 %v3455
    %v3655 = vunpack.c.l.b16 %v3456
    %v3656 = vunpack.c.l.b16 %v3457
    %v3657 = vunpack.c.l.b16 %v3458
    %v3658 = vunpack.c.l.b16 %v3459
    %v3659 = vunpack.c.l.b16 %v3460
    %v3660 = vunpack.c.l.b16 %v3461
    %v3661 = vunpack.c.l.b16 %v3462
    %v3662 = vunpack.c.l.b16 %v3463
    %v3663 = vunpack.c.l.b16 %v3464
    %v3664 = vunpack.c.l.b16 %v3465
    %v3665 = vunpack.c.l.b16 %v3466
    %v3666 = vunpack.c.l.b16 %v3467
    %v3667 = vpack.c.b16 %v3572, %v3571
    %v3668 = vpack.c.b16 %v3574, %v3573
    %v3669 = vpack.c.b16 %v3576, %v3575
    %v3670 = vpack.c.b16 %v3578, %v3577
    %v3671 = vpack.c.b16 %v3580, %v3579
    %v3672 = vpack.c.b16 %v3582, %v3581
    %v3673 = vpack.c.b16 %v3584, %v3583
    %v3674 = vpack.c.b16 %v3586, %v3585
    %v3675 = vpack.c.b16 %v3588, %v3587
    %v3676 = vpack.c.b16 %v3590, %v3589
    %v3677 = vpack.c.b16 %v3592, %v3591
    %v3678 = vpack.c.b16 %v3594, %v3593
    %v3679 = vpack.c.b16 %v3596, %v3595
    %v3680 = vpack.c.b16 %v3598, %v3597
    %v3681 = vpack.c.b16 %v3600, %v3599
    %v3682 = vpack.c.b16 %v3602, %v3601
    %v3683 = vpack.c.b16 %v3604, %v3603
    %v3684 = vpack.c.b16 %v3606, %v3605
    %v3685 = vpack.c.b16 %v3608, %v3607
    %v3686 = vpack.c.b16 %v3610, %v3609
    %v3687 = vpack.c.b16 %v3612, %v3611
    %v3688 = vpack.c.b16 %v3614, %v3613
    %v3689 = vpack.c.b16 %v3616, %v3615
    %v3690 = vpack.c.b16 %v3618, %v3617
    %v3691 = vpack.c.b16 %v3620, %v3619
    %v3692 = vpack.c.b16 %v3622, %v3621
    %v3693 = vpack.c.b16 %v3624, %v3623
    %v3694 = vpack.c.b16 %v3626, %v3625
    %v3695 = vpack.c.b16 %v3628, %v3627
    %v3696 = vpack.c.b16 %v3630, %v3629
    %v3697 = vpack.c.b16 %v3632, %v3631
    %v3698 = vpack.c.b16 %v3634, %v3633
    %v3699 = vpack.c.b16 %v3636, %v3635
    %v3700 = vpack.c.b16 %v3638, %v3637
    %v3701 = vpack.c.b16 %v3640, %v3639
    %v3702 = vpack.c.b16 %v3642, %v3641
    %v3703 = vpack.c.b16 %v3644, %v3643
    %v3704 = vpack.c.b16 %v3646, %v3645
    %v3705 = vpack.c.b16 %v3648, %v3647
    %v3706 = vpack.c.b16 %v3650, %v3649
    %v3707 = vpack.c.b16 %v3652, %v3651
    %v3708 = vpack.c.b16 %v3654, %v3653
    %v3709 = vpack.c.b16 %v3656, %v3655
    %v3710 = vpack.c.b16 %v3658, %v3657
    %v3711 = vpack.c.b16 %v3660, %v3659
    %v3712 = vpack.c.b16 %v3662, %v3661
    %v3713 = vpack.c.b16 %v3664, %v3663
    %v3714 = vpack.c.b16 %v3666, %v3665
    %3763 = vmatprep.subr.bf16.mxu0 0
    %3764 = vmatpush1.bf16.msra.mxu0 %v3667
    %3765 = vmatprep.subr.bf16.mxu0 0
    %3766 = vmatpush1.bf16.msra.mxu0 %v3668
    %3767 = vmatprep.subr.bf16.mxu0 0
    %3768 = vmatpush1.bf16.msra.mxu0 %v3669
    %3769 = vmatprep.subr.bf16.mxu0 0
    %3770 = vmatpush1.bf16.msra.mxu0 %v3670
    %3771 = vmatprep.subr.bf16.mxu0 0
    %3772 = vmatpush1.bf16.msra.mxu0 %v3671
    %3773 = vmatprep.subr.bf16.mxu0 0
    %3774 = vmatpush1.bf16.msra.mxu0 %v3672
    %3775 = vmatprep.subr.bf16.mxu0 0
    %3776 = vmatpush1.bf16.msra.mxu0 %v3673
    %3777 = vmatprep.subr.bf16.mxu0 0
    %3778 = vmatpush1.bf16.msra.mxu0 %v3674
    %3779 = vmatprep.subr.bf16.mxu0 0
    %3780 = vmatpush1.bf16.msra.mxu0 %v3675
    %3781 = vmatprep.subr.bf16.mxu0 0
    %3782 = vmatpush1.bf16.msra.mxu0 %v3676
    %3783 = vmatprep.subr.bf16.mxu0 0
    %3784 = vmatpush1.bf16.msra.mxu0 %v3677
    %3785 = vmatprep.subr.bf16.mxu0 0
    %3786 = vmatpush1.bf16.msra.mxu0 %v3678
    %3787 = vmatprep.subr.bf16.mxu0 0
    %3788 = vmatpush1.bf16.msra.mxu0 %v3679
    %3789 = vmatprep.subr.bf16.mxu0 0
    %3790 = vmatpush1.bf16.msra.mxu0 %v3680
    %3791 = vmatprep.subr.bf16.mxu0 0
    %3792 = vmatpush1.bf16.msra.mxu0 %v3681
    %3793 = vmatprep.subr.bf16.mxu0 0
    %3794 = vmatpush1.bf16.msra.mxu0 %v3682
    %3795 = vmatprep.mubr.bf16.mxu0 %v3275
    %3796 = vmatmul.mubr.bf16.gmra.mrb[0].mxu0 %v3274
    %v3797 = vpop.f32.mrb[0].mxu0
    %v3798 = vadd.f32 %v3473, %v3797
    %v3799 = vpop.f32.mrb[0].mxu0
    %v3800 = vpop.f32.mrb[0].mxu0
    %v3801 = vpop.f32.mrb[0].mxu0
    %3802 = vdwg.mxu0
    %3803 = vmatprep.subr.bf16.mxu0 0
    %3804 = vmatpush1.bf16.msra.mxu0 %v3683
    %3805 = vmatprep.subr.bf16.mxu0 0
    %3806 = vmatpush1.bf16.msra.mxu0 %v3684
    %3807 = vmatprep.subr.bf16.mxu0 0
    %3808 = vmatpush1.bf16.msra.mxu0 %v3685
    %3809 = vmatprep.subr.bf16.mxu0 0
    %3810 = vmatpush1.bf16.msra.mxu0 %v3686
    %3811 = vmatprep.subr.bf16.mxu0 0
    %3812 = vmatpush1.bf16.msra.mxu0 %v3687
    %3813 = vmatprep.subr.bf16.mxu0 0
    %3814 = vmatpush1.bf16.msra.mxu0 %v3688
    %3815 = vmatprep.subr.bf16.mxu0 0
    %3816 = vmatpush1.bf16.msra.mxu0 %v3689
    %3817 = vmatprep.subr.bf16.mxu0 0
    %3818 = vmatpush1.bf16.msra.mxu0 %v3690
    %3819 = vmatprep.subr.bf16.mxu0 0
    %3820 = vmatpush1.bf16.msra.mxu0 %v3691
    %3821 = vmatprep.subr.bf16.mxu0 0
    %3822 = vmatpush1.bf16.msra.mxu0 %v3692
    %3823 = vmatprep.subr.bf16.mxu0 0
    %3824 = vmatpush1.bf16.msra.mxu0 %v3693
    %3825 = vmatprep.subr.bf16.mxu0 0
    %3826 = vmatpush1.bf16.msra.mxu0 %v3694
    %3827 = vmatprep.subr.bf16.mxu0 0
    %3828 = vmatpush1.bf16.msra.mxu0 %v3695
    %3829 = vmatprep.subr.bf16.mxu0 0
    %3830 = vmatpush1.bf16.msra.mxu0 %v3696
    %3831 = vmatprep.subr.bf16.mxu0 0
    %3832 = vmatpush1.bf16.msra.mxu0 %v3697
    %3833 = vmatprep.subr.bf16.mxu0 0
    %3834 = vmatpush1.bf16.msra.mxu0 %v3698
    %3835 = vmatprep.mubr.bf16.mxu0 %v3323
    %3836 = vmatmul.mubr.bf16.gmra.mrb[0].mxu0 %v3322
    %v3837 = vpop.f32.mrb[0].mxu0
    %v3838 = vadd.f32 %v3798, %v3837
    %v3839 = vpop.f32.mrb[0].mxu0
    %v3840 = vpop.f32.mrb[0].mxu0
    %v3841 = vpop.f32.mrb[0].mxu0
    %3842 = vdwg.mxu0
    %3843 = vmatprep.subr.bf16.mxu0 0
    %3844 = vmatpush1.bf16.msra.mxu0 %v3699
    %3845 = vmatprep.subr.bf16.mxu0 0
    %3846 = vmatpush1.bf16.msra.mxu0 %v3700
    %3847 = vmatprep.subr.bf16.mxu0 0
    %3848 = vmatpush1.bf16.msra.mxu0 %v3701
    %3849 = vmatprep.subr.bf16.mxu0 0
    %3850 = vmatpush1.bf16.msra.mxu0 %v3702
    %3851 = vmatprep.subr.bf16.mxu0 0
    %3852 = vmatpush1.bf16.msra.mxu0 %v3703
    %3853 = vmatprep.subr.bf16.mxu0 0
    %3854 = vmatpush1.bf16.msra.mxu0 %v3704
    %3855 = vmatprep.subr.bf16.mxu0 0
    %3856 = vmatpush1.bf16.msra.mxu0 %v3705
    %3857 = vmatprep.subr.bf16.mxu0 0
    %3858 = vmatpush1.bf16.msra.mxu0 %v3706
    %3859 = vmatprep.subr.bf16.mxu0 0
    %3860 = vmatpush1.bf16.msra.mxu0 %v3707
    %3861 = vmatprep.subr.bf16.mxu0 0
    %3862 = vmatpush1.bf16.msra.mxu0 %v3708
    %3863 = vmatprep.subr.bf16.mxu0 0
    %3864 = vmatpush1.bf16.msra.mxu0 %v3709
    %3865 = vmatprep.subr.bf16.mxu0 0
    %3866 = vmatpush1.bf16.msra.mxu0 %v3710
    %3867 = vmatprep.subr.bf16.mxu0 0
    %3868 = vmatpush1.bf16.msra.mxu0 %v3711
    %3869 = vmatprep.subr.bf16.mxu0 0
    %3870 = vmatpush1.bf16.msra.mxu0 %v3712
    %3871 = vmatprep.subr.bf16.mxu0 0
    %3872 = vmatpush1.bf16.msra.mxu0 %v3713
    %3873 = vmatprep.subr.bf16.mxu0 0
    %3874 = vmatpush1.bf16.msra.mxu0 %v3714
    %3875 = vmatprep.mubr.bf16.mxu0 %v3371
    %3876 = vmatmul.mubr.bf16.gmra.mrb[0].mxu0 %v3370
    %v3877 = vpop.f32.mrb[0].mxu0
    %v3878 = vadd.f32 %v3838, %v3877
    %v3879 = vpop.f32.mrb[0].mxu0
    %v3880 = vpop.f32.mrb[0].mxu0
    %v3881 = vpop.f32.mrb[0].mxu0
    %3882 = vdwg.mxu0
    %v3883 = vmax.f32 %v3878, 0.0
    %v3884 = vpack.c.bf16 %v3883, %v3883
    %v3885 = vld [vmem:[%s10] sm:$0x3]
    %vm3886 = vcmask 64512
    %v3888 = vsel %vm3886, %v3885, 0
    %vm3890 = vcmask 1043456
    %v3892 = vsel %vm3890, %v3884, 0
    %3894 = vmatprep.subr.bf16.mxu0 0
    %3895 = vmatpush1.bf16.msra.mxu0 %v3892
    %3896 = vmatprep.subr.bf16.mxu0 0
    %3897 = vmatpush1.bf16.msra.mxu0 0
    %3898 = vmatprep.subr.bf16.mxu0 0
    %3899 = vmatpush1.bf16.msra.mxu0 0
    %3900 = vmatprep.subr.bf16.mxu0 0
    %3901 = vmatpush1.bf16.msra.mxu0 0
    %3902 = vmatprep.subr.bf16.mxu0 0
    %3903 = vmatpush1.bf16.msra.mxu0 0
    %3904 = vmatprep.subr.bf16.mxu0 0
    %3905 = vmatpush1.bf16.msra.mxu0 0
    %3906 = vmatprep.subr.bf16.mxu0 0
    %3907 = vmatpush1.bf16.msra.mxu0 0
    %3908 = vmatprep.subr.bf16.mxu0 0
    %3909 = vmatpush1.bf16.msra.mxu0 0
    %3910 = vmatprep.subr.bf16.mxu0 0
    %3911 = vmatpush1.bf16.msra.mxu0 0
    %3912 = vmatprep.subr.bf16.mxu0 0
    %3913 = vmatpush1.bf16.msra.mxu0 0
    %3914 = vmatprep.subr.bf16.mxu0 0
    %3915 = vmatpush1.bf16.msra.mxu0 0
    %3916 = vmatprep.subr.bf16.mxu0 0
    %3917 = vmatpush1.bf16.msra.mxu0 0
    %3918 = vmatprep.subr.bf16.mxu0 0
    %3919 = vmatpush1.bf16.msra.mxu0 0
    %3920 = vmatprep.subr.bf16.mxu0 0
    %3921 = vmatpush1.bf16.msra.mxu0 0
    %3922 = vmatprep.subr.bf16.mxu0 0
    %3923 = vmatpush1.bf16.msra.mxu0 0
    %3924 = vmatprep.subr.bf16.mxu0 0
    %3925 = vmatpush1.bf16.msra.mxu0 0
    %3926 = vmatprep.mubr.bf16.mxu0 0
    %3927 = vmatmul.mubr.bf16.gmra.mrb[0].mxu0 %v3888
    %v3928 = vpop.f32.mrb[0].mxu0
    %v3929 = vadd.f32 0.0, %v3928
    %v3930 = vpop.f32.mrb[0].mxu0
    %v3931 = vpop.f32.mrb[0].mxu0
    %v3932 = vpop.f32.mrb[0].mxu0
    %3933 = vdwg.mxu0
    %v3934 = vpack.c.bf16 %v3929, %v3929
    %s3935 = scalar_lea.vmem %s10, 2
    %v3936 = vld [vmem:[%s3935] sm:$0x3]
    %v3938 = vsel %vm3886, %v3936, 0
    %3940 = vmatprep.subr.bf16.mxu0 0
    %3941 = vmatpush1.bf16.msra.mxu0 %v3892
    %3942 = vmatprep.subr.bf16.mxu0 0
    %3943 = vmatpush1.bf16.msra.mxu0 0
    %3944 = vmatprep.subr.bf16.mxu0 0
    %3945 = vmatpush1.bf16.msra.mxu0 0
    %3946 = vmatprep.subr.bf16.mxu0 0
    %3947 = vmatpush1.bf16.msra.mxu0 0
    %3948 = vmatprep.subr.bf16.mxu0 0
    %3949 = vmatpush1.bf16.msra.mxu0 0
    %3950 = vmatprep.subr.bf16.mxu0 0
    %3951 = vmatpush1.bf16.msra.mxu0 0
    %3952 = vmatprep.subr.bf16.mxu0 0
    %3953 = vmatpush1.bf16.msra.mxu0 0
    %3954 = vmatprep.subr.bf16.mxu0 0
    %3955 = vmatpush1.bf16.msra.mxu0 0
    %3956 = vmatprep.subr.bf16.mxu0 0
    %3957 = vmatpush1.bf16.msra.mxu0 0
    %3958 = vmatprep.subr.bf16.mxu0 0
    %3959 = vmatpush1.bf16.msra.mxu0 0
    %3960 = vmatprep.subr.bf16.mxu0 0
    %3961 = vmatpush1.bf16.msra.mxu0 0
    %3962 = vmatprep.subr.bf16.mxu0 0
    %3963 = vmatpush1.bf16.msra.mxu0 0
    %3964 = vmatprep.subr.bf16.mxu0 0
    %3965 = vmatpush1.bf16.msra.mxu0 0
    %3966 = vmatprep.subr.bf16.mxu0 0
    %3967 = vmatpush1.bf16.msra.mxu0 0
    %3968 = vmatprep.subr.bf16.mxu0 0
    %3969 = vmatpush1.bf16.msra.mxu0 0
    %3970 = vmatprep.subr.bf16.mxu0 0
    %3971 = vmatpush1.bf16.msra.mxu0 0
    %3972 = vmatprep.mubr.bf16.mxu0 0
    %3973 = vmatmul.mubr.bf16.gmra.mrb[0].mxu0 %v3938
    %v3974 = vpop.f32.mrb[0].mxu0
    %v3975 = vadd.f32 0.0, %v3974
    %v3976 = vpop.f32.mrb[0].mxu0
    %v3977 = vpop.f32.mrb[0].mxu0
    %v3978 = vpop.f32.mrb[0].mxu0
    %3979 = vdwg.mxu0
    %v3980 = vpack.c.bf16 %v3975, %v3975
    %s3981 = scalar_lea.vmem %s10, 4
    %v3982 = vld [vmem:[%s3981] sm:$0x3]
    %v3984 = vsel %vm3886, %v3982, 0
    %3986 = vmatprep.subr.bf16.mxu0 0
    %3987 = vmatpush1.bf16.msra.mxu0 %v3892
    %3988 = vmatprep.subr.bf16.mxu0 0
    %3989 = vmatpush1.bf16.msra.mxu0 0
    %3990 = vmatprep.subr.bf16.mxu0 0
    %3991 = vmatpush1.bf16.msra.mxu0 0
    %3992 = vmatprep.subr.bf16.mxu0 0
    %3993 = vmatpush1.bf16.msra.mxu0 0
    %3994 = vmatprep.subr.bf16.mxu0 0
    %3995 = vmatpush1.bf16.msra.mxu0 0
    %3996 = vmatprep.subr.bf16.mxu0 0
    %3997 = vmatpush1.bf16.msra.mxu0 0
    %3998 = vmatprep.subr.bf16.mxu0 0
    %3999 = vmatpush1.bf16.msra.mxu0 0
    %4000 = vmatprep.subr.bf16.mxu0 0
    %4001 = vmatpush1.bf16.msra.mxu0 0
    %4002 = vmatprep.subr.bf16.mxu0 0
    %4003 = vmatpush1.bf16.msra.mxu0 0
    %4004 = vmatprep.subr.bf16.mxu0 0
    %4005 = vmatpush1.bf16.msra.mxu0 0
    %4006 = vmatprep.subr.bf16.mxu0 0
    %4007 = vmatpush1.bf16.msra.mxu0 0
    %4008 = vmatprep.subr.bf16.mxu0 0
    %4009 = vmatpush1.bf16.msra.mxu0 0
    %4010 = vmatprep.subr.bf16.mxu0 0
    %4011 = vmatpush1.bf16.msra.mxu0 0
    %4012 = vmatprep.subr.bf16.mxu0 0
    %4013 = vmatpush1.bf16.msra.mxu0 0
    %4014 = vmatprep.subr.bf16.mxu0 0
    %4015 = vmatpush1.bf16.msra.mxu0 0
    %4016 = vmatprep.subr.bf16.mxu0 0
    %4017 = vmatpush1.bf16.msra.mxu0 0
    %4018 = vmatprep.mubr.bf16.mxu0 0
    %4019 = vmatmul.mubr.bf16.gmra.mrb[0].mxu0 %v3984
    %v4020 = vpop.f32.mrb[0].mxu0
    %v4021 = vadd.f32 0.0, %v4020
    %v4022 = vpop.f32.mrb[0].mxu0
    %v4023 = vpop.f32.mrb[0].mxu0
    %v4024 = vpop.f32.mrb[0].mxu0
    %4025 = vdwg.mxu0
    %v4026 = vpack.c.bf16 %v4021, %v4021
    %v4027 = vld [vmem:[%s5] sm:$0xf]
    %v4028 = vld [vmem:[%s5 + $0x4] sm:$0xf]
    %v4029 = vld [vmem:[%s5 + $0x8] sm:$0xf]
    %v4030 = vld [vmem:[%s5 + $0xc] sm:$0xf]
    %v4031 = vld [vmem:[%s5 + $0x10] sm:$0xf]
    %v4032 = vld [vmem:[%s5 + $0x14] sm:$0xf]
    %v4033 = vld [vmem:[%s5 + $0x18] sm:$0xf]
    %v4034 = vld [vmem:[%s5 + $0x1c] sm:$0xf]
    %v4035 = vld [vmem:[%s5 + $0x20] sm:$0xf]
    %v4036 = vld [vmem:[%s5 + $0x24] sm:$0xf]
    %v4037 = vld [vmem:[%s5 + $0x28] sm:$0xf]
    %v4038 = vld [vmem:[%s5 + $0x2c] sm:$0xf]
    %v4039 = vld [vmem:[%s5 + $0x30] sm:$0xf]
    %v4040 = vld [vmem:[%s5 + $0x34] sm:$0xf]
    %v4041 = vld [vmem:[%s5 + $0x38] sm:$0xf]
    %v4042 = vld [vmem:[%s5 + $0x3c] sm:$0xf]
    %v4043 = vld [vmem:[%s5 + $0x40] sm:$0xf]
    %v4044 = vld [vmem:[%s5 + $0x44] sm:$0xf]
    %v4045 = vld [vmem:[%s5 + $0x48] sm:$0xf]
    %v4046 = vld [vmem:[%s5 + $0x4c] sm:$0xf]
    %v4047 = vld [vmem:[%s5 + $0x50] sm:$0xf]
    %v4048 = vld [vmem:[%s5 + $0x54] sm:$0xf]
    %v4049 = vld [vmem:[%s5 + $0x58] sm:$0xf]
    %v4050 = vld [vmem:[%s5 + $0x5c] sm:$0xf]
    %v4051 = vld [vmem:[%s5 + $0x60] sm:$0xf]
    %v4052 = vld [vmem:[%s5 + $0x64] sm:$0xf]
    %v4053 = vld [vmem:[%s5 + $0x68] sm:$0xf]
    %v4054 = vld [vmem:[%s5 + $0x6c] sm:$0xf]
    %v4055 = vld [vmem:[%s5 + $0x70] sm:$0xf]
    %v4056 = vld [vmem:[%s5 + $0x74] sm:$0xf]
    %v4057 = vld [vmem:[%s5 + $0x78] sm:$0xf]
    %v4058 = vld [vmem:[%s5 + $0x7c] sm:$0xf]
    %v4059 = vld [vmem:[%s5 + $0x80] sm:$0xf]
    %v4060 = vld [vmem:[%s5 + $0x84] sm:$0xf]
    %v4061 = vld [vmem:[%s5 + $0x88] sm:$0xf]
    %v4062 = vld [vmem:[%s5 + $0x8c] sm:$0xf]
    %v4063 = vld [vmem:[%s5 + $0x90] sm:$0xf]
    %v4064 = vld [vmem:[%s5 + $0x94] sm:$0xf]
    %v4065 = vld [vmem:[%s5 + $0x98] sm:$0xf]
    %v4066 = vld [vmem:[%s5 + $0x9c] sm:$0xf]
    %v4067 = vld [vmem:[%s5 + $0xa0] sm:$0xf]
    %v4068 = vld [vmem:[%s5 + $0xa4] sm:$0xf]
    %v4069 = vld [vmem:[%s5 + $0xa8] sm:$0xf]
    %v4070 = vld [vmem:[%s5 + $0xac] sm:$0xf]
    %v4071 = vld [vmem:[%s5 + $0xb0] sm:$0xf]
    %v4072 = vld [vmem:[%s5 + $0xb4] sm:$0xf]
    %v4073 = vld [vmem:[%s5 + $0xb8] sm:$0xf]
    %v4074 = vld [vmem:[%s5 + $0xbc] sm:$0xf]
    %v4075 = vld [vmem:[%s15] sm:$0x1]
    %v4077 = vlaneseq
    %v4078 = vshrl.u32 %v4077, 7
    %v4079 = vsub.s32 0, %v4078
    %v4080 = vrot.slane %v4075, %v4079
    %v4130 = vunpack.c.l.b16 %v4027
    %v4131 = vunpack.c.l.b16 %v4028
    %v4132 = vunpack.c.l.b16 %v4029
    %v4133 = vunpack.c.l.b16 %v4030
    %v4134 = vunpack.c.l.b16 %v4031
    %v4135 = vunpack.c.l.b16 %v4032
    %v4136 = vunpack.c.l.b16 %v4033
    %v4137 = vunpack.c.l.b16 %v4034
    %v4138 = vunpack.c.l.b16 %v4035
    %v4139 = vunpack.c.l.b16 %v4036
    %v4140 = vunpack.c.l.b16 %v4037
    %v4141 = vunpack.c.l.b16 %v4038
    %v4142 = vunpack.c.l.b16 %v4039
    %v4143 = vunpack.c.l.b16 %v4040
    %v4144 = vunpack.c.l.b16 %v4041
    %v4145 = vunpack.c.l.b16 %v4042
    %v4146 = vunpack.c.l.b16 %v4043
    %v4147 = vunpack.c.l.b16 %v4044
    %v4148 = vunpack.c.l.b16 %v4045
    %v4149 = vunpack.c.l.b16 %v4046
    %v4150 = vunpack.c.l.b16 %v4047
    %v4151 = vunpack.c.l.b16 %v4048
    %v4152 = vunpack.c.l.b16 %v4049
    %v4153 = vunpack.c.l.b16 %v4050
    %v4154 = vunpack.c.l.b16 %v4051
    %v4155 = vunpack.c.l.b16 %v4052
    %v4156 = vunpack.c.l.b16 %v4053
    %v4157 = vunpack.c.l.b16 %v4054
    %v4158 = vunpack.c.l.b16 %v4055
    %v4159 = vunpack.c.l.b16 %v4056
    %v4160 = vunpack.c.l.b16 %v4057
    %v4161 = vunpack.c.l.b16 %v4058
    %v4162 = vunpack.c.l.b16 %v4059
    %v4163 = vunpack.c.l.b16 %v4060
    %v4164 = vunpack.c.l.b16 %v4061
    %v4165 = vunpack.c.l.b16 %v4062
    %v4166 = vunpack.c.l.b16 %v4063
    %v4167 = vunpack.c.l.b16 %v4064
    %v4168 = vunpack.c.l.b16 %v4065
    %v4169 = vunpack.c.l.b16 %v4066
    %v4170 = vunpack.c.l.b16 %v4067
    %v4171 = vunpack.c.l.b16 %v4068
    %v4172 = vunpack.c.l.b16 %v4069
    %v4173 = vunpack.c.l.b16 %v4070
    %v4174 = vunpack.c.l.b16 %v4071
    %v4175 = vunpack.c.l.b16 %v4072
    %v4176 = vunpack.c.l.b16 %v4073
    %v4177 = vunpack.c.l.b16 %v4074
    %v4178 = vpack.c.b16 %v4131, %v4130
    %v4179 = vpack.c.b16 %v4133, %v4132
    %v4180 = vpack.c.b16 %v4135, %v4134
    %v4181 = vpack.c.b16 %v4137, %v4136
    %v4182 = vpack.c.b16 %v4139, %v4138
    %v4183 = vpack.c.b16 %v4141, %v4140
    %v4184 = vpack.c.b16 %v4143, %v4142
    %v4185 = vpack.c.b16 %v4145, %v4144
    %v4186 = vpack.c.b16 %v4147, %v4146
    %v4187 = vpack.c.b16 %v4149, %v4148
    %v4188 = vpack.c.b16 %v4151, %v4150
    %v4189 = vpack.c.b16 %v4153, %v4152
    %v4190 = vpack.c.b16 %v4155, %v4154
    %v4191 = vpack.c.b16 %v4157, %v4156
    %v4192 = vpack.c.b16 %v4159, %v4158
    %v4193 = vpack.c.b16 %v4161, %v4160
    %v4194 = vpack.c.b16 %v4163, %v4162
    %v4195 = vpack.c.b16 %v4165, %v4164
    %v4196 = vpack.c.b16 %v4167, %v4166
    %v4197 = vpack.c.b16 %v4169, %v4168
    %v4198 = vpack.c.b16 %v4171, %v4170
    %v4199 = vpack.c.b16 %v4173, %v4172
    %v4200 = vpack.c.b16 %v4175, %v4174
    %v4201 = vpack.c.b16 %v4177, %v4176
    %4226 = vmatprep.subr.bf16.mxu0 0
    %4227 = vmatpush1.bf16.msra.mxu0 %v4178
    %4228 = vmatprep.subr.bf16.mxu0 0
    %4229 = vmatpush1.bf16.msra.mxu0 %v4179
    %4230 = vmatprep.subr.bf16.mxu0 0
    %4231 = vmatpush1.bf16.msra.mxu0 %v4180
    %4232 = vmatprep.subr.bf16.mxu0 0
    %4233 = vmatpush1.bf16.msra.mxu0 %v4181
    %4234 = vmatprep.subr.bf16.mxu0 0
    %4235 = vmatpush1.bf16.msra.mxu0 %v4182
    %4236 = vmatprep.subr.bf16.mxu0 0
    %4237 = vmatpush1.bf16.msra.mxu0 %v4183
    %4238 = vmatprep.subr.bf16.mxu0 0
    %4239 = vmatpush1.bf16.msra.mxu0 %v4184
    %4240 = vmatprep.subr.bf16.mxu0 0
    %4241 = vmatpush1.bf16.msra.mxu0 %v4185
    %4242 = vmatprep.subr.bf16.mxu0 0
    %4243 = vmatpush1.bf16.msra.mxu0 %v4186
    %4244 = vmatprep.subr.bf16.mxu0 0
    %4245 = vmatpush1.bf16.msra.mxu0 %v4187
    %4246 = vmatprep.subr.bf16.mxu0 0
    %4247 = vmatpush1.bf16.msra.mxu0 %v4188
    %4248 = vmatprep.subr.bf16.mxu0 0
    %4249 = vmatpush1.bf16.msra.mxu0 %v4189
    %4250 = vmatprep.subr.bf16.mxu0 0
    %4251 = vmatpush1.bf16.msra.mxu0 %v4190
    %4252 = vmatprep.subr.bf16.mxu0 0
    %4253 = vmatpush1.bf16.msra.mxu0 %v4191
    %4254 = vmatprep.subr.bf16.mxu0 0
    %4255 = vmatpush1.bf16.msra.mxu0 %v4192
    %4256 = vmatprep.subr.bf16.mxu0 0
    %4257 = vmatpush1.bf16.msra.mxu0 %v4193
    %4258 = vmatprep.mubr.bf16.mxu0 %v3980
    %4259 = vmatmul.mubr.bf16.gmra.mrb[0].mxu0 %v3934
    %v4260 = vpop.f32.mrb[0].mxu0
    %v4261 = vadd.f32 %v4080, %v4260
    %v4262 = vpop.f32.mrb[0].mxu0
    %v4263 = vpop.f32.mrb[0].mxu0
    %v4264 = vpop.f32.mrb[0].mxu0
    %4265 = vdwg.mxu0
    %4266 = vmatprep.subr.bf16.mxu0 0
    %4267 = vmatpush1.bf16.msra.mxu0 %v4194
    %4268 = vmatprep.subr.bf16.mxu0 0
    %4269 = vmatpush1.bf16.msra.mxu0 %v4195
    %4270 = vmatprep.subr.bf16.mxu0 0
    %4271 = vmatpush1.bf16.msra.mxu0 %v4196
    %4272 = vmatprep.subr.bf16.mxu0 0
    %4273 = vmatpush1.bf16.msra.mxu0 %v4197
    %4274 = vmatprep.subr.bf16.mxu0 0
    %4275 = vmatpush1.bf16.msra.mxu0 %v4198
    %4276 = vmatprep.subr.bf16.mxu0 0
    %4277 = vmatpush1.bf16.msra.mxu0 %v4199
    %4278 = vmatprep.subr.bf16.mxu0 0
    %4279 = vmatpush1.bf16.msra.mxu0 %v4200
    %4280 = vmatprep.subr.bf16.mxu0 0
    %4281 = vmatpush1.bf16.msra.mxu0 %v4201
    %4282 = vmatprep.subr.bf16.mxu0 0
    %4283 = vmatpush1.bf16.msra.mxu0 0
    %4284 = vmatprep.subr.bf16.mxu0 0
    %4285 = vmatpush1.bf16.msra.mxu0 0
    %4286 = vmatprep.subr.bf16.mxu0 0
    %4287 = vmatpush1.bf16.msra.mxu0 0
    %4288 = vmatprep.subr.bf16.mxu0 0
    %4289 = vmatpush1.bf16.msra.mxu0 0
    %4290 = vmatprep.subr.bf16.mxu0 0
    %4291 = vmatpush1.bf16.msra.mxu0 0
    %4292 = vmatprep.subr.bf16.mxu0 0
    %4293 = vmatpush1.bf16.msra.mxu0 0
    %4294 = vmatprep.subr.bf16.mxu0 0
    %4295 = vmatpush1.bf16.msra.mxu0 0
    %4296 = vmatprep.subr.bf16.mxu0 0
    %4297 = vmatpush1.bf16.msra.mxu0 0
    %4298 = vmatprep.mubr.bf16.mxu0 0
    %4299 = vmatmul.mubr.bf16.gmra.mrb[0].mxu0 %v4026
    %v4300 = vpop.f32.mrb[0].mxu0
    %v4301 = vadd.f32 %v4261, %v4300
    %v4302 = vpop.f32.mrb[0].mxu0
    %v4303 = vpop.f32.mrb[0].mxu0
    %v4304 = vpop.f32.mrb[0].mxu0
    %4305 = vdwg.mxu0
    %v4306 = vsub.f32 0.0, %v4301
    %v4307 = vmul.f32 %v4306, 1.442695
    %v4308 = vpow.pop %v4307
    %v4309 = vadd.f32 %v4308, 1.0
    %v4310 = vrcp.pop %v4309
    %v4311 = vmul.f32 1.0, %v4310
    %vm4312 = vcmask 11264
    %4313 = vst.msk [vmem:[#allocation5] sm:$0xf] %vm4312, %v4311
    // Predicated region
    $region70: #{discriminant_forward.1} parent=1 // pred_check
      _
    $region71: #{discriminant_forward.1} parent=1 // pred_check_branch
      %4315 = sbr.rel (0) target = $region73
    $region72: #{discriminant_forward.1} parent=1 // pred_region
      %s4317 = ssub.s32 64, 64
      %4318 = vsyncadd [#allocation4], %s4317
      %s4320 = sshll.u32 [#allocation5], 4
      %s4321 = int_to_ptr.vmem [resolvable:$true] %s4320
      %4323 = dma.vmem_to_hbm [thread:$0]  %s4321, 64, %s16, [#allocation4]
    $region73: #{discriminant_forward.1} parent=1 // pred_fallthru
      _
    // Predicated region
    $region74: #{discriminant_forward.1} parent=1 // pred_check
      _
    $region75: #{discriminant_forward.1} parent=1 // pred_check_branch
      %4325 = sbr.rel (0) target = $region77
    $region76: #{discriminant_forward.1} parent=1 // pred_region
      %4326 = dma.done [#allocation4], 64
    $region77: #{discriminant_forward.1} parent=1 // pred_fallthru
      _
    %4327 = vsyncpa [#allocation3], 1
    %4328 = vsyncpa [#allocation4], 1

</llo_original>
